<compile_context>
chip_gen: v6e
topology: v6e:2x2x1
jax: 0.10.0
libtpu: 0.0.40
codegen_flags: <defaults>
</compile_context>

<pallas_src>
import functools

import jax
import jax.numpy as jnp
from jax import lax
from jax.experimental import pallas as pl
from jax.experimental.pallas import tpu as pltpu

BIG = 1e10          # "no face covers this pixel" sentinel (real depths assumed << BIG)
TILE_F = 512        # faces per face tile (processed as 4 lane-chunks of 128)
MAX_TILE_P = 1024   # cap on pixels per pixel tile


def _zbuf_kernel(planes_ref, out_ref, acc_ref, px_ref, py_ref, *, img_h, img_w):
    # planes_ref: (1, 10, TILE_F)   per-face affine coefficients (faces on lanes)
    # out_ref   : (1, rows, 128)    lane-dense zbuf tile, written only in the epilogue
    # acc_ref   : (tile_p, 128)     running min-z per (pixel, face-lane-slot)
    # px_ref/py_ref: (tile_p, 128)  pixel-center NDC coords, lane-broadcast, hoisted
    p_step = pl.program_id(1)
    f_step = pl.program_id(2)
    tile_p = acc_ref.shape[0]
    tile_f = planes_ref.shape[2]
    rows = out_ref.shape[1]

    @pl.when(f_step == 0)
    def _prologue():
        # Pixel-center NDC coords for this pixel tile, constant along lanes.
        # Computed once per pixel tile (hoisted out of the face loop).
        p_idx = lax.broadcasted_iota(jnp.int32, (tile_p, 128), 0) + p_step * tile_p
        pf32 = p_idx.astype(jnp.float32)
        inv_w = jnp.float32(1.0 / img_w)
        inv_h = jnp.float32(1.0 / img_h)
        row = jnp.floor((pf32 + 0.5) * inv_w)
        col = pf32 - row * jnp.float32(img_w)
        # Exact +-1 fixup of the float division at row boundaries (non-pow2 widths).
        row = row + jnp.where(col < 0.0, -1.0, 0.0) + jnp.where(col >= img_w, 1.0, 0.0)
        col = pf32 - row * jnp.float32(img_w)
        # PyTorch3D NDC convention: +X left, +Y up, pixel (0,0) at (+1,+1).
        px_ref[...] = 1.0 - (2.0 * col + 1.0) * inv_w
        py_ref[...] = 1.0 - (2.0 * row + 1.0) * inv_h
        acc_ref[...] = jnp.full((tile_p, 128), BIG, dtype=jnp.float32)

    px = px_ref[...]                       # (tile_p, 128)
    py = py_ref[...]
    acc = acc_ref[...]

    pf = planes_ref[0]                     # (10, TILE_F), faces dense on lanes
    n_chunks = tile_f // 128
    for c in range(n_chunks):              # static unrolled loop over 128-face lane chunks
        lo, hi = c * 128, (c + 1) * 128
        a0, b0, c0 = pf[0:1, lo:hi], pf[1:2, lo:hi], pf[2:3, lo:hi]   # (1, 128)
        a1, b1, c1 = pf[3:4, lo:hi], pf[4:5, lo:hi], pf[5:6, lo:hi]
        ar = pf[6:7, lo:hi]                                            # |area|
        az, bz, cz = pf[7:8, lo:hi], pf[8:9, lo:hi], pf[9:10, lo:hi]   # z affine

        # Edge functions with winding sign pre-folded: inside <=> all w* >= 0.
        w0 = a0 * px + b0 * py + c0         # (tile_p, 128)
        w1 = a1 * px + b1 * py + c1
        w2 = ar - w0 - w1                   # barycentric identity
        zf = az * px + bz * py + cz         # z interp as its own affine (no w dep)
        wmin = jnp.minimum(jnp.minimum(w0, w1), w2)
        z = jnp.where(wmin >= 0.0, zf, BIG)
        acc = jnp.minimum(acc, z)

    acc_ref[...] = acc

    @pl.when(f_step == pl.num_programs(2) - 1)
    def _finalize():
        a = acc_ref[...]                                        # (tile_p, 128)
        # Single cross-lane min per pixel tile; result is lane-dense (rows, 128).
        zmin = jnp.min(a.reshape(rows, 128, 128), axis=-1)
        # Any legitimate depth >= BIG would be mapped to -1 (harmless in practice).
        out_ref[0] = jnp.where(zmin >= BIG, jnp.float32(-1.0), zmin)


def render_zbuf(verts_world, faces, image_size=16):
    """MeshRendererWithDepth.forward: rasterize and return fragments.zbuf."""
    N, V, _ = verts_world.shape
    F = faces.shape[0]
    H = W = image_size
    P = H * W
    assert P % 128 == 0, "H*W must be a multiple of 128"  # TODO(synk): pad pixel dim otherwise

    # Pixel tile: multiple of 128 dividing P, capped; if N == 1 prefer >= 2 pixel
    # tiles so the two parallel grid axes can be split across v7x's 2 TensorCores.
    tile_p = min(P, MAX_TILE_P)
    while P % tile_p != 0:
        tile_p -= 128
    if N == 1 and P // tile_p < 2:
        half = tile_p // 2
        if half >= 128 and half % 128 == 0 and P % half == 0:
            tile_p = half
    rows = tile_p // 128

    f_pad = ((F + TILE_F - 1) // TILE_F) * TILE_F

    # --- glue: simple pinhole projection (camera at origin, +z forward) ---
    zc = verts_world[..., 2:3]
    safe_z = jnp.where(jnp.abs(zc) < 1e-8, 1e-8, zc)
    verts_ndc = jnp.concatenate(
        [verts_world[..., 0:1] / safe_z, verts_world[..., 1:2] / safe_z, zc], axis=-1
    ).astype(jnp.float32)

    fvert = verts_ndc[:, faces, :]                                  # (N, F, 3, 3)
    if f_pad > F:  # pad with all-zero (degenerate) faces -> masked out below
        fvert = jnp.concatenate(
            [fvert, jnp.zeros((N, f_pad - F, 3, 3), fvert.dtype)], axis=1
        )

    x0, y0, z0 = fvert[..., 0, 0], fvert[..., 0, 1], fvert[..., 0, 2]   # (N, f_pad)
    x1, y1, z1 = fvert[..., 1, 0], fvert[..., 1, 1], fvert[..., 1, 2]
    x2, y2, z2 = fvert[..., 2, 0], fvert[..., 2, 1], fvert[..., 2, 2]

    # Per-face hoisted quantities (cheap: O(F), done once in XLA).
    area = (x1 - x0) * (y2 - y0) - (y1 - y0) * (x2 - x0)
    znear = 1e-6
    valid = (jnp.abs(area) > 1e-8) & (z0 > znear) & (z1 > znear) & (z2 > znear)
    sgn = jnp.where(area >= 0.0, 1.0, -1.0)
    inv_abs = jnp.where(valid, sgn / jnp.where(valid, area, 1.0), 0.0)  # 1/|area|

    # Edge-function affine coefficients w_k = A_k*px + B_k*py + C_k, winding
    # sign folded in so the inside test is just w_k >= 0.
    A0 = -(y2 - y1) * sgn
    B0 = (x2 - x1) * sgn
    C0 = ((y2 - y1) * x1 - (x2 - x1) * y1) * sgn
    A1 = -(y0 - y2) * sgn
    B1 = (x0 - x2) * sgn
    C1 = ((y0 - y2) * x2 - (x0 - x2) * y2) * sgn
    AR = jnp.abs(area)
    ZS0, ZS1, ZS2 = z0 * inv_abs, z1 * inv_abs, z2 * inv_abs

    # z interpolation folded into its own affine: z(px,py) = AZ*px + BZ*py + CZ.
    AZ = A0 * ZS0 + A1 * ZS1 - (A0 + A1) * ZS2
    BZ = B0 * ZS0 + B1 * ZS1 - (B0 + B1) * ZS2
    CZ = C0 * ZS0 + C1 * ZS1 + (AR - C0 - C1) * ZS2

    # Degenerate / behind-camera / padding faces can never be hit: force w0 = -1.
    A0 = jnp.where(valid, A0, 0.0)
    B0 = jnp.where(valid, B0, 0.0)
    C0 = jnp.where(valid, C0, -1.0)
    A1 = jnp.where(valid, A1, 0.0)
    B1 = jnp.where(valid, B1, 0.0)
    C1 = jnp.where(valid, C1, 0.0)
    AR = jnp.where(valid, AR, 0.0)
    AZ = jnp.where(valid, AZ, 0.0)
    BZ = jnp.where(valid, BZ, 0.0)
    CZ = jnp.where(valid, CZ, 0.0)

    # Component-major layout: faces on the lane axis (dense coefficient DMAs).
    planes = jnp.stack(
        [A0, B0, C0, A1, B1, C1, AR, AZ, BZ, CZ], axis=1
    ).astype(jnp.float32)                                           # (N, 10, f_pad)

    kernel = functools.partial(_zbuf_kernel, img_h=H, img_w=W)

    zbuf_lane = pl.pallas_call(
        kernel,
        out_shape=jax.ShapeDtypeStruct((N, P // 128, 128), jnp.float32),
        grid_spec=pltpu.PrefetchScalarGridSpec(
            num_scalar_prefetch=0,
            grid=(N, P // tile_p, f_pad // TILE_F),
            in_specs=[
                pl.BlockSpec((1, 10, TILE_F), lambda n, p, f: (n, 0, f)),
            ],
            out_specs=pl.BlockSpec((1, rows, 128), lambda n, p, f: (n, p, 0)),
            scratch_shapes=[
                pltpu.VMEM((tile_p, 128), jnp.float32),   # acc: running min per lane slot
                pltpu.VMEM((tile_p, 128), jnp.float32),   # px (hoisted NDC x)
                pltpu.VMEM((tile_p, 128), jnp.float32),   # py (hoisted NDC y)
            ],
        ),
        compiler_params=pltpu.CompilerParams(
            dimension_semantics=("parallel", "parallel", "arbitrary"),
            vmem_limit_bytes=32 * 1024 * 1024,
        ),
    )(planes)

    # PyTorch3D zbuf layout: (N, H, W, faces_per_pixel=1)
    return zbuf_lane.reshape(N, H, W, 1)


if __name__ == "__main__":
    key = jax.random.PRNGKey(0)
    N, H, W = 2, 16, 16

    # Unit cube mesh (8 vertices, 12 triangular faces), jittered per batch,
    # placed at z = 3 in front of the camera.
    cube_v = jnp.array(
        [[x, y, zc] for x in (-0.5, 0.5) for y in (-0.5, 0.5) for zc in (-0.5, 0.5)],
        dtype=jnp.float32,
    )  # (8, 3)
    cube_f = jnp.array(
        [
            [0, 1, 3], [0, 3, 2],
            [4, 6, 7], [4, 7, 5],
            [0, 4, 5], [0, 5, 1],
            [2, 3, 7], [2, 7, 6],
            [0, 2, 6], [0, 6, 4],
            [1, 5, 7], [1, 7, 3],
        ],
        dtype=jnp.int32,
    )  # (12, 3)

    jitter = 0.05 * jax.random.normal(key, (N, 8, 3), dtype=jnp.float32)
    center = jnp.array([0.0, 0.0, 3.0], dtype=jnp.float32)
    verts_world = cube_v[None, :, :] + jitter + center  # (N, 8, 3), meshes_world

    zbuf = render_zbuf(verts_world, cube_f, image_size=H)
    zbuf = jax.block_until_ready(zbuf)
    assert zbuf.shape == (N, H, W, 1)
    assert zbuf.dtype == jnp.float32
    assert bool(jnp.all(jnp.isfinite(zbuf)))
    print("KERNEL_OK")
</pallas_src>

<mosaic_0001>
module attributes {stable_mosaic.version = 11 : i64} {
  func.func @_zbuf_kernel(%arg0: i32, %arg1: i32, %arg2: i32, %arg3: memref<1x10x512xf32, #tpu.memory_space<vmem>>, %arg4: memref<1x2x128xf32, #tpu.memory_space<vmem>>, %arg5: memref<256x128xf32, #tpu.memory_space<vmem>>, %arg6: memref<256x128xf32, #tpu.memory_space<vmem>>, %arg7: memref<256x128xf32, #tpu.memory_space<vmem>>) attributes {dimension_semantics = [#tpu.dimension_semantics<parallel>, #tpu.dimension_semantics<parallel>, #tpu.dimension_semantics<arbitrary>], iteration_bounds = array<i64: 2, 1, 1>, scalar_prefetch = 0 : i64, scratch_operands = 3 : i64, tpu.core_type = #tpu.core_type<tc>, window_params = [{transform_indices = @transform_0, window_bounds = array<i64: 1, 10, 512>}, {transform_indices = @transform_1, window_bounds = array<i64: 1, 2, 128>}]} {
    %c0_i32 = arith.constant 0 : i32
    %0 = arith.cmpi eq, %arg2, %c0_i32 : i32
    %1 = arith.extui %0 : i1 to i32
    %c0_i32_0 = arith.constant 0 : i32
    %2 = arith.cmpi ne, %1, %c0_i32_0 : i32
    scf.if %2 {
      %176 = tpu.iota {dimensions = array<i32: 0>} : vector<256x128xi32>
      %c256_i32 = arith.constant 256 : i32
      %177 = arith.muli %arg1, %c256_i32 : i32
      %178 = vector.broadcast %177 : i32 to vector<256x128xi32>
      %179 = arith.addi %176, %178 : vector<256x128xi32>
      %180 = arith.sitofp %179 : vector<256x128xi32> to vector<256x128xf32>
      %cst_20 = arith.constant 5.000000e-01 : f32
      %181 = vector.broadcast %cst_20 : f32 to vector<256x128xf32>
      %182 = arith.addf %180, %181 : vector<256x128xf32>
      %cst_21 = arith.constant 6.250000e-02 : f32
      %183 = vector.broadcast %cst_21 : f32 to vector<256x128xf32>
      %184 = arith.mulf %182, %183 : vector<256x128xf32>
      %185 = math.floor %184 : vector<256x128xf32>
      %cst_22 = arith.constant 1.600000e+01 : f32
      %186 = vector.broadcast %cst_22 : f32 to vector<256x128xf32>
      %187 = arith.mulf %185, %186 : vector<256x128xf32>
      %188 = arith.subf %180, %187 : vector<256x128xf32>
      %cst_23 = arith.constant 0.000000e+00 : f32
      %189 = vector.broadcast %cst_23 : f32 to vector<256x128xf32>
      %190 = arith.cmpf olt, %188, %189 : vector<256x128xf32>
      %cst_24 = arith.constant -1.000000e+00 : f32
      %cst_25 = arith.constant 0.000000e+00 : f32
      %191 = vector.broadcast %cst_24 : f32 to vector<256x128xf32>
      %192 = vector.broadcast %cst_25 : f32 to vector<256x128xf32>
      %193 = arith.select %190, %191, %192 : vector<256x128xi1>, vector<256x128xf32>
      %194 = arith.addf %185, %193 : vector<256x128xf32>
      %cst_26 = arith.constant 1.600000e+01 : f32
      %195 = vector.broadcast %cst_26 : f32 to vector<256x128xf32>
      %196 = arith.cmpf oge, %188, %195 : vector<256x128xf32>
      %cst_27 = arith.constant 1.000000e+00 : f32
      %cst_28 = arith.constant 0.000000e+00 : f32
      %197 = vector.broadcast %cst_27 : f32 to vector<256x128xf32>
      %198 = vector.broadcast %cst_28 : f32 to vector<256x128xf32>
      %199 = arith.select %196, %197, %198 : vector<256x128xi1>, vector<256x128xf32>
      %200 = arith.addf %194, %199 : vector<256x128xf32>
      %cst_29 = arith.constant 1.600000e+01 : f32
      %201 = vector.broadcast %cst_29 : f32 to vector<256x128xf32>
      %202 = arith.mulf %200, %201 : vector<256x128xf32>
      %203 = arith.subf %180, %202 : vector<256x128xf32>
      %cst_30 = arith.constant 2.000000e+00 : f32
      %204 = vector.broadcast %cst_30 : f32 to vector<256x128xf32>
      %205 = arith.mulf %204, %203 : vector<256x128xf32>
      %cst_31 = arith.constant 1.000000e+00 : f32
      %206 = vector.broadcast %cst_31 : f32 to vector<256x128xf32>
      %207 = arith.addf %205, %206 : vector<256x128xf32>
      %cst_32 = arith.constant 6.250000e-02 : f32
      %208 = vector.broadcast %cst_32 : f32 to vector<256x128xf32>
      %209 = arith.mulf %207, %208 : vector<256x128xf32>
      %cst_33 = arith.constant 1.000000e+00 : f32
      %210 = vector.broadcast %cst_33 : f32 to vector<256x128xf32>
      %211 = arith.subf %210, %209 : vector<256x128xf32>
      %c0_34 = arith.constant 0 : index
      %c0_35 = arith.constant 0 : index
      %212 = vector.load %arg6[%c0_34, %c0_35] : memref<256x128xf32, #tpu.memory_space<vmem>>, vector<256x128xf32>
      tpu.vector_store %arg6[%c0_34, %c0_35], %211 {strides = array<i32>} : memref<256x128xf32, #tpu.memory_space<vmem>>, vector<256x128xf32>,
      %cst_36 = arith.constant 2.000000e+00 : f32
      %213 = vector.broadcast %cst_36 : f32 to vector<256x128xf32>
      %214 = arith.mulf %213, %200 : vector<256x128xf32>
      %cst_37 = arith.constant 1.000000e+00 : f32
      %215 = vector.broadcast %cst_37 : f32 to vector<256x128xf32>
      %216 = arith.addf %214, %215 : vector<256x128xf32>
      %cst_38 = arith.constant 6.250000e-02 : f32
      %217 = vector.broadcast %cst_38 : f32 to vector<256x128xf32>
      %218 = arith.mulf %216, %217 : vector<256x128xf32>
      %cst_39 = arith.constant 1.000000e+00 : f32
      %219 = vector.broadcast %cst_39 : f32 to vector<256x128xf32>
      %220 = arith.subf %219, %218 : vector<256x128xf32>
      %c0_40 = arith.constant 0 : index
      %c0_41 = arith.constant 0 : index
      %221 = vector.load %arg7[%c0_40, %c0_41] : memref<256x128xf32, #tpu.memory_space<vmem>>, vector<256x128xf32>
      tpu.vector_store %arg7[%c0_40, %c0_41], %220 {strides = array<i32>} : memref<256x128xf32, #tpu.memory_space<vmem>>, vector<256x128xf32>,
      %cst_42 = arith.constant 1.000000e+10 : f32
      %222 = vector.broadcast %cst_42 : f32 to vector<256x128xf32>
      %c0_43 = arith.constant 0 : index
      %c0_44 = arith.constant 0 : index
      %223 = vector.load %arg5[%c0_43, %c0_44] : memref<256x128xf32, #tpu.memory_space<vmem>>, vector<256x128xf32>
      tpu.vector_store %arg5[%c0_43, %c0_44], %222 {strides = array<i32>} : memref<256x128xf32, #tpu.memory_space<vmem>>, vector<256x128xf32>,
    } else {
    }
    %c0 = arith.constant 0 : index
    %c0_1 = arith.constant 0 : index
    %3 = vector.load %arg6[%c0, %c0_1] : memref<256x128xf32, #tpu.memory_space<vmem>>, vector<256x128xf32>
    %c0_2 = arith.constant 0 : index
    %c0_3 = arith.constant 0 : index
    %4 = vector.load %arg7[%c0_2, %c0_3] : memref<256x128xf32, #tpu.memory_space<vmem>>, vector<256x128xf32>
    %c0_4 = arith.constant 0 : index
    %c0_5 = arith.constant 0 : index
    %5 = vector.load %arg5[%c0_4, %c0_5] : memref<256x128xf32, #tpu.memory_space<vmem>>, vector<256x128xf32>
    %c0_6 = arith.constant 0 : index
    %c0_7 = arith.constant 0 : index
    %c0_8 = arith.constant 0 : index
    %6 = vector.load %arg3[%c0_6, %c0_7, %c0_8] : memref<1x10x512xf32, #tpu.memory_space<vmem>>, vector<1x10x512xf32>
    %7 = vector.shape_cast %6 : vector<1x10x512xf32> to vector<10x512xf32>
    %8 = vector.extract_strided_slice %7 {offsets = [0, 0], sizes = [1, 128], strides = [1, 1]} : vector<10x512xf32> to vector<1x128xf32>
    %9 = vector.extract_strided_slice %7 {offsets = [1, 0], sizes = [1, 128], strides = [1, 1]} : vector<10x512xf32> to vector<1x128xf32>
    %10 = vector.extract_strided_slice %7 {offsets = [2, 0], sizes = [1, 128], strides = [1, 1]} : vector<10x512xf32> to vector<1x128xf32>
    %11 = vector.extract_strided_slice %7 {offsets = [3, 0], sizes = [1, 128], strides = [1, 1]} : vector<10x512xf32> to vector<1x128xf32>
    %12 = vector.extract_strided_slice %7 {offsets = [4, 0], sizes = [1, 128], strides = [1, 1]} : vector<10x512xf32> to vector<1x128xf32>
    %13 = vector.extract_strided_slice %7 {offsets = [5, 0], sizes = [1, 128], strides = [1, 1]} : vector<10x512xf32> to vector<1x128xf32>
    %14 = vector.extract_strided_slice %7 {offsets = [6, 0], sizes = [1, 128], strides = [1, 1]} : vector<10x512xf32> to vector<1x128xf32>
    %15 = vector.extract_strided_slice %7 {offsets = [7, 0], sizes = [1, 128], strides = [1, 1]} : vector<10x512xf32> to vector<1x128xf32>
    %16 = vector.extract_strided_slice %7 {offsets = [8, 0], sizes = [1, 128], strides = [1, 1]} : vector<10x512xf32> to vector<1x128xf32>
    %17 = vector.extract_strided_slice %7 {offsets = [9, 0], sizes = [1, 128], strides = [1, 1]} : vector<10x512xf32> to vector<1x128xf32>
    %18 = vector.broadcast %8 : vector<1x128xf32> to vector<256x128xf32>
    %19 = arith.mulf %18, %3 : vector<256x128xf32>
    %20 = vector.broadcast %9 : vector<1x128xf32> to vector<256x128xf32>
    %21 = arith.mulf %20, %4 : vector<256x128xf32>
    %22 = arith.addf %19, %21 : vector<256x128xf32>
    %23 = vector.broadcast %10 : vector<1x128xf32> to vector<256x128xf32>
    %24 = arith.addf %22, %23 : vector<256x128xf32>
    %25 = vector.broadcast %11 : vector<1x128xf32> to vector<256x128xf32>
    %26 = arith.mulf %25, %3 : vector<256x128xf32>
    %27 = vector.broadcast %12 : vector<1x128xf32> to vector<256x128xf32>
    %28 = arith.mulf %27, %4 : vector<256x128xf32>
    %29 = arith.addf %26, %28 : vector<256x128xf32>
    %30 = vector.broadcast %13 : vector<1x128xf32> to vector<256x128xf32>
    %31 = arith.addf %29, %30 : vector<256x128xf32>
    %32 = vector.broadcast %14 : vector<1x128xf32> to vector<256x128xf32>
    %33 = arith.subf %32, %24 : vector<256x128xf32>
    %34 = arith.subf %33, %31 : vector<256x128xf32>
    %35 = vector.broadcast %15 : vector<1x128xf32> to vector<256x128xf32>
    %36 = arith.mulf %35, %3 : vector<256x128xf32>
    %37 = vector.broadcast %16 : vector<1x128xf32> to vector<256x128xf32>
    %38 = arith.mulf %37, %4 : vector<256x128xf32>
    %39 = arith.addf %36, %38 : vector<256x128xf32>
    %40 = vector.broadcast %17 : vector<1x128xf32> to vector<256x128xf32>
    %41 = arith.addf %39, %40 : vector<256x128xf32>
    %42 = arith.minimumf %24, %31 : vector<256x128xf32>
    %43 = arith.minimumf %42, %34 : vector<256x128xf32>
    %cst = arith.constant 0.000000e+00 : f32
    %44 = vector.broadcast %cst : f32 to vector<256x128xf32>
    %45 = arith.cmpf oge, %43, %44 : vector<256x128xf32>
    %cst_9 = arith.constant 1.000000e+10 : f32
    %46 = vector.broadcast %cst_9 : f32 to vector<256x128xf32>
    %47 = arith.select %45, %41, %46 : vector<256x128xi1>, vector<256x128xf32>
    %48 = arith.minimumf %5, %47 : vector<256x128xf32>
    %49 = vector.extract_strided_slice %7 {offsets = [0, 128], sizes = [1, 128], strides = [1, 1]} : vector<10x512xf32> to vector<1x128xf32>
    %50 = vector.extract_strided_slice %7 {offsets = [1, 128], sizes = [1, 128], strides = [1, 1]} : vector<10x512xf32> to vector<1x128xf32>
    %51 = vector.extract_strided_slice %7 {offsets = [2, 128], sizes = [1, 128], strides = [1, 1]} : vector<10x512xf32> to vector<1x128xf32>
    %52 = vector.extract_strided_slice %7 {offsets = [3, 128], sizes = [1, 128], strides = [1, 1]} : vector<10x512xf32> to vector<1x128xf32>
    %53 = vector.extract_strided_slice %7 {offsets = [4, 128], sizes = [1, 128], strides = [1, 1]} : vector<10x512xf32> to vector<1x128xf32>
    %54 = vector.extract_strided_slice %7 {offsets = [5, 128], sizes = [1, 128], strides = [1, 1]} : vector<10x512xf32> to vector<1x128xf32>
    %55 = vector.extract_strided_slice %7 {offsets = [6, 128], sizes = [1, 128], strides = [1, 1]} : vector<10x512xf32> to vector<1x128xf32>
    %56 = vector.extract_strided_slice %7 {offsets = [7, 128], sizes = [1, 128], strides = [1, 1]} : vector<10x512xf32> to vector<1x128xf32>
    %57 = vector.extract_strided_slice %7 {offsets = [8, 128], sizes = [1, 128], strides = [1, 1]} : vector<10x512xf32> to vector<1x128xf32>
    %58 = vector.extract_strided_slice %7 {offsets = [9, 128], sizes = [1, 128], strides = [1, 1]} : vector<10x512xf32> to vector<1x128xf32>
    %59 = vector.broadcast %49 : vector<1x128xf32> to vector<256x128xf32>
    %60 = arith.mulf %59, %3 : vector<256x128xf32>
    %61 = vector.broadcast %50 : vector<1x128xf32> to vector<256x128xf32>
    %62 = arith.mulf %61, %4 : vector<256x128xf32>
    %63 = arith.addf %60, %62 : vector<256x128xf32>
    %64 = vector.broadcast %51 : vector<1x128xf32> to vector<256x128xf32>
    %65 = arith.addf %63, %64 : vector<256x128xf32>
    %66 = vector.broadcast %52 : vector<1x128xf32> to vector<256x128xf32>
    %67 = arith.mulf %66, %3 : vector<256x128xf32>
    %68 = vector.broadcast %53 : vector<1x128xf32> to vector<256x128xf32>
    %69 = arith.mulf %68, %4 : vector<256x128xf32>
    %70 = arith.addf %67, %69 : vector<256x128xf32>
    %71 = vector.broadcast %54 : vector<1x128xf32> to vector<256x128xf32>
    %72 = arith.addf %70, %71 : vector<256x128xf32>
    %73 = vector.broadcast %55 : vector<1x128xf32> to vector<256x128xf32>
    %74 = arith.subf %73, %65 : vector<256x128xf32>
    %75 = arith.subf %74, %72 : vector<256x128xf32>
    %76 = vector.broadcast %56 : vector<1x128xf32> to vector<256x128xf32>
    %77 = arith.mulf %76, %3 : vector<256x128xf32>
    %78 = vector.broadcast %57 : vector<1x128xf32> to vector<256x128xf32>
    %79 = arith.mulf %78, %4 : vector<256x128xf32>
    %80 = arith.addf %77, %79 : vector<256x128xf32>
    %81 = vector.broadcast %58 : vector<1x128xf32> to vector<256x128xf32>
    %82 = arith.addf %80, %81 : vector<256x128xf32>
    %83 = arith.minimumf %65, %72 : vector<256x128xf32>
    %84 = arith.minimumf %83, %75 : vector<256x128xf32>
    %cst_10 = arith.constant 0.000000e+00 : f32
    %85 = vector.broadcast %cst_10 : f32 to vector<256x128xf32>
    %86 = arith.cmpf oge, %84, %85 : vector<256x128xf32>
    %cst_11 = arith.constant 1.000000e+10 : f32
    %87 = vector.broadcast %cst_11 : f32 to vector<256x128xf32>
    %88 = arith.select %86, %82, %87 : vector<256x128xi1>, vector<256x128xf32>
    %89 = arith.minimumf %48, %88 : vector<256x128xf32>
    %90 = vector.extract_strided_slice %7 {offsets = [0, 256], sizes = [1, 128], strides = [1, 1]} : vector<10x512xf32> to vector<1x128xf32>
    %91 = vector.extract_strided_slice %7 {offsets = [1, 256], sizes = [1, 128], strides = [1, 1]} : vector<10x512xf32> to vector<1x128xf32>
    %92 = vector.extract_strided_slice %7 {offsets = [2, 256], sizes = [1, 128], strides = [1, 1]} : vector<10x512xf32> to vector<1x128xf32>
    %93 = vector.extract_strided_slice %7 {offsets = [3, 256], sizes = [1, 128], strides = [1, 1]} : vector<10x512xf32> to vector<1x128xf32>
    %94 = vector.extract_strided_slice %7 {offsets = [4, 256], sizes = [1, 128], strides = [1, 1]} : vector<10x512xf32> to vector<1x128xf32>
    %95 = vector.extract_strided_slice %7 {offsets = [5, 256], sizes = [1, 128], strides = [1, 1]} : vector<10x512xf32> to vector<1x128xf32>
    %96 = vector.extract_strided_slice %7 {offsets = [6, 256], sizes = [1, 128], strides = [1, 1]} : vector<10x512xf32> to vector<1x128xf32>
    %97 = vector.extract_strided_slice %7 {offsets = [7, 256], sizes = [1, 128], strides = [1, 1]} : vector<10x512xf32> to vector<1x128xf32>
    %98 = vector.extract_strided_slice %7 {offsets = [8, 256], sizes = [1, 128], strides = [1, 1]} : vector<10x512xf32> to vector<1x128xf32>
    %99 = vector.extract_strided_slice %7 {offsets = [9, 256], sizes = [1, 128], strides = [1, 1]} : vector<10x512xf32> to vector<1x128xf32>
    %100 = vector.broadcast %90 : vector<1x128xf32> to vector<256x128xf32>
    %101 = arith.mulf %100, %3 : vector<256x128xf32>
    %102 = vector.broadcast %91 : vector<1x128xf32> to vector<256x128xf32>
    %103 = arith.mulf %102, %4 : vector<256x128xf32>
    %104 = arith.addf %101, %103 : vector<256x128xf32>
    %105 = vector.broadcast %92 : vector<1x128xf32> to vector<256x128xf32>
    %106 = arith.addf %104, %105 : vector<256x128xf32>
    %107 = vector.broadcast %93 : vector<1x128xf32> to vector<256x128xf32>
    %108 = arith.mulf %107, %3 : vector<256x128xf32>
    %109 = vector.broadcast %94 : vector<1x128xf32> to vector<256x128xf32>
    %110 = arith.mulf %109, %4 : vector<256x128xf32>
    %111 = arith.addf %108, %110 : vector<256x128xf32>
    %112 = vector.broadcast %95 : vector<1x128xf32> to vector<256x128xf32>
    %113 = arith.addf %111, %112 : vector<256x128xf32>
    %114 = vector.broadcast %96 : vector<1x128xf32> to vector<256x128xf32>
    %115 = arith.subf %114, %106 : vector<256x128xf32>
    %116 = arith.subf %115, %113 : vector<256x128xf32>
    %117 = vector.broadcast %97 : vector<1x128xf32> to vector<256x128xf32>
    %118 = arith.mulf %117, %3 : vector<256x128xf32>
    %119 = vector.broadcast %98 : vector<1x128xf32> to vector<256x128xf32>
    %120 = arith.mulf %119, %4 : vector<256x128xf32>
    %121 = arith.addf %118, %120 : vector<256x128xf32>
    %122 = vector.broadcast %99 : vector<1x128xf32> to vector<256x128xf32>
    %123 = arith.addf %121, %122 : vector<256x128xf32>
    %124 = arith.minimumf %106, %113 : vector<256x128xf32>
    %125 = arith.minimumf %124, %116 : vector<256x128xf32>
    %cst_12 = arith.constant 0.000000e+00 : f32
    %126 = vector.broadcast %cst_12 : f32 to vector<256x128xf32>
    %127 = arith.cmpf oge, %125, %126 : vector<256x128xf32>
    %cst_13 = arith.constant 1.000000e+10 : f32
    %128 = vector.broadcast %cst_13 : f32 to vector<256x128xf32>
    %129 = arith.select %127, %123, %128 : vector<256x128xi1>, vector<256x128xf32>
    %130 = arith.minimumf %89, %129 : vector<256x128xf32>
    %131 = vector.extract_strided_slice %7 {offsets = [0, 384], sizes = [1, 128], strides = [1, 1]} : vector<10x512xf32> to vector<1x128xf32>
    %132 = vector.extract_strided_slice %7 {offsets = [1, 384], sizes = [1, 128], strides = [1, 1]} : vector<10x512xf32> to vector<1x128xf32>
    %133 = vector.extract_strided_slice %7 {offsets = [2, 384], sizes = [1, 128], strides = [1, 1]} : vector<10x512xf32> to vector<1x128xf32>
    %134 = vector.extract_strided_slice %7 {offsets = [3, 384], sizes = [1, 128], strides = [1, 1]} : vector<10x512xf32> to vector<1x128xf32>
    %135 = vector.extract_strided_slice %7 {offsets = [4, 384], sizes = [1, 128], strides = [1, 1]} : vector<10x512xf32> to vector<1x128xf32>
    %136 = vector.extract_strided_slice %7 {offsets = [5, 384], sizes = [1, 128], strides = [1, 1]} : vector<10x512xf32> to vector<1x128xf32>
    %137 = vector.extract_strided_slice %7 {offsets = [6, 384], sizes = [1, 128], strides = [1, 1]} : vector<10x512xf32> to vector<1x128xf32>
    %138 = vector.extract_strided_slice %7 {offsets = [7, 384], sizes = [1, 128], strides = [1, 1]} : vector<10x512xf32> to vector<1x128xf32>
    %139 = vector.extract_strided_slice %7 {offsets = [8, 384], sizes = [1, 128], strides = [1, 1]} : vector<10x512xf32> to vector<1x128xf32>
    %140 = vector.extract_strided_slice %7 {offsets = [9, 384], sizes = [1, 128], strides = [1, 1]} : vector<10x512xf32> to vector<1x128xf32>
    %141 = vector.broadcast %131 : vector<1x128xf32> to vector<256x128xf32>
    %142 = arith.mulf %141, %3 : vector<256x128xf32>
    %143 = vector.broadcast %132 : vector<1x128xf32> to vector<256x128xf32>
    %144 = arith.mulf %143, %4 : vector<256x128xf32>
    %145 = arith.addf %142, %144 : vector<256x128xf32>
    %146 = vector.broadcast %133 : vector<1x128xf32> to vector<256x128xf32>
    %147 = arith.addf %145, %146 : vector<256x128xf32>
    %148 = vector.broadcast %134 : vector<1x128xf32> to vector<256x128xf32>
    %149 = arith.mulf %148, %3 : vector<256x128xf32>
    %150 = vector.broadcast %135 : vector<1x128xf32> to vector<256x128xf32>
    %151 = arith.mulf %150, %4 : vector<256x128xf32>
    %152 = arith.addf %149, %151 : vector<256x128xf32>
    %153 = vector.broadcast %136 : vector<1x128xf32> to vector<256x128xf32>
    %154 = arith.addf %152, %153 : vector<256x128xf32>
    %155 = vector.broadcast %137 : vector<1x128xf32> to vector<256x128xf32>
    %156 = arith.subf %155, %147 : vector<256x128xf32>
    %157 = arith.subf %156, %154 : vector<256x128xf32>
    %158 = vector.broadcast %138 : vector<1x128xf32> to vector<256x128xf32>
    %159 = arith.mulf %158, %3 : vector<256x128xf32>
    %160 = vector.broadcast %139 : vector<1x128xf32> to vector<256x128xf32>
    %161 = arith.mulf %160, %4 : vector<256x128xf32>
    %162 = arith.addf %159, %161 : vector<256x128xf32>
    %163 = vector.broadcast %140 : vector<1x128xf32> to vector<256x128xf32>
    %164 = arith.addf %162, %163 : vector<256x128xf32>
    %165 = arith.minimumf %147, %154 : vector<256x128xf32>
    %166 = arith.minimumf %165, %157 : vector<256x128xf32>
    %cst_14 = arith.constant 0.000000e+00 : f32
    %167 = vector.broadcast %cst_14 : f32 to vector<256x128xf32>
    %168 = arith.cmpf oge, %166, %167 : vector<256x128xf32>
    %cst_15 = arith.constant 1.000000e+10 : f32
    %169 = vector.broadcast %cst_15 : f32 to vector<256x128xf32>
    %170 = arith.select %168, %164, %169 : vector<256x128xi1>, vector<256x128xf32>
    %171 = arith.minimumf %130, %170 : vector<256x128xf32>
    %c0_16 = arith.constant 0 : index
    %c0_17 = arith.constant 0 : index
    %172 = vector.load %arg5[%c0_16, %c0_17] : memref<256x128xf32, #tpu.memory_space<vmem>>, vector<256x128xf32>
    tpu.vector_store %arg5[%c0_16, %c0_17], %171 {strides = array<i32>} : memref<256x128xf32, #tpu.memory_space<vmem>>, vector<256x128xf32>,
    %c0_i32_18 = arith.constant 0 : i32
    %173 = arith.cmpi eq, %arg2, %c0_i32_18 : i32
    %174 = arith.extui %173 : i1 to i32
    %c0_i32_19 = arith.constant 0 : i32
    %175 = arith.cmpi ne, %174, %c0_i32_19 : i32
    scf.if %175 {
      %c0_20 = arith.constant 0 : index
      %c0_21 = arith.constant 0 : index
      %176 = vector.load %arg5[%c0_20, %c0_21] : memref<256x128xf32, #tpu.memory_space<vmem>>, vector<256x128xf32>
      %177 = vector.shape_cast %176 : vector<256x128xf32> to vector<2x128x128xf32>
      %cst_22 = arith.constant dense<0x7F800000> : vector<2x128xf32>
      %178 = vector.multi_reduction <minimumf>, %177, %cst_22 [2] : vector<2x128x128xf32> to vector<2x128xf32>
      %cst_23 = arith.constant 1.000000e+10 : f32
      %179 = vector.broadcast %cst_23 : f32 to vector<2x128xf32>
      %180 = arith.cmpf oge, %178, %179 : vector<2x128xf32>
      %cst_24 = arith.constant -1.000000e+00 : f32
      %181 = vector.broadcast %cst_24 : f32 to vector<2x128xf32>
      %182 = arith.select %180, %181, %178 : vector<2x128xi1>, vector<2x128xf32>
      %c0_25 = arith.constant 0 : index
      %c0_26 = arith.constant 0 : index
      %c0_27 = arith.constant 0 : index
      %183 = vector.load %arg4[%c0_25, %c0_26, %c0_27] : memref<1x2x128xf32, #tpu.memory_space<vmem>>, vector<1x2x128xf32>
      %184 = vector.shape_cast %183 : vector<1x2x128xf32> to vector<2x128xf32>
      %185 = vector.shape_cast %182 : vector<2x128xf32> to vector<1x2x128xf32>
      tpu.vector_store %arg4[%c0_25, %c0_26, %c0_27], %185 {strides = array<i32>} : memref<1x2x128xf32, #tpu.memory_space<vmem>>, vector<1x2x128xf32>,
    } else {
    }
    return
  }
  func.func @transform_0(%arg0: i32, %arg1: i32, %arg2: i32) -> (i32, i32, i32) {
    %c0_i32 = arith.constant 0 : i32
    %c0_i32_0 = arith.constant 0 : i32
    return %arg0, %c0_i32, %arg2 : i32, i32, i32
  }
  func.func @transform_1(%arg0: i32, %arg1: i32, %arg2: i32) -> (i32, i32, i32) {
    %c0_i32 = arith.constant 0 : i32
    %c0_i32_0 = arith.constant 0 : i32
    return %arg0, %arg1, %c0_i32 : i32, i32, i32
  }
}

</mosaic_0001>

<llo_original>
// kernel: tpu_custom_call.1
$region0: #{tpu_custom_call.1}
  #allocation0 [shape = 'u32[]', space=smem, size = 0x4, offset = 0x4, fixed_abs, tag = 'smem constant byte address 0x4 - core index']
  #allocation1 [shape = 'u32[144,128]{1,0:T(1,128)}', space=vmem, size = 0x12000, scoped, tag = 'internal scratch']
  #allocation2 [shape = 'f32[256,128]{1,0:T(8,128)}', space=vmem, size = 0x20000, scoped, tag = 'scratch operand']
  #allocation3 [shape = 'f32[256,128]{1,0:T(8,128)}', space=vmem, size = 0x20000, scoped, tag = 'scratch operand']
  #allocation4 [shape = 'f32[256,128]{1,0:T(8,128)}', space=vmem, size = 0x20000, scoped, tag = 'scratch operand']
  %s0 = inlined_call_operand.vmem [shape: f32[2,10,512], index: 0, kind: input, shape index: {}]
  %s1 = inlined_call_operand.hbm [shape: f32[2,2,128], index: 1, kind: output, shape index: {}]
  %s2 = sld [smem:[#allocation0]]
  $region45: #{tpu_custom_call.1} parent=0
    _
  %s4 = ssub.s32 1, %s2
  %s5 = scalar_select 0, %s4, %s2
  $region1: #{tpu_custom_call.1} parent=0
    #allocation5 [shape = 'u8[2048]{0}', space=vmem, size = 0x800, scoped, tag = 'output window, operand 0']
    #allocation6 [shape = 's32[2]{0}', space=sflag, size = 0x8, scoped, tag = 'scoped memory for tpu_custom_call.1']
    %6 = vsyncpa [#allocation6], 0
    %s7 = scalar_lea.sflag [#allocation6], 1
    %8 = vsyncpa %s7, 0
    loop: start=0, step=1, limit=4
    $region2: #{tpu_custom_call.1} parent=1 // loop_pre_header
      _
    $region3: #{tpu_custom_call.1} parent=1 // loop_header
      %s10 = sphi 0, %s14
      %p11 = scmp.ge.s32.totalorder %s10, 4
      %s17 = sphi 0, %s36
      %s18 = sphi 0, %s32
      %s19 = sphi 0, %s28
      %s20 = sphi 0, %s17
      %s21 = sphi 0, %s18
      %s22 = sphi 0, %s19
      %s23 = sphi 0, %s20
      %s24 = sphi 0, %s21
      %s25 = sphi 0, %s22
      %s41 = sphi 0, %s43
      %s44 = sphi 0, %s41
      %s45 = sphi 0, %s44
      %s61 = sphi 0, %s45
      %s69 = sphi 0, %s71
      %s72 = sphi 0, %s69
      %s73 = sphi 0, %s72
      %s89 = sphi 0, %s73
    $region4: #{tpu_custom_call.1} parent=1 // loop_header_branch
      %13 = sbr.rel (%p11) target = $region8
    $region5: #{tpu_custom_call.1} parent=1 // loop_body
      %s15 = ssub.s32 %s10, 1
      %s16 = ssub.s32 %s10, 2
      %s26 = sadd.s32 1, %s19
      %p27 = scmp.ge.s32.totalorder %s26, 1
      %s28 = scalar_select %p27, 0, %s26
      %s29 = sadd.s32 1, %s18
      %s30 = scalar_select %p27, %s29, %s18
      %p31 = scmp.ge.s32.totalorder %s30, 1
      %s32 = scalar_select %p31, 0, %s30
      %s33 = sadd.s32 1, %s17
      %s34 = scalar_select %p31, %s33, %s17
      %p35 = scmp.ge.s32.totalorder %s34, 2
      %s36 = scalar_select %p35, 0, %s34
      %s37 = ssub.s32 %s17, %s36
      %s38 = ssub.s32 %s19, %s28
      %s39 = sor.u32 %s37, %s38
      %p40 = scmp.eq.s32.totalorder %s39, 0
      %s42 = sadd.s32 %s41, 1
      %s43 = scalar_select %p40, %s41, %s42
      %p46 = pneg %p40
      %p47 = scmp.eq.s32.totalorder %s10, 1
      %p48 = por %p46, %p47
      %p49 = scmp.ne.s32.totalorder %s41, %s44
      %p50 = scmp.eq.s32.totalorder %s10, 0
      %p51 = por %p49, %p50
      %p52 = scmp.ne.s32.totalorder %s41, %s44
      %p53 = scmp.eq.s32.totalorder %s15, 1
      %p54 = por %p52, %p53
      %p55 = scmp.ne.s32.totalorder %s44, %s45
      %p56 = scmp.eq.s32.totalorder %s15, 0
      %p57 = por %p55, %p56
      %p58 = scmp.ne.s32.totalorder %s44, %s45
      %p59 = scmp.eq.s32.totalorder %s16, 1
      %p60 = por %p58, %p59
      %p62 = scmp.ne.s32.totalorder %s45, %s61
      %p63 = scmp.eq.s32.totalorder %s16, 0
      %p64 = por %p62, %p63
      %s65 = ssub.s32 %s17, %s36
      %s66 = ssub.s32 %s18, %s32
      %s67 = sor.u32 %s65, %s66
      %p68 = scmp.eq.s32.totalorder %s67, 0
      %s70 = sadd.s32 %s69, 1
      %s71 = scalar_select %p68, %s69, %s70
      %p74 = pneg %p68
      %p75 = scmp.eq.s32.totalorder %s10, 1
      %p76 = por %p74, %p75
      %p77 = scmp.ne.s32.totalorder %s69, %s72
      %p78 = scmp.eq.s32.totalorder %s10, 0
      %p79 = por %p77, %p78
      %p80 = scmp.ne.s32.totalorder %s69, %s72
      %p81 = scmp.eq.s32.totalorder %s15, 1
      %p82 = por %p80, %p81
      %p83 = scmp.ne.s32.totalorder %s72, %s73
      %p84 = scmp.eq.s32.totalorder %s15, 0
      %p85 = por %p83, %p84
      %p86 = scmp.ne.s32.totalorder %s72, %s73
      %p87 = scmp.eq.s32.totalorder %s16, 1
      %p88 = por %p86, %p87
      %p90 = scmp.ne.s32.totalorder %s73, %s89
      %p91 = scmp.eq.s32.totalorder %s16, 0
      %p92 = por %p90, %p91
      %p93 = scmp.le.s32.totalorder 1, %s10
      %p94 = scmp.lt.s32.totalorder %s10, 3
      %p95 = pnand %p93, %p94
      %p96 = pneg %p95
      // Predicated region
      $region9: #{tpu_custom_call.1} parent=5 // pred_check
        _
      $region10: #{tpu_custom_call.1} parent=5 // pred_check_branch
        %98 = sbr.rel (%p95) target = $region12
      $region11: #{tpu_custom_call.1} parent=5 // pred_region
        %s99 = ssub.s32 %s10, 1
      $region12: #{tpu_custom_call.1} parent=5 // pred_fallthru
        _
      %p100 = scmp.lt.s32.totalorder %s10, 2
      // Predicated region
      $region13: #{tpu_custom_call.1} parent=5 // pred_check
        %p101 = pneg %p100
      $region14: #{tpu_custom_call.1} parent=5 // pred_check_branch
        %103 = sbr.rel (%p101) target = $region16
      $region15: #{tpu_custom_call.1} parent=5 // pred_region
        // Predicated region
        $region17: #{tpu_custom_call.1} parent=15 // pred_check
          %p104 = pneg %p51
        $region18: #{tpu_custom_call.1} parent=15 // pred_check_branch
          %106 = sbr.rel (%p104) target = $region20
        $region19: #{tpu_custom_call.1} parent=15 // pred_region
          %s107 = smul.u32 4, %s19
          %p108 = scmp.lt.s32.totalorder %s17, 1
          %s109 = scalar_select %p108, %s17, 1
          %p110 = scmp.lt.s32.totalorder %s107, 3
          %s111 = scalar_select %p110, %s107, 3
          %s112 = smul.addr %s109, 8
          %s113 = sadd.s32 %s111, %s112
          %s114 = smul.addr %s113, 8
          %s115 = scalar_lea.vmem %s0, %s114
          %s116 = smul.u32 4, %s19
        $region20: #{tpu_custom_call.1} parent=15 // pred_fallthru
          _
      $region16: #{tpu_custom_call.1} parent=5 // pred_fallthru
        _
      %p117 = scmp.le.s32.totalorder 1, %s10
      %p118 = scmp.lt.s32.totalorder %s10, 3
      %p119 = pnand %p117, %p118
      %p120 = pneg %p119
      // Predicated region
      $region21: #{tpu_custom_call.1} parent=5 // pred_check
        _
      $region22: #{tpu_custom_call.1} parent=5 // pred_check_branch
        %122 = sbr.rel (%p119) target = $region24
      $region23: #{tpu_custom_call.1} parent=5 // pred_region
        %s123 = ssub.s32 %s10, 1
        %s124 = smul.u32 4, %s22
        %p125 = scmp.lt.s32.totalorder %s20, 1
        %s126 = scalar_select %p125, %s20, 1
        %p127 = scmp.lt.s32.totalorder %s124, 3
        %s128 = scalar_select %p127, %s124, 3
        %s129 = smul.addr %s126, 8
        %s130 = sadd.s32 %s128, %s129
        %s131 = smul.addr %s130, 8
        %s132 = scalar_lea.vmem %s0, %s131
        %p133 = pneg %p57
        %p134 = pneg %p54
        %p135 = pneg %p85
        %p136 = pneg %p82
        %s137 = sand.u32 %s72, 1
        %s138 = scalar_lea.sflag [#allocation6], %s137
        %s139 = sand.u32 %s72, 1
        %s140 = smul.addr %s139, 2
        %s141 = scalar_lea.vmem [#allocation5], %s140
        %s142 = smul.u32 4, %s22
        %p143 = scmp.lt.s32.totalorder %s20, 1
        %s144 = scalar_select %p143, %s20, 1
        %p145 = scmp.lt.s32.totalorder %s142, 3
        %s146 = scalar_select %p145, %s142, 3
        %s147 = smul.addr %s144, 8
        %s148 = sadd.s32 %s146, %s147
        %s149 = smul.addr %s148, 8
        %s150 = scalar_lea.vmem %s0, %s149
        %s151 = smul.u32 4, %s22
        %p152 = scmp.eq.s32.totalorder %s22, 0
        // Predicated region
        $region25: #{tpu_custom_call.1} parent=23 // pred_check
          %p153 = pneg %p152
        $region26: #{tpu_custom_call.1} parent=23 // pred_check_branch
          %155 = sbr.rel (%p153) target = $region28
        $region27: #{tpu_custom_call.1} parent=23 // pred_region
          %v156 = vlaneseq
          %v157 = vshrl.u32 %v156, 7
          %v158 = vadd.s32 %v157, 8
          %v159 = vadd.s32 %v157, 16
          %v160 = vadd.s32 %v157, 24
          %v161 = vadd.s32 %v157, 32
          %v162 = vadd.s32 %v157, 40
          %v163 = vadd.s32 %v157, 48
          %v164 = vadd.s32 %v157, 56
          %v165 = vadd.s32 %v157, 64
          %v166 = vadd.s32 %v157, 72
          %v167 = vadd.s32 %v157, 80
          %v168 = vadd.s32 %v157, 88
          %v169 = vadd.s32 %v157, 96
          %v170 = vadd.s32 %v157, 104
          %v171 = vadd.s32 %v157, 112
          %v172 = vadd.s32 %v157, 120
          %v173 = vadd.s32 %v157, 128
          %v174 = vadd.s32 %v157, 136
          %v175 = vadd.s32 %v157, 144
          %v176 = vadd.s32 %v157, 152
          %v177 = vadd.s32 %v157, 160
          %v178 = vadd.s32 %v157, 168
          %v179 = vadd.s32 %v157, 176
          %v180 = vadd.s32 %v157, 184
          %v181 = vadd.s32 %v157, 192
          %v182 = vadd.s32 %v157, 200
          %v183 = vadd.s32 %v157, 208
          %v184 = vadd.s32 %v157, 216
          %v185 = vadd.s32 %v157, 224
          %v186 = vadd.s32 %v157, 232
          %v187 = vadd.s32 %v157, 240
          %v188 = vadd.s32 %v157, 248
          %s189 = smul.u32 %s21, 256
          %v190 = vstv %s189
          %v191 = vadd.s32 %v157, %v190
          %v192 = vadd.s32 %v158, %v190
          %v193 = vadd.s32 %v159, %v190
          %v194 = vadd.s32 %v160, %v190
          %v195 = vadd.s32 %v161, %v190
          %v196 = vadd.s32 %v162, %v190
          %v197 = vadd.s32 %v163, %v190
          %v198 = vadd.s32 %v164, %v190
          %v199 = vadd.s32 %v165, %v190
          %v200 = vadd.s32 %v166, %v190
          %v201 = vadd.s32 %v167, %v190
          %v202 = vadd.s32 %v168, %v190
          %v203 = vadd.s32 %v169, %v190
          %v204 = vadd.s32 %v170, %v190
          %v205 = vadd.s32 %v171, %v190
          %v206 = vadd.s32 %v172, %v190
          %v207 = vadd.s32 %v173, %v190
          %v208 = vadd.s32 %v174, %v190
          %v209 = vadd.s32 %v175, %v190
          %v210 = vadd.s32 %v176, %v190
          %v211 = vadd.s32 %v177, %v190
          %v212 = vadd.s32 %v178, %v190
          %v213 = vadd.s32 %v179, %v190
          %v214 = vadd.s32 %v180, %v190
          %v215 = vadd.s32 %v181, %v190
          %v216 = vadd.s32 %v182, %v190
          %v217 = vadd.s32 %v183, %v190
          %v218 = vadd.s32 %v184, %v190
          %v219 = vadd.s32 %v185, %v190
          %v220 = vadd.s32 %v186, %v190
          %v221 = vadd.s32 %v187, %v190
          %v222 = vadd.s32 %v188, %v190
          %v223 = vcvt.s32.f32 %v191
          %v224 = vcvt.s32.f32 %v192
          %v225 = vcvt.s32.f32 %v193
          %v226 = vcvt.s32.f32 %v194
          %v227 = vcvt.s32.f32 %v195
          %v228 = vcvt.s32.f32 %v196
          %v229 = vcvt.s32.f32 %v197
          %v230 = vcvt.s32.f32 %v198
          %v231 = vcvt.s32.f32 %v199
          %v232 = vcvt.s32.f32 %v200
          %v233 = vcvt.s32.f32 %v201
          %v234 = vcvt.s32.f32 %v202
          %v235 = vcvt.s32.f32 %v203
          %v236 = vcvt.s32.f32 %v204
          %v237 = vcvt.s32.f32 %v205
          %v238 = vcvt.s32.f32 %v206
          %v239 = vcvt.s32.f32 %v207
          %v240 = vcvt.s32.f32 %v208
          %v241 = vcvt.s32.f32 %v209
          %v242 = vcvt.s32.f32 %v210
          %v243 = vcvt.s32.f32 %v211
          %v244 = vcvt.s32.f32 %v212
          %v245 = vcvt.s32.f32 %v213
          %v246 = vcvt.s32.f32 %v214
          %v247 = vcvt.s32.f32 %v215
          %v248 = vcvt.s32.f32 %v216
          %v249 = vcvt.s32.f32 %v217
          %v250 = vcvt.s32.f32 %v218
          %v251 = vcvt.s32.f32 %v219
          %v252 = vcvt.s32.f32 %v220
          %v253 = vcvt.s32.f32 %v221
          %v254 = vcvt.s32.f32 %v222
          %v255 = vadd.f32 %v223, 0.5
          %v256 = vadd.f32 %v224, 0.5
          %v257 = vadd.f32 %v225, 0.5
          %v258 = vadd.f32 %v226, 0.5
          %v259 = vadd.f32 %v227, 0.5
          %v260 = vadd.f32 %v228, 0.5
          %v261 = vadd.f32 %v229, 0.5
          %v262 = vadd.f32 %v230, 0.5
          %v263 = vadd.f32 %v231, 0.5
          %v264 = vadd.f32 %v232, 0.5
          %v265 = vadd.f32 %v233, 0.5
          %v266 = vadd.f32 %v234, 0.5
          %v267 = vadd.f32 %v235, 0.5
          %v268 = vadd.f32 %v236, 0.5
          %v269 = vadd.f32 %v237, 0.5
          %v270 = vadd.f32 %v238, 0.5
          %v271 = vadd.f32 %v239, 0.5
          %v272 = vadd.f32 %v240, 0.5
          %v273 = vadd.f32 %v241, 0.5
          %v274 = vadd.f32 %v242, 0.5
          %v275 = vadd.f32 %v243, 0.5
          %v276 = vadd.f32 %v244, 0.5
          %v277 = vadd.f32 %v245, 0.5
          %v278 = vadd.f32 %v246, 0.5
          %v279 = vadd.f32 %v247, 0.5
          %v280 = vadd.f32 %v248, 0.5
          %v281 = vadd.f32 %v249, 0.5
          %v282 = vadd.f32 %v250, 0.5
          %v283 = vadd.f32 %v251, 0.5
          %v284 = vadd.f32 %v252, 0.5
          %v285 = vadd.f32 %v253, 0.5
          %v286 = vadd.f32 %v254, 0.5
          %v287 = vmul.f32 %v255, 0.0625
          %v288 = vmul.f32 %v256, 0.0625
          %v289 = vmul.f32 %v257, 0.0625
          %v290 = vmul.f32 %v258, 0.0625
          %v291 = vmul.f32 %v259, 0.0625
          %v292 = vmul.f32 %v260, 0.0625
          %v293 = vmul.f32 %v261, 0.0625
          %v294 = vmul.f32 %v262, 0.0625
          %v295 = vmul.f32 %v263, 0.0625
          %v296 = vmul.f32 %v264, 0.0625
          %v297 = vmul.f32 %v265, 0.0625
          %v298 = vmul.f32 %v266, 0.0625
          %v299 = vmul.f32 %v267, 0.0625
          %v300 = vmul.f32 %v268, 0.0625
          %v301 = vmul.f32 %v269, 0.0625
          %v302 = vmul.f32 %v270, 0.0625
          %v303 = vmul.f32 %v271, 0.0625
          %v304 = vmul.f32 %v272, 0.0625
          %v305 = vmul.f32 %v273, 0.0625
          %v306 = vmul.f32 %v274, 0.0625
          %v307 = vmul.f32 %v275, 0.0625
          %v308 = vmul.f32 %v276, 0.0625
          %v309 = vmul.f32 %v277, 0.0625
          %v310 = vmul.f32 %v278, 0.0625
          %v311 = vmul.f32 %v279, 0.0625
          %v312 = vmul.f32 %v280, 0.0625
          %v313 = vmul.f32 %v281, 0.0625
          %v314 = vmul.f32 %v282, 0.0625
          %v315 = vmul.f32 %v283, 0.0625
          %v316 = vmul.f32 %v284, 0.0625
          %v317 = vmul.f32 %v285, 0.0625
          %v318 = vmul.f32 %v286, 0.0625
          %v319 = vfloor.f32 %v287
          %v320 = vfloor.f32 %v288
          %v321 = vfloor.f32 %v289
          %v322 = vfloor.f32 %v290
          %v323 = vfloor.f32 %v291
          %v324 = vfloor.f32 %v292
          %v325 = vfloor.f32 %v293
          %v326 = vfloor.f32 %v294
          %v327 = vfloor.f32 %v295
          %v328 = vfloor.f32 %v296
          %v329 = vfloor.f32 %v297
          %v330 = vfloor.f32 %v298
          %v331 = vfloor.f32 %v299
          %v332 = vfloor.f32 %v300
          %v333 = vfloor.f32 %v301
          %v334 = vfloor.f32 %v302
          %v335 = vfloor.f32 %v303
          %v336 = vfloor.f32 %v304
          %v337 = vfloor.f32 %v305
          %v338 = vfloor.f32 %v306
          %v339 = vfloor.f32 %v307
          %v340 = vfloor.f32 %v308
          %v341 = vfloor.f32 %v309
          %v342 = vfloor.f32 %v310
          %v343 = vfloor.f32 %v311
          %v344 = vfloor.f32 %v312
          %v345 = vfloor.f32 %v313
          %v346 = vfloor.f32 %v314
          %v347 = vfloor.f32 %v315
          %v348 = vfloor.f32 %v316
          %v349 = vfloor.f32 %v317
          %v350 = vfloor.f32 %v318
          %v351 = vmul.f32 %v319, 16.0
          %v352 = vmul.f32 %v320, 16.0
          %v353 = vmul.f32 %v321, 16.0
          %v354 = vmul.f32 %v322, 16.0
          %v355 = vmul.f32 %v323, 16.0
          %v356 = vmul.f32 %v324, 16.0
          %v357 = vmul.f32 %v325, 16.0
          %v358 = vmul.f32 %v326, 16.0
          %v359 = vmul.f32 %v327, 16.0
          %v360 = vmul.f32 %v328, 16.0
          %v361 = vmul.f32 %v329, 16.0
          %v362 = vmul.f32 %v330, 16.0
          %v363 = vmul.f32 %v331, 16.0
          %v364 = vmul.f32 %v332, 16.0
          %v365 = vmul.f32 %v333, 16.0
          %v366 = vmul.f32 %v334, 16.0
          %v367 = vmul.f32 %v335, 16.0
          %v368 = vmul.f32 %v336, 16.0
          %v369 = vmul.f32 %v337, 16.0
          %v370 = vmul.f32 %v338, 16.0
          %v371 = vmul.f32 %v339, 16.0
          %v372 = vmul.f32 %v340, 16.0
          %v373 = vmul.f32 %v341, 16.0
          %v374 = vmul.f32 %v342, 16.0
          %v375 = vmul.f32 %v343, 16.0
          %v376 = vmul.f32 %v344, 16.0
          %v377 = vmul.f32 %v345, 16.0
          %v378 = vmul.f32 %v346, 16.0
          %v379 = vmul.f32 %v347, 16.0
          %v380 = vmul.f32 %v348, 16.0
          %v381 = vmul.f32 %v349, 16.0
          %v382 = vmul.f32 %v350, 16.0
          %v383 = vsub.f32 %v223, %v351
          %v384 = vsub.f32 %v224, %v352
          %v385 = vsub.f32 %v225, %v353
          %v386 = vsub.f32 %v226, %v354
          %v387 = vsub.f32 %v227, %v355
          %v388 = vsub.f32 %v228, %v356
          %v389 = vsub.f32 %v229, %v357
          %v390 = vsub.f32 %v230, %v358
          %v391 = vsub.f32 %v231, %v359
          %v392 = vsub.f32 %v232, %v360
          %v393 = vsub.f32 %v233, %v361
          %v394 = vsub.f32 %v234, %v362
          %v395 = vsub.f32 %v235, %v363
          %v396 = vsub.f32 %v236, %v364
          %v397 = vsub.f32 %v237, %v365
          %v398 = vsub.f32 %v238, %v366
          %v399 = vsub.f32 %v239, %v367
          %v400 = vsub.f32 %v240, %v368
          %v401 = vsub.f32 %v241, %v369
          %v402 = vsub.f32 %v242, %v370
          %v403 = vsub.f32 %v243, %v371
          %v404 = vsub.f32 %v244, %v372
          %v405 = vsub.f32 %v245, %v373
          %v406 = vsub.f32 %v246, %v374
          %v407 = vsub.f32 %v247, %v375
          %v408 = vsub.f32 %v248, %v376
          %v409 = vsub.f32 %v249, %v377
          %v410 = vsub.f32 %v250, %v378
          %v411 = vsub.f32 %v251, %v379
          %v412 = vsub.f32 %v252, %v380
          %v413 = vsub.f32 %v253, %v381
          %v414 = vsub.f32 %v254, %v382
          %vm415 = vcmp.lt.f32.partialorder %v383, 0.0
          %vm416 = vcmp.lt.f32.partialorder %v384, 0.0
          %vm417 = vcmp.lt.f32.partialorder %v385, 0.0
          %vm418 = vcmp.lt.f32.partialorder %v386, 0.0
          %vm419 = vcmp.lt.f32.partialorder %v387, 0.0
          %vm420 = vcmp.lt.f32.partialorder %v388, 0.0
          %vm421 = vcmp.lt.f32.partialorder %v389, 0.0
          %vm422 = vcmp.lt.f32.partialorder %v390, 0.0
          %vm423 = vcmp.lt.f32.partialorder %v391, 0.0
          %vm424 = vcmp.lt.f32.partialorder %v392, 0.0
          %vm425 = vcmp.lt.f32.partialorder %v393, 0.0
          %vm426 = vcmp.lt.f32.partialorder %v394, 0.0
          %vm427 = vcmp.lt.f32.partialorder %v395, 0.0
          %vm428 = vcmp.lt.f32.partialorder %v396, 0.0
          %vm429 = vcmp.lt.f32.partialorder %v397, 0.0
          %vm430 = vcmp.lt.f32.partialorder %v398, 0.0
          %vm431 = vcmp.lt.f32.partialorder %v399, 0.0
          %vm432 = vcmp.lt.f32.partialorder %v400, 0.0
          %vm433 = vcmp.lt.f32.partialorder %v401, 0.0
          %vm434 = vcmp.lt.f32.partialorder %v402, 0.0
          %vm435 = vcmp.lt.f32.partialorder %v403, 0.0
          %vm436 = vcmp.lt.f32.partialorder %v404, 0.0
          %vm437 = vcmp.lt.f32.partialorder %v405, 0.0
          %vm438 = vcmp.lt.f32.partialorder %v406, 0.0
          %vm439 = vcmp.lt.f32.partialorder %v407, 0.0
          %vm440 = vcmp.lt.f32.partialorder %v408, 0.0
          %vm441 = vcmp.lt.f32.partialorder %v409, 0.0
          %vm442 = vcmp.lt.f32.partialorder %v410, 0.0
          %vm443 = vcmp.lt.f32.partialorder %v411, 0.0
          %vm444 = vcmp.lt.f32.partialorder %v412, 0.0
          %vm445 = vcmp.lt.f32.partialorder %v413, 0.0
          %vm446 = vcmp.lt.f32.partialorder %v414, 0.0
          %v447 = vsel %vm415, -1.0, 0.0
          %v448 = vsel %vm416, -1.0, 0.0
          %v449 = vsel %vm417, -1.0, 0.0
          %v450 = vsel %vm418, -1.0, 0.0
          %v451 = vsel %vm419, -1.0, 0.0
          %v452 = vsel %vm420, -1.0, 0.0
          %v453 = vsel %vm421, -1.0, 0.0
          %v454 = vsel %vm422, -1.0, 0.0
          %v455 = vsel %vm423, -1.0, 0.0
          %v456 = vsel %vm424, -1.0, 0.0
          %v457 = vsel %vm425, -1.0, 0.0
          %v458 = vsel %vm426, -1.0, 0.0
          %v459 = vsel %vm427, -1.0, 0.0
          %v460 = vsel %vm428, -1.0, 0.0
          %v461 = vsel %vm429, -1.0, 0.0
          %v462 = vsel %vm430, -1.0, 0.0
          %v463 = vsel %vm431, -1.0, 0.0
          %v464 = vsel %vm432, -1.0, 0.0
          %v465 = vsel %vm433, -1.0, 0.0
          %v466 = vsel %vm434, -1.0, 0.0
          %v467 = vsel %vm435, -1.0, 0.0
          %v468 = vsel %vm436, -1.0, 0.0
          %v469 = vsel %vm437, -1.0, 0.0
          %v470 = vsel %vm438, -1.0, 0.0
          %v471 = vsel %vm439, -1.0, 0.0
          %v472 = vsel %vm440, -1.0, 0.0
          %v473 = vsel %vm441, -1.0, 0.0
          %v474 = vsel %vm442, -1.0, 0.0
          %v475 = vsel %vm443, -1.0, 0.0
          %v476 = vsel %vm444, -1.0, 0.0
          %v477 = vsel %vm445, -1.0, 0.0
          %v478 = vsel %vm446, -1.0, 0.0
          %v479 = vadd.f32 %v319, %v447
          %v480 = vadd.f32 %v320, %v448
          %v481 = vadd.f32 %v321, %v449
          %v482 = vadd.f32 %v322, %v450
          %v483 = vadd.f32 %v323, %v451
          %v484 = vadd.f32 %v324, %v452
          %v485 = vadd.f32 %v325, %v453
          %v486 = vadd.f32 %v326, %v454
          %v487 = vadd.f32 %v327, %v455
          %v488 = vadd.f32 %v328, %v456
          %v489 = vadd.f32 %v329, %v457
          %v490 = vadd.f32 %v330, %v458
          %v491 = vadd.f32 %v331, %v459
          %v492 = vadd.f32 %v332, %v460
          %v493 = vadd.f32 %v333, %v461
          %v494 = vadd.f32 %v334, %v462
          %v495 = vadd.f32 %v335, %v463
          %v496 = vadd.f32 %v336, %v464
          %v497 = vadd.f32 %v337, %v465
          %v498 = vadd.f32 %v338, %v466
          %v499 = vadd.f32 %v339, %v467
          %v500 = vadd.f32 %v340, %v468
          %v501 = vadd.f32 %v341, %v469
          %v502 = vadd.f32 %v342, %v470
          %v503 = vadd.f32 %v343, %v471
          %v504 = vadd.f32 %v344, %v472
          %v505 = vadd.f32 %v345, %v473
          %v506 = vadd.f32 %v346, %v474
          %v507 = vadd.f32 %v347, %v475
          %v508 = vadd.f32 %v348, %v476
          %v509 = vadd.f32 %v349, %v477
          %v510 = vadd.f32 %v350, %v478
          %vm511 = vcmp.ge.f32.partialorder %v383, 16.0
          %vm512 = vcmp.ge.f32.partialorder %v384, 16.0
          %vm513 = vcmp.ge.f32.partialorder %v385, 16.0
          %vm514 = vcmp.ge.f32.partialorder %v386, 16.0
          %vm515 = vcmp.ge.f32.partialorder %v387, 16.0
          %vm516 = vcmp.ge.f32.partialorder %v388, 16.0
          %vm517 = vcmp.ge.f32.partialorder %v389, 16.0
          %vm518 = vcmp.ge.f32.partialorder %v390, 16.0
          %vm519 = vcmp.ge.f32.partialorder %v391, 16.0
          %vm520 = vcmp.ge.f32.partialorder %v392, 16.0
          %vm521 = vcmp.ge.f32.partialorder %v393, 16.0
          %vm522 = vcmp.ge.f32.partialorder %v394, 16.0
          %vm523 = vcmp.ge.f32.partialorder %v395, 16.0
          %vm524 = vcmp.ge.f32.partialorder %v396, 16.0
          %vm525 = vcmp.ge.f32.partialorder %v397, 16.0
          %vm526 = vcmp.ge.f32.partialorder %v398, 16.0
          %vm527 = vcmp.ge.f32.partialorder %v399, 16.0
          %vm528 = vcmp.ge.f32.partialorder %v400, 16.0
          %vm529 = vcmp.ge.f32.partialorder %v401, 16.0
          %vm530 = vcmp.ge.f32.partialorder %v402, 16.0
          %vm531 = vcmp.ge.f32.partialorder %v403, 16.0
          %vm532 = vcmp.ge.f32.partialorder %v404, 16.0
          %vm533 = vcmp.ge.f32.partialorder %v405, 16.0
          %vm534 = vcmp.ge.f32.partialorder %v406, 16.0
          %vm535 = vcmp.ge.f32.partialorder %v407, 16.0
          %vm536 = vcmp.ge.f32.partialorder %v408, 16.0
          %vm537 = vcmp.ge.f32.partialorder %v409, 16.0
          %vm538 = vcmp.ge.f32.partialorder %v410, 16.0
          %vm539 = vcmp.ge.f32.partialorder %v411, 16.0
          %vm540 = vcmp.ge.f32.partialorder %v412, 16.0
          %vm541 = vcmp.ge.f32.partialorder %v413, 16.0
          %vm542 = vcmp.ge.f32.partialorder %v414, 16.0
          %v543 = vsel %vm511, 1.0, 0.0
          %v544 = vsel %vm512, 1.0, 0.0
          %v545 = vsel %vm513, 1.0, 0.0
          %v546 = vsel %vm514, 1.0, 0.0
          %v547 = vsel %vm515, 1.0, 0.0
          %v548 = vsel %vm516, 1.0, 0.0
          %v549 = vsel %vm517, 1.0, 0.0
          %v550 = vsel %vm518, 1.0, 0.0
          %v551 = vsel %vm519, 1.0, 0.0
          %v552 = vsel %vm520, 1.0, 0.0
          %v553 = vsel %vm521, 1.0, 0.0
          %v554 = vsel %vm522, 1.0, 0.0
          %v555 = vsel %vm523, 1.0, 0.0
          %v556 = vsel %vm524, 1.0, 0.0
          %v557 = vsel %vm525, 1.0, 0.0
          %v558 = vsel %vm526, 1.0, 0.0
          %v559 = vsel %vm527, 1.0, 0.0
          %v560 = vsel %vm528, 1.0, 0.0
          %v561 = vsel %vm529, 1.0, 0.0
          %v562 = vsel %vm530, 1.0, 0.0
          %v563 = vsel %vm531, 1.0, 0.0
          %v564 = vsel %vm532, 1.0, 0.0
          %v565 = vsel %vm533, 1.0, 0.0
          %v566 = vsel %vm534, 1.0, 0.0
          %v567 = vsel %vm535, 1.0, 0.0
          %v568 = vsel %vm536, 1.0, 0.0
          %v569 = vsel %vm537, 1.0, 0.0
          %v570 = vsel %vm538, 1.0, 0.0
          %v571 = vsel %vm539, 1.0, 0.0
          %v572 = vsel %vm540, 1.0, 0.0
          %v573 = vsel %vm541, 1.0, 0.0
          %v574 = vsel %vm542, 1.0, 0.0
          %v575 = vadd.f32 %v479, %v543
          %v576 = vadd.f32 %v480, %v544
          %v577 = vadd.f32 %v481, %v545
          %v578 = vadd.f32 %v482, %v546
          %v579 = vadd.f32 %v483, %v547
          %v580 = vadd.f32 %v484, %v548
          %v581 = vadd.f32 %v485, %v549
          %v582 = vadd.f32 %v486, %v550
          %v583 = vadd.f32 %v487, %v551
          %v584 = vadd.f32 %v488, %v552
          %v585 = vadd.f32 %v489, %v553
          %v586 = vadd.f32 %v490, %v554
          %v587 = vadd.f32 %v491, %v555
          %v588 = vadd.f32 %v492, %v556
          %v589 = vadd.f32 %v493, %v557
          %v590 = vadd.f32 %v494, %v558
          %v591 = vadd.f32 %v495, %v559
          %v592 = vadd.f32 %v496, %v560
          %v593 = vadd.f32 %v497, %v561
          %v594 = vadd.f32 %v498, %v562
          %v595 = vadd.f32 %v499, %v563
          %v596 = vadd.f32 %v500, %v564
          %v597 = vadd.f32 %v501, %v565
          %v598 = vadd.f32 %v502, %v566
          %v599 = vadd.f32 %v503, %v567
          %v600 = vadd.f32 %v504, %v568
          %v601 = vadd.f32 %v505, %v569
          %v602 = vadd.f32 %v506, %v570
          %v603 = vadd.f32 %v507, %v571
          %v604 = vadd.f32 %v508, %v572
          %v605 = vadd.f32 %v509, %v573
          %v606 = vadd.f32 %v510, %v574
          %v607 = vmul.f32 %v575, 16.0
          %v608 = vmul.f32 %v576, 16.0
          %v609 = vmul.f32 %v577, 16.0
          %v610 = vmul.f32 %v578, 16.0
          %v611 = vmul.f32 %v579, 16.0
          %v612 = vmul.f32 %v580, 16.0
          %v613 = vmul.f32 %v581, 16.0
          %v614 = vmul.f32 %v582, 16.0
          %v615 = vmul.f32 %v583, 16.0
          %v616 = vmul.f32 %v584, 16.0
          %v617 = vmul.f32 %v585, 16.0
          %v618 = vmul.f32 %v586, 16.0
          %v619 = vmul.f32 %v587, 16.0
          %v620 = vmul.f32 %v588, 16.0
          %v621 = vmul.f32 %v589, 16.0
          %v622 = vmul.f32 %v590, 16.0
          %v623 = vmul.f32 %v591, 16.0
          %v624 = vmul.f32 %v592, 16.0
          %v625 = vmul.f32 %v593, 16.0
          %v626 = vmul.f32 %v594, 16.0
          %v627 = vmul.f32 %v595, 16.0
          %v628 = vmul.f32 %v596, 16.0
          %v629 = vmul.f32 %v597, 16.0
          %v630 = vmul.f32 %v598, 16.0
          %v631 = vmul.f32 %v599, 16.0
          %v632 = vmul.f32 %v600, 16.0
          %v633 = vmul.f32 %v601, 16.0
          %v634 = vmul.f32 %v602, 16.0
          %v635 = vmul.f32 %v603, 16.0
          %v636 = vmul.f32 %v604, 16.0
          %v637 = vmul.f32 %v605, 16.0
          %v638 = vmul.f32 %v606, 16.0
          %v639 = vsub.f32 %v223, %v607
          %v640 = vsub.f32 %v224, %v608
          %v641 = vsub.f32 %v225, %v609
          %v642 = vsub.f32 %v226, %v610
          %v643 = vsub.f32 %v227, %v611
          %v644 = vsub.f32 %v228, %v612
          %v645 = vsub.f32 %v229, %v613
          %v646 = vsub.f32 %v230, %v614
          %v647 = vsub.f32 %v231, %v615
          %v648 = vsub.f32 %v232, %v616
          %v649 = vsub.f32 %v233, %v617
          %v650 = vsub.f32 %v234, %v618
          %v651 = vsub.f32 %v235, %v619
          %v652 = vsub.f32 %v236, %v620
          %v653 = vsub.f32 %v237, %v621
          %v654 = vsub.f32 %v238, %v622
          %v655 = vsub.f32 %v239, %v623
          %v656 = vsub.f32 %v240, %v624
          %v657 = vsub.f32 %v241, %v625
          %v658 = vsub.f32 %v242, %v626
          %v659 = vsub.f32 %v243, %v627
          %v660 = vsub.f32 %v244, %v628
          %v661 = vsub.f32 %v245, %v629
          %v662 = vsub.f32 %v246, %v630
          %v663 = vsub.f32 %v247, %v631
          %v664 = vsub.f32 %v248, %v632
          %v665 = vsub.f32 %v249, %v633
          %v666 = vsub.f32 %v250, %v634
          %v667 = vsub.f32 %v251, %v635
          %v668 = vsub.f32 %v252, %v636
          %v669 = vsub.f32 %v253, %v637
          %v670 = vsub.f32 %v254, %v638
          %v671 = vmul.f32 %v639, 2.0
          %v672 = vmul.f32 %v640, 2.0
          %v673 = vmul.f32 %v641, 2.0
          %v674 = vmul.f32 %v642, 2.0
          %v675 = vmul.f32 %v643, 2.0
          %v676 = vmul.f32 %v644, 2.0
          %v677 = vmul.f32 %v645, 2.0
          %v678 = vmul.f32 %v646, 2.0
          %v679 = vmul.f32 %v647, 2.0
          %v680 = vmul.f32 %v648, 2.0
          %v681 = vmul.f32 %v649, 2.0
          %v682 = vmul.f32 %v650, 2.0
          %v683 = vmul.f32 %v651, 2.0
          %v684 = vmul.f32 %v652, 2.0
          %v685 = vmul.f32 %v653, 2.0
          %v686 = vmul.f32 %v654, 2.0
          %v687 = vmul.f32 %v655, 2.0
          %v688 = vmul.f32 %v656, 2.0
          %v689 = vmul.f32 %v657, 2.0
          %v690 = vmul.f32 %v658, 2.0
          %v691 = vmul.f32 %v659, 2.0
          %v692 = vmul.f32 %v660, 2.0
          %v693 = vmul.f32 %v661, 2.0
          %v694 = vmul.f32 %v662, 2.0
          %v695 = vmul.f32 %v663, 2.0
          %v696 = vmul.f32 %v664, 2.0
          %v697 = vmul.f32 %v665, 2.0
          %v698 = vmul.f32 %v666, 2.0
          %v699 = vmul.f32 %v667, 2.0
          %v700 = vmul.f32 %v668, 2.0
          %v701 = vmul.f32 %v669, 2.0
          %v702 = vmul.f32 %v670, 2.0
          %v703 = vadd.f32 %v671, 1.0
          %v704 = vadd.f32 %v672, 1.0
          %v705 = vadd.f32 %v673, 1.0
          %v706 = vadd.f32 %v674, 1.0
          %v707 = vadd.f32 %v675, 1.0
          %v708 = vadd.f32 %v676, 1.0
          %v709 = vadd.f32 %v677, 1.0
          %v710 = vadd.f32 %v678, 1.0
          %v711 = vadd.f32 %v679, 1.0
          %v712 = vadd.f32 %v680, 1.0
          %v713 = vadd.f32 %v681, 1.0
          %v714 = vadd.f32 %v682, 1.0
          %v715 = vadd.f32 %v683, 1.0
          %v716 = vadd.f32 %v684, 1.0
          %v717 = vadd.f32 %v685, 1.0
          %v718 = vadd.f32 %v686, 1.0
          %v719 = vadd.f32 %v687, 1.0
          %v720 = vadd.f32 %v688, 1.0
          %v721 = vadd.f32 %v689, 1.0
          %v722 = vadd.f32 %v690, 1.0
          %v723 = vadd.f32 %v691, 1.0
          %v724 = vadd.f32 %v692, 1.0
          %v725 = vadd.f32 %v693, 1.0
          %v726 = vadd.f32 %v694, 1.0
          %v727 = vadd.f32 %v695, 1.0
          %v728 = vadd.f32 %v696, 1.0
          %v729 = vadd.f32 %v697, 1.0
          %v730 = vadd.f32 %v698, 1.0
          %v731 = vadd.f32 %v699, 1.0
          %v732 = vadd.f32 %v700, 1.0
          %v733 = vadd.f32 %v701, 1.0
          %v734 = vadd.f32 %v702, 1.0
          %v735 = vmul.f32 %v703, 0.0625
          %v736 = vmul.f32 %v704, 0.0625
          %v737 = vmul.f32 %v705, 0.0625
          %v738 = vmul.f32 %v706, 0.0625
          %v739 = vmul.f32 %v707, 0.0625
          %v740 = vmul.f32 %v708, 0.0625
          %v741 = vmul.f32 %v709, 0.0625
          %v742 = vmul.f32 %v710, 0.0625
          %v743 = vmul.f32 %v711, 0.0625
          %v744 = vmul.f32 %v712, 0.0625
          %v745 = vmul.f32 %v713, 0.0625
          %v746 = vmul.f32 %v714, 0.0625
          %v747 = vmul.f32 %v715, 0.0625
          %v748 = vmul.f32 %v716, 0.0625
          %v749 = vmul.f32 %v717, 0.0625
          %v750 = vmul.f32 %v718, 0.0625
          %v751 = vmul.f32 %v719, 0.0625
          %v752 = vmul.f32 %v720, 0.0625
          %v753 = vmul.f32 %v721, 0.0625
          %v754 = vmul.f32 %v722, 0.0625
          %v755 = vmul.f32 %v723, 0.0625
          %v756 = vmul.f32 %v724, 0.0625
          %v757 = vmul.f32 %v725, 0.0625
          %v758 = vmul.f32 %v726, 0.0625
          %v759 = vmul.f32 %v727, 0.0625
          %v760 = vmul.f32 %v728, 0.0625
          %v761 = vmul.f32 %v729, 0.0625
          %v762 = vmul.f32 %v730, 0.0625
          %v763 = vmul.f32 %v731, 0.0625
          %v764 = vmul.f32 %v732, 0.0625
          %v765 = vmul.f32 %v733, 0.0625
          %v766 = vmul.f32 %v734, 0.0625
          %v767 = vsub.f32 1.0, %v735
          %v768 = vsub.f32 1.0, %v736
          %v769 = vsub.f32 1.0, %v737
          %v770 = vsub.f32 1.0, %v738
          %v771 = vsub.f32 1.0, %v739
          %v772 = vsub.f32 1.0, %v740
          %v773 = vsub.f32 1.0, %v741
          %v774 = vsub.f32 1.0, %v742
          %v775 = vsub.f32 1.0, %v743
          %v776 = vsub.f32 1.0, %v744
          %v777 = vsub.f32 1.0, %v745
          %v778 = vsub.f32 1.0, %v746
          %v779 = vsub.f32 1.0, %v747
          %v780 = vsub.f32 1.0, %v748
          %v781 = vsub.f32 1.0, %v749
          %v782 = vsub.f32 1.0, %v750
          %v783 = vsub.f32 1.0, %v751
          %v784 = vsub.f32 1.0, %v752
          %v785 = vsub.f32 1.0, %v753
          %v786 = vsub.f32 1.0, %v754
          %v787 = vsub.f32 1.0, %v755
          %v788 = vsub.f32 1.0, %v756
          %v789 = vsub.f32 1.0, %v757
          %v790 = vsub.f32 1.0, %v758
          %v791 = vsub.f32 1.0, %v759
          %v792 = vsub.f32 1.0, %v760
          %v793 = vsub.f32 1.0, %v761
          %v794 = vsub.f32 1.0, %v762
          %v795 = vsub.f32 1.0, %v763
          %v796 = vsub.f32 1.0, %v764
          %v797 = vsub.f32 1.0, %v765
          %v798 = vsub.f32 1.0, %v766
          %799 = vst [vmem:[#allocation3] sm:$0xff] %v767
          %800 = vst [vmem:[#allocation3 + $0x8] sm:$0xff] %v768
          %801 = vst [vmem:[#allocation3 + $0x10] sm:$0xff] %v769
          %802 = vst [vmem:[#allocation3 + $0x18] sm:$0xff] %v770
          %803 = vst [vmem:[#allocation3 + $0x20] sm:$0xff] %v771
          %804 = vst [vmem:[#allocation3 + $0x28] sm:$0xff] %v772
          %805 = vst [vmem:[#allocation3 + $0x30] sm:$0xff] %v773
          %806 = vst [vmem:[#allocation3 + $0x38] sm:$0xff] %v774
          %807 = vst [vmem:[#allocation3 + $0x40] sm:$0xff] %v775
          %808 = vst [vmem:[#allocation3 + $0x48] sm:$0xff] %v776
          %809 = vst [vmem:[#allocation3 + $0x50] sm:$0xff] %v777
          %810 = vst [vmem:[#allocation3 + $0x58] sm:$0xff] %v778
          %811 = vst [vmem:[#allocation3 + $0x60] sm:$0xff] %v779
          %812 = vst [vmem:[#allocation3 + $0x68] sm:$0xff] %v780
          %813 = vst [vmem:[#allocation3 + $0x70] sm:$0xff] %v781
          %814 = vst [vmem:[#allocation3 + $0x78] sm:$0xff] %v782
          %815 = vst [vmem:[#allocation3 + $0x80] sm:$0xff] %v783
          %816 = vst [vmem:[#allocation3 + $0x88] sm:$0xff] %v784
          %817 = vst [vmem:[#allocation3 + $0x90] sm:$0xff] %v785
          %818 = vst [vmem:[#allocation3 + $0x98] sm:$0xff] %v786
          %819 = vst [vmem:[#allocation3 + $0xa0] sm:$0xff] %v787
          %820 = vst [vmem:[#allocation3 + $0xa8] sm:$0xff] %v788
          %821 = vst [vmem:[#allocation3 + $0xb0] sm:$0xff] %v789
          %822 = vst [vmem:[#allocation3 + $0xb8] sm:$0xff] %v790
          %823 = vst [vmem:[#allocation3 + $0xc0] sm:$0xff] %v791
          %824 = vst [vmem:[#allocation3 + $0xc8] sm:$0xff] %v792
          %825 = vst [vmem:[#allocation3 + $0xd0] sm:$0xff] %v793
          %826 = vst [vmem:[#allocation3 + $0xd8] sm:$0xff] %v794
          %827 = vst [vmem:[#allocation3 + $0xe0] sm:$0xff] %v795
          %828 = vst [vmem:[#allocation3 + $0xe8] sm:$0xff] %v796
          %829 = vst [vmem:[#allocation3 + $0xf0] sm:$0xff] %v797
          %830 = vst [vmem:[#allocation3 + $0xf8] sm:$0xff] %v798
          %v831 = vmul.f32 %v575, 2.0
          %v832 = vmul.f32 %v576, 2.0
          %v833 = vmul.f32 %v577, 2.0
          %v834 = vmul.f32 %v578, 2.0
          %v835 = vmul.f32 %v579, 2.0
          %v836 = vmul.f32 %v580, 2.0
          %v837 = vmul.f32 %v581, 2.0
          %v838 = vmul.f32 %v582, 2.0
          %v839 = vmul.f32 %v583, 2.0
          %v840 = vmul.f32 %v584, 2.0
          %v841 = vmul.f32 %v585, 2.0
          %v842 = vmul.f32 %v586, 2.0
          %v843 = vmul.f32 %v587, 2.0
          %v844 = vmul.f32 %v588, 2.0
          %v845 = vmul.f32 %v589, 2.0
          %v846 = vmul.f32 %v590, 2.0
          %v847 = vmul.f32 %v591, 2.0
          %v848 = vmul.f32 %v592, 2.0
          %v849 = vmul.f32 %v593, 2.0
          %v850 = vmul.f32 %v594, 2.0
          %v851 = vmul.f32 %v595, 2.0
          %v852 = vmul.f32 %v596, 2.0
          %v853 = vmul.f32 %v597, 2.0
          %v854 = vmul.f32 %v598, 2.0
          %v855 = vmul.f32 %v599, 2.0
          %v856 = vmul.f32 %v600, 2.0
          %v857 = vmul.f32 %v601, 2.0
          %v858 = vmul.f32 %v602, 2.0
          %v859 = vmul.f32 %v603, 2.0
          %v860 = vmul.f32 %v604, 2.0
          %v861 = vmul.f32 %v605, 2.0
          %v862 = vmul.f32 %v606, 2.0
          %v863 = vadd.f32 %v831, 1.0
          %v864 = vadd.f32 %v832, 1.0
          %v865 = vadd.f32 %v833, 1.0
          %v866 = vadd.f32 %v834, 1.0
          %v867 = vadd.f32 %v835, 1.0
          %v868 = vadd.f32 %v836, 1.0
          %v869 = vadd.f32 %v837, 1.0
          %v870 = vadd.f32 %v838, 1.0
          %v871 = vadd.f32 %v839, 1.0
          %v872 = vadd.f32 %v840, 1.0
          %v873 = vadd.f32 %v841, 1.0
          %v874 = vadd.f32 %v842, 1.0
          %v875 = vadd.f32 %v843, 1.0
          %v876 = vadd.f32 %v844, 1.0
          %v877 = vadd.f32 %v845, 1.0
          %v878 = vadd.f32 %v846, 1.0
          %v879 = vadd.f32 %v847, 1.0
          %v880 = vadd.f32 %v848, 1.0
          %v881 = vadd.f32 %v849, 1.0
          %v882 = vadd.f32 %v850, 1.0
          %v883 = vadd.f32 %v851, 1.0
          %v884 = vadd.f32 %v852, 1.0
          %v885 = vadd.f32 %v853, 1.0
          %v886 = vadd.f32 %v854, 1.0
          %v887 = vadd.f32 %v855, 1.0
          %v888 = vadd.f32 %v856, 1.0
          %v889 = vadd.f32 %v857, 1.0
          %v890 = vadd.f32 %v858, 1.0
          %v891 = vadd.f32 %v859, 1.0
          %v892 = vadd.f32 %v860, 1.0
          %v893 = vadd.f32 %v861, 1.0
          %v894 = vadd.f32 %v862, 1.0
          %v895 = vmul.f32 %v863, 0.0625
          %v896 = vmul.f32 %v864, 0.0625
          %v897 = vmul.f32 %v865, 0.0625
          %v898 = vmul.f32 %v866, 0.0625
          %v899 = vmul.f32 %v867, 0.0625
          %v900 = vmul.f32 %v868, 0.0625
          %v901 = vmul.f32 %v869, 0.0625
          %v902 = vmul.f32 %v870, 0.0625
          %v903 = vmul.f32 %v871, 0.0625
          %v904 = vmul.f32 %v872, 0.0625
          %v905 = vmul.f32 %v873, 0.0625
          %v906 = vmul.f32 %v874, 0.0625
          %v907 = vmul.f32 %v875, 0.0625
          %v908 = vmul.f32 %v876, 0.0625
          %v909 = vmul.f32 %v877, 0.0625
          %v910 = vmul.f32 %v878, 0.0625
          %v911 = vmul.f32 %v879, 0.0625
          %v912 = vmul.f32 %v880, 0.0625
          %v913 = vmul.f32 %v881, 0.0625
          %v914 = vmul.f32 %v882, 0.0625
          %v915 = vmul.f32 %v883, 0.0625
          %v916 = vmul.f32 %v884, 0.0625
          %v917 = vmul.f32 %v885, 0.0625
          %v918 = vmul.f32 %v886, 0.0625
          %v919 = vmul.f32 %v887, 0.0625
          %v920 = vmul.f32 %v888, 0.0625
          %v921 = vmul.f32 %v889, 0.0625
          %v922 = vmul.f32 %v890, 0.0625
          %v923 = vmul.f32 %v891, 0.0625
          %v924 = vmul.f32 %v892, 0.0625
          %v925 = vmul.f32 %v893, 0.0625
          %v926 = vmul.f32 %v894, 0.0625
          %v927 = vsub.f32 1.0, %v895
          %v928 = vsub.f32 1.0, %v896
          %v929 = vsub.f32 1.0, %v897
          %v930 = vsub.f32 1.0, %v898
          %v931 = vsub.f32 1.0, %v899
          %v932 = vsub.f32 1.0, %v900
          %v933 = vsub.f32 1.0, %v901
          %v934 = vsub.f32 1.0, %v902
          %v935 = vsub.f32 1.0, %v903
          %v936 = vsub.f32 1.0, %v904
          %v937 = vsub.f32 1.0, %v905
          %v938 = vsub.f32 1.0, %v906
          %v939 = vsub.f32 1.0, %v907
          %v940 = vsub.f32 1.0, %v908
          %v941 = vsub.f32 1.0, %v909
          %v942 = vsub.f32 1.0, %v910
          %v943 = vsub.f32 1.0, %v911
          %v944 = vsub.f32 1.0, %v912
          %v945 = vsub.f32 1.0, %v913
          %v946 = vsub.f32 1.0, %v914
          %v947 = vsub.f32 1.0, %v915
          %v948 = vsub.f32 1.0, %v916
          %v949 = vsub.f32 1.0, %v917
          %v950 = vsub.f32 1.0, %v918
          %v951 = vsub.f32 1.0, %v919
          %v952 = vsub.f32 1.0, %v920
          %v953 = vsub.f32 1.0, %v921
          %v954 = vsub.f32 1.0, %v922
          %v955 = vsub.f32 1.0, %v923
          %v956 = vsub.f32 1.0, %v924
          %v957 = vsub.f32 1.0, %v925
          %v958 = vsub.f32 1.0, %v926
          %959 = vst [vmem:[#allocation4] sm:$0xff] %v927
          %960 = vst [vmem:[#allocation4 + $0x8] sm:$0xff] %v928
          %961 = vst [vmem:[#allocation4 + $0x10] sm:$0xff] %v929
          %962 = vst [vmem:[#allocation4 + $0x18] sm:$0xff] %v930
          %963 = vst [vmem:[#allocation4 + $0x20] sm:$0xff] %v931
          %964 = vst [vmem:[#allocation4 + $0x28] sm:$0xff] %v932
          %965 = vst [vmem:[#allocation4 + $0x30] sm:$0xff] %v933
          %966 = vst [vmem:[#allocation4 + $0x38] sm:$0xff] %v934
          %967 = vst [vmem:[#allocation4 + $0x40] sm:$0xff] %v935
          %968 = vst [vmem:[#allocation4 + $0x48] sm:$0xff] %v936
          %969 = vst [vmem:[#allocation4 + $0x50] sm:$0xff] %v937
          %970 = vst [vmem:[#allocation4 + $0x58] sm:$0xff] %v938
          %971 = vst [vmem:[#allocation4 + $0x60] sm:$0xff] %v939
          %972 = vst [vmem:[#allocation4 + $0x68] sm:$0xff] %v940
          %973 = vst [vmem:[#allocation4 + $0x70] sm:$0xff] %v941
          %974 = vst [vmem:[#allocation4 + $0x78] sm:$0xff] %v942
          %975 = vst [vmem:[#allocation4 + $0x80] sm:$0xff] %v943
          %976 = vst [vmem:[#allocation4 + $0x88] sm:$0xff] %v944
          %977 = vst [vmem:[#allocation4 + $0x90] sm:$0xff] %v945
          %978 = vst [vmem:[#allocation4 + $0x98] sm:$0xff] %v946
          %979 = vst [vmem:[#allocation4 + $0xa0] sm:$0xff] %v947
          %980 = vst [vmem:[#allocation4 + $0xa8] sm:$0xff] %v948
          %981 = vst [vmem:[#allocation4 + $0xb0] sm:$0xff] %v949
          %982 = vst [vmem:[#allocation4 + $0xb8] sm:$0xff] %v950
          %983 = vst [vmem:[#allocation4 + $0xc0] sm:$0xff] %v951
          %984 = vst [vmem:[#allocation4 + $0xc8] sm:$0xff] %v952
          %985 = vst [vmem:[#allocation4 + $0xd0] sm:$0xff] %v953
          %986 = vst [vmem:[#allocation4 + $0xd8] sm:$0xff] %v954
          %987 = vst [vmem:[#allocation4 + $0xe0] sm:$0xff] %v955
          %988 = vst [vmem:[#allocation4 + $0xe8] sm:$0xff] %v956
          %989 = vst [vmem:[#allocation4 + $0xf0] sm:$0xff] %v957
          %990 = vst [vmem:[#allocation4 + $0xf8] sm:$0xff] %v958
          %991 = vst [vmem:[#allocation2] sm:$0xff] 1e+10
          %992 = vst [vmem:[#allocation2 + $0x8] sm:$0xff] 1e+10
          %993 = vst [vmem:[#allocation2 + $0x10] sm:$0xff] 1e+10
          %994 = vst [vmem:[#allocation2 + $0x18] sm:$0xff] 1e+10
          %995 = vst [vmem:[#allocation2 + $0x20] sm:$0xff] 1e+10
          %996 = vst [vmem:[#allocation2 + $0x28] sm:$0xff] 1e+10
          %997 = vst [vmem:[#allocation2 + $0x30] sm:$0xff] 1e+10
          %998 = vst [vmem:[#allocation2 + $0x38] sm:$0xff] 1e+10
          %999 = vst [vmem:[#allocation2 + $0x40] sm:$0xff] 1e+10
          %1000 = vst [vmem:[#allocation2 + $0x48] sm:$0xff] 1e+10
          %1001 = vst [vmem:[#allocation2 + $0x50] sm:$0xff] 1e+10
          %1002 = vst [vmem:[#allocation2 + $0x58] sm:$0xff] 1e+10
          %1003 = vst [vmem:[#allocation2 + $0x60] sm:$0xff] 1e+10
          %1004 = vst [vmem:[#allocation2 + $0x68] sm:$0xff] 1e+10
          %1005 = vst [vmem:[#allocation2 + $0x70] sm:$0xff] 1e+10
          %1006 = vst [vmem:[#allocation2 + $0x78] sm:$0xff] 1e+10
          %1007 = vst [vmem:[#allocation2 + $0x80] sm:$0xff] 1e+10
          %1008 = vst [vmem:[#allocation2 + $0x88] sm:$0xff] 1e+10
          %1009 = vst [vmem:[#allocation2 + $0x90] sm:$0xff] 1e+10
          %1010 = vst [vmem:[#allocation2 + $0x98] sm:$0xff] 1e+10
          %1011 = vst [vmem:[#allocation2 + $0xa0] sm:$0xff] 1e+10
          %1012 = vst [vmem:[#allocation2 + $0xa8] sm:$0xff] 1e+10
          %1013 = vst [vmem:[#allocation2 + $0xb0] sm:$0xff] 1e+10
          %1014 = vst [vmem:[#allocation2 + $0xb8] sm:$0xff] 1e+10
          %1015 = vst [vmem:[#allocation2 + $0xc0] sm:$0xff] 1e+10
          %1016 = vst [vmem:[#allocation2 + $0xc8] sm:$0xff] 1e+10
          %1017 = vst [vmem:[#allocation2 + $0xd0] sm:$0xff] 1e+10
          %1018 = vst [vmem:[#allocation2 + $0xd8] sm:$0xff] 1e+10
          %1019 = vst [vmem:[#allocation2 + $0xe0] sm:$0xff] 1e+10
          %1020 = vst [vmem:[#allocation2 + $0xe8] sm:$0xff] 1e+10
          %1021 = vst [vmem:[#allocation2 + $0xf0] sm:$0xff] 1e+10
          %1022 = vst [vmem:[#allocation2 + $0xf8] sm:$0xff] 1e+10
        $region28: #{tpu_custom_call.1} parent=23 // pred_fallthru
          _
        %v1023 = vld [vmem:[#allocation3] sm:$0xff]
        %v1024 = vld [vmem:[#allocation3 + $0x8] sm:$0xff]
        %v1025 = vld [vmem:[#allocation3 + $0x10] sm:$0xff]
        %v1026 = vld [vmem:[#allocation3 + $0x18] sm:$0xff]
        %v1027 = vld [vmem:[#allocation3 + $0x20] sm:$0xff]
        %v1028 = vld [vmem:[#allocation3 + $0x28] sm:$0xff]
        %v1029 = vld [vmem:[#allocation3 + $0x30] sm:$0xff]
        %v1030 = vld [vmem:[#allocation3 + $0x38] sm:$0xff]
        %v1031 = vld [vmem:[#allocation3 + $0x40] sm:$0xff]
        %v1032 = vld [vmem:[#allocation3 + $0x48] sm:$0xff]
        %v1033 = vld [vmem:[#allocation3 + $0x50] sm:$0xff]
        %v1034 = vld [vmem:[#allocation3 + $0x58] sm:$0xff]
        %v1035 = vld [vmem:[#allocation3 + $0x60] sm:$0xff]
        %v1036 = vld [vmem:[#allocation3 + $0x68] sm:$0xff]
        %v1037 = vld [vmem:[#allocation3 + $0x70] sm:$0xff]
        %v1038 = vld [vmem:[#allocation3 + $0x78] sm:$0xff]
        %v1039 = vld [vmem:[#allocation3 + $0x80] sm:$0xff]
        %v1040 = vld [vmem:[#allocation3 + $0x88] sm:$0xff]
        %v1041 = vld [vmem:[#allocation3 + $0x90] sm:$0xff]
        %v1042 = vld [vmem:[#allocation3 + $0x98] sm:$0xff]
        %v1043 = vld [vmem:[#allocation3 + $0xa0] sm:$0xff]
        %v1044 = vld [vmem:[#allocation3 + $0xa8] sm:$0xff]
        %v1045 = vld [vmem:[#allocation3 + $0xb0] sm:$0xff]
        %v1046 = vld [vmem:[#allocation3 + $0xb8] sm:$0xff]
        %v1047 = vld [vmem:[#allocation3 + $0xc0] sm:$0xff]
        %v1048 = vld [vmem:[#allocation3 + $0xc8] sm:$0xff]
        %v1049 = vld [vmem:[#allocation3 + $0xd0] sm:$0xff]
        %v1050 = vld [vmem:[#allocation3 + $0xd8] sm:$0xff]
        %v1051 = vld [vmem:[#allocation3 + $0xe0] sm:$0xff]
        %v1052 = vld [vmem:[#allocation3 + $0xe8] sm:$0xff]
        %v1053 = vld [vmem:[#allocation3 + $0xf0] sm:$0xff]
        %v1054 = vld [vmem:[#allocation3 + $0xf8] sm:$0xff]
        %v1055 = vld [vmem:[#allocation4] sm:$0xff]
        %v1056 = vld [vmem:[#allocation4 + $0x8] sm:$0xff]
        %v1057 = vld [vmem:[#allocation4 + $0x10] sm:$0xff]
        %v1058 = vld [vmem:[#allocation4 + $0x18] sm:$0xff]
        %v1059 = vld [vmem:[#allocation4 + $0x20] sm:$0xff]
        %v1060 = vld [vmem:[#allocation4 + $0x28] sm:$0xff]
        %v1061 = vld [vmem:[#allocation4 + $0x30] sm:$0xff]
        %v1062 = vld [vmem:[#allocation4 + $0x38] sm:$0xff]
        %v1063 = vld [vmem:[#allocation4 + $0x40] sm:$0xff]
        %v1064 = vld [vmem:[#allocation4 + $0x48] sm:$0xff]
        %v1065 = vld [vmem:[#allocation4 + $0x50] sm:$0xff]
        %v1066 = vld [vmem:[#allocation4 + $0x58] sm:$0xff]
        %v1067 = vld [vmem:[#allocation4 + $0x60] sm:$0xff]
        %v1068 = vld [vmem:[#allocation4 + $0x68] sm:$0xff]
        %v1069 = vld [vmem:[#allocation4 + $0x70] sm:$0xff]
        %v1070 = vld [vmem:[#allocation4 + $0x78] sm:$0xff]
        %v1071 = vld [vmem:[#allocation4 + $0x80] sm:$0xff]
        %v1072 = vld [vmem:[#allocation4 + $0x88] sm:$0xff]
        %v1073 = vld [vmem:[#allocation4 + $0x90] sm:$0xff]
        %v1074 = vld [vmem:[#allocation4 + $0x98] sm:$0xff]
        %v1075 = vld [vmem:[#allocation4 + $0xa0] sm:$0xff]
        %v1076 = vld [vmem:[#allocation4 + $0xa8] sm:$0xff]
        %v1077 = vld [vmem:[#allocation4 + $0xb0] sm:$0xff]
        %v1078 = vld [vmem:[#allocation4 + $0xb8] sm:$0xff]
        %v1079 = vld [vmem:[#allocation4 + $0xc0] sm:$0xff]
        %v1080 = vld [vmem:[#allocation4 + $0xc8] sm:$0xff]
        %v1081 = vld [vmem:[#allocation4 + $0xd0] sm:$0xff]
        %v1082 = vld [vmem:[#allocation4 + $0xd8] sm:$0xff]
        %v1083 = vld [vmem:[#allocation4 + $0xe0] sm:$0xff]
        %v1084 = vld [vmem:[#allocation4 + $0xe8] sm:$0xff]
        %v1085 = vld [vmem:[#allocation4 + $0xf0] sm:$0xff]
        %v1086 = vld [vmem:[#allocation4 + $0xf8] sm:$0xff]
        %v1087 = vld [vmem:[#allocation2] sm:$0xff]
        %v1088 = vld [vmem:[#allocation2 + $0x8] sm:$0xff]
        %v1089 = vld [vmem:[#allocation2 + $0x10] sm:$0xff]
        %v1090 = vld [vmem:[#allocation2 + $0x18] sm:$0xff]
        %v1091 = vld [vmem:[#allocation2 + $0x20] sm:$0xff]
        %v1092 = vld [vmem:[#allocation2 + $0x28] sm:$0xff]
        %v1093 = vld [vmem:[#allocation2 + $0x30] sm:$0xff]
        %v1094 = vld [vmem:[#allocation2 + $0x38] sm:$0xff]
        %v1095 = vld [vmem:[#allocation2 + $0x40] sm:$0xff]
        %v1096 = vld [vmem:[#allocation2 + $0x48] sm:$0xff]
        %v1097 = vld [vmem:[#allocation2 + $0x50] sm:$0xff]
        %v1098 = vld [vmem:[#allocation2 + $0x58] sm:$0xff]
        %v1099 = vld [vmem:[#allocation2 + $0x60] sm:$0xff]
        %v1100 = vld [vmem:[#allocation2 + $0x68] sm:$0xff]
        %v1101 = vld [vmem:[#allocation2 + $0x70] sm:$0xff]
        %v1102 = vld [vmem:[#allocation2 + $0x78] sm:$0xff]
        %v1103 = vld [vmem:[#allocation2 + $0x80] sm:$0xff]
        %v1104 = vld [vmem:[#allocation2 + $0x88] sm:$0xff]
        %v1105 = vld [vmem:[#allocation2 + $0x90] sm:$0xff]
        %v1106 = vld [vmem:[#allocation2 + $0x98] sm:$0xff]
        %v1107 = vld [vmem:[#allocation2 + $0xa0] sm:$0xff]
        %v1108 = vld [vmem:[#allocation2 + $0xa8] sm:$0xff]
        %v1109 = vld [vmem:[#allocation2 + $0xb0] sm:$0xff]
        %v1110 = vld [vmem:[#allocation2 + $0xb8] sm:$0xff]
        %v1111 = vld [vmem:[#allocation2 + $0xc0] sm:$0xff]
        %v1112 = vld [vmem:[#allocation2 + $0xc8] sm:$0xff]
        %v1113 = vld [vmem:[#allocation2 + $0xd0] sm:$0xff]
        %v1114 = vld [vmem:[#allocation2 + $0xd8] sm:$0xff]
        %v1115 = vld [vmem:[#allocation2 + $0xe0] sm:$0xff]
        %v1116 = vld [vmem:[#allocation2 + $0xe8] sm:$0xff]
        %v1117 = vld [vmem:[#allocation2 + $0xf0] sm:$0xff]
        %v1118 = vld [vmem:[#allocation2 + $0xf8] sm:$0xff]
        %v1119 = vld [vmem:[%s150] sm:$0xff]
        %v1120 = vld [vmem:[%s150 + $0x8] sm:$0xff]
        %v1121 = vld [vmem:[%s150 + $0x10] sm:$0xff]
        %v1122 = vld [vmem:[%s150 + $0x18] sm:$0xff]
        %v1123 = vld [vmem:[%s150 + $0x20] sm:$0x3]
        %v1124 = vld [vmem:[%s150 + $0x28] sm:$0x3]
        %v1125 = vld [vmem:[%s150 + $0x30] sm:$0x3]
        %v1126 = vld [vmem:[%s150 + $0x38] sm:$0x3]
        %v1127 = vlaneseq
        %v1128 = vshrl.u32 %v1127, 7
        %v1129 = vsub.s32 0, %v1128
        %v1130 = vrot.slane %v1119, %v1129
        %v1131 = vmul.f32 %v1130, %v1023
        %v1132 = vmul.f32 %v1130, %v1024
        %v1133 = vmul.f32 %v1130, %v1025
        %v1134 = vmul.f32 %v1130, %v1026
        %v1135 = vmul.f32 %v1130, %v1027
        %v1136 = vmul.f32 %v1130, %v1028
        %v1137 = vmul.f32 %v1130, %v1029
        %v1138 = vmul.f32 %v1130, %v1030
        %v1139 = vmul.f32 %v1130, %v1031
        %v1140 = vmul.f32 %v1130, %v1032
        %v1141 = vmul.f32 %v1130, %v1033
        %v1142 = vmul.f32 %v1130, %v1034
        %v1143 = vmul.f32 %v1130, %v1035
        %v1144 = vmul.f32 %v1130, %v1036
        %v1145 = vmul.f32 %v1130, %v1037
        %v1146 = vmul.f32 %v1130, %v1038
        %v1147 = vmul.f32 %v1130, %v1039
        %v1148 = vmul.f32 %v1130, %v1040
        %v1149 = vmul.f32 %v1130, %v1041
        %v1150 = vmul.f32 %v1130, %v1042
        %v1151 = vmul.f32 %v1130, %v1043
        %v1152 = vmul.f32 %v1130, %v1044
        %v1153 = vmul.f32 %v1130, %v1045
        %v1154 = vmul.f32 %v1130, %v1046
        %v1155 = vmul.f32 %v1130, %v1047
        %v1156 = vmul.f32 %v1130, %v1048
        %v1157 = vmul.f32 %v1130, %v1049
        %v1158 = vmul.f32 %v1130, %v1050
        %v1159 = vmul.f32 %v1130, %v1051
        %v1160 = vmul.f32 %v1130, %v1052
        %v1161 = vmul.f32 %v1130, %v1053
        %v1162 = vmul.f32 %v1130, %v1054
        %v1163 = vlaneseq
        %v1164 = vshrl.u32 %v1163, 7
        %v1165 = vsub.s32 1, %v1164
        %v1166 = vrot.slane %v1119, %v1165
        %v1167 = vmul.f32 %v1166, %v1055
        %v1168 = vmul.f32 %v1166, %v1056
        %v1169 = vmul.f32 %v1166, %v1057
        %v1170 = vmul.f32 %v1166, %v1058
        %v1171 = vmul.f32 %v1166, %v1059
        %v1172 = vmul.f32 %v1166, %v1060
        %v1173 = vmul.f32 %v1166, %v1061
        %v1174 = vmul.f32 %v1166, %v1062
        %v1175 = vmul.f32 %v1166, %v1063
        %v1176 = vmul.f32 %v1166, %v1064
        %v1177 = vmul.f32 %v1166, %v1065
        %v1178 = vmul.f32 %v1166, %v1066
        %v1179 = vmul.f32 %v1166, %v1067
        %v1180 = vmul.f32 %v1166, %v1068
        %v1181 = vmul.f32 %v1166, %v1069
        %v1182 = vmul.f32 %v1166, %v1070
        %v1183 = vmul.f32 %v1166, %v1071
        %v1184 = vmul.f32 %v1166, %v1072
        %v1185 = vmul.f32 %v1166, %v1073
        %v1186 = vmul.f32 %v1166, %v1074
        %v1187 = vmul.f32 %v1166, %v1075
        %v1188 = vmul.f32 %v1166, %v1076
        %v1189 = vmul.f32 %v1166, %v1077
        %v1190 = vmul.f32 %v1166, %v1078
        %v1191 = vmul.f32 %v1166, %v1079
        %v1192 = vmul.f32 %v1166, %v1080
        %v1193 = vmul.f32 %v1166, %v1081
        %v1194 = vmul.f32 %v1166, %v1082
        %v1195 = vmul.f32 %v1166, %v1083
        %v1196 = vmul.f32 %v1166, %v1084
        %v1197 = vmul.f32 %v1166, %v1085
        %v1198 = vmul.f32 %v1166, %v1086
        %v1199 = vadd.f32 %v1131, %v1167
        %v1200 = vadd.f32 %v1132, %v1168
        %v1201 = vadd.f32 %v1133, %v1169
        %v1202 = vadd.f32 %v1134, %v1170
        %v1203 = vadd.f32 %v1135, %v1171
        %v1204 = vadd.f32 %v1136, %v1172
        %v1205 = vadd.f32 %v1137, %v1173
        %v1206 = vadd.f32 %v1138, %v1174
        %v1207 = vadd.f32 %v1139, %v1175
        %v1208 = vadd.f32 %v1140, %v1176
        %v1209 = vadd.f32 %v1141, %v1177
        %v1210 = vadd.f32 %v1142, %v1178
        %v1211 = vadd.f32 %v1143, %v1179
        %v1212 = vadd.f32 %v1144, %v1180
        %v1213 = vadd.f32 %v1145, %v1181
        %v1214 = vadd.f32 %v1146, %v1182
        %v1215 = vadd.f32 %v1147, %v1183
        %v1216 = vadd.f32 %v1148, %v1184
        %v1217 = vadd.f32 %v1149, %v1185
        %v1218 = vadd.f32 %v1150, %v1186
        %v1219 = vadd.f32 %v1151, %v1187
        %v1220 = vadd.f32 %v1152, %v1188
        %v1221 = vadd.f32 %v1153, %v1189
        %v1222 = vadd.f32 %v1154, %v1190
        %v1223 = vadd.f32 %v1155, %v1191
        %v1224 = vadd.f32 %v1156, %v1192
        %v1225 = vadd.f32 %v1157, %v1193
        %v1226 = vadd.f32 %v1158, %v1194
        %v1227 = vadd.f32 %v1159, %v1195
        %v1228 = vadd.f32 %v1160, %v1196
        %v1229 = vadd.f32 %v1161, %v1197
        %v1230 = vadd.f32 %v1162, %v1198
        %v1231 = vlaneseq
        %v1232 = vshrl.u32 %v1231, 7
        %v1233 = vsub.s32 2, %v1232
        %v1234 = vrot.slane %v1119, %v1233
        %v1235 = vadd.f32 %v1199, %v1234
        %v1236 = vadd.f32 %v1200, %v1234
        %v1237 = vadd.f32 %v1201, %v1234
        %v1238 = vadd.f32 %v1202, %v1234
        %v1239 = vadd.f32 %v1203, %v1234
        %v1240 = vadd.f32 %v1204, %v1234
        %v1241 = vadd.f32 %v1205, %v1234
        %v1242 = vadd.f32 %v1206, %v1234
        %v1243 = vadd.f32 %v1207, %v1234
        %v1244 = vadd.f32 %v1208, %v1234
        %v1245 = vadd.f32 %v1209, %v1234
        %v1246 = vadd.f32 %v1210, %v1234
        %v1247 = vadd.f32 %v1211, %v1234
        %v1248 = vadd.f32 %v1212, %v1234
        %v1249 = vadd.f32 %v1213, %v1234
        %v1250 = vadd.f32 %v1214, %v1234
        %v1251 = vadd.f32 %v1215, %v1234
        %v1252 = vadd.f32 %v1216, %v1234
        %v1253 = vadd.f32 %v1217, %v1234
        %v1254 = vadd.f32 %v1218, %v1234
        %v1255 = vadd.f32 %v1219, %v1234
        %v1256 = vadd.f32 %v1220, %v1234
        %v1257 = vadd.f32 %v1221, %v1234
        %v1258 = vadd.f32 %v1222, %v1234
        %v1259 = vadd.f32 %v1223, %v1234
        %v1260 = vadd.f32 %v1224, %v1234
        %v1261 = vadd.f32 %v1225, %v1234
        %v1262 = vadd.f32 %v1226, %v1234
        %v1263 = vadd.f32 %v1227, %v1234
        %v1264 = vadd.f32 %v1228, %v1234
        %v1265 = vadd.f32 %v1229, %v1234
        %v1266 = vadd.f32 %v1230, %v1234
        %v1267 = vlaneseq
        %v1268 = vshrl.u32 %v1267, 7
        %v1269 = vsub.s32 3, %v1268
        %v1270 = vrot.slane %v1119, %v1269
        %v1271 = vmul.f32 %v1270, %v1023
        %v1272 = vmul.f32 %v1270, %v1024
        %v1273 = vmul.f32 %v1270, %v1025
        %v1274 = vmul.f32 %v1270, %v1026
        %v1275 = vmul.f32 %v1270, %v1027
        %v1276 = vmul.f32 %v1270, %v1028
        %v1277 = vmul.f32 %v1270, %v1029
        %v1278 = vmul.f32 %v1270, %v1030
        %v1279 = vmul.f32 %v1270, %v1031
        %v1280 = vmul.f32 %v1270, %v1032
        %v1281 = vmul.f32 %v1270, %v1033
        %v1282 = vmul.f32 %v1270, %v1034
        %v1283 = vmul.f32 %v1270, %v1035
        %v1284 = vmul.f32 %v1270, %v1036
        %v1285 = vmul.f32 %v1270, %v1037
        %v1286 = vmul.f32 %v1270, %v1038
        %v1287 = vmul.f32 %v1270, %v1039
        %v1288 = vmul.f32 %v1270, %v1040
        %v1289 = vmul.f32 %v1270, %v1041
        %v1290 = vmul.f32 %v1270, %v1042
        %v1291 = vmul.f32 %v1270, %v1043
        %v1292 = vmul.f32 %v1270, %v1044
        %v1293 = vmul.f32 %v1270, %v1045
        %v1294 = vmul.f32 %v1270, %v1046
        %v1295 = vmul.f32 %v1270, %v1047
        %v1296 = vmul.f32 %v1270, %v1048
        %v1297 = vmul.f32 %v1270, %v1049
        %v1298 = vmul.f32 %v1270, %v1050
        %v1299 = vmul.f32 %v1270, %v1051
        %v1300 = vmul.f32 %v1270, %v1052
        %v1301 = vmul.f32 %v1270, %v1053
        %v1302 = vmul.f32 %v1270, %v1054
        %v1303 = vlaneseq
        %v1304 = vshrl.u32 %v1303, 7
        %v1305 = vsub.s32 4, %v1304
        %v1306 = vrot.slane %v1119, %v1305
        %v1307 = vmul.f32 %v1306, %v1055
        %v1308 = vmul.f32 %v1306, %v1056
        %v1309 = vmul.f32 %v1306, %v1057
        %v1310 = vmul.f32 %v1306, %v1058
        %v1311 = vmul.f32 %v1306, %v1059
        %v1312 = vmul.f32 %v1306, %v1060
        %v1313 = vmul.f32 %v1306, %v1061
        %v1314 = vmul.f32 %v1306, %v1062
        %v1315 = vmul.f32 %v1306, %v1063
        %v1316 = vmul.f32 %v1306, %v1064
        %v1317 = vmul.f32 %v1306, %v1065
        %v1318 = vmul.f32 %v1306, %v1066
        %v1319 = vmul.f32 %v1306, %v1067
        %v1320 = vmul.f32 %v1306, %v1068
        %v1321 = vmul.f32 %v1306, %v1069
        %v1322 = vmul.f32 %v1306, %v1070
        %v1323 = vmul.f32 %v1306, %v1071
        %v1324 = vmul.f32 %v1306, %v1072
        %v1325 = vmul.f32 %v1306, %v1073
        %v1326 = vmul.f32 %v1306, %v1074
        %v1327 = vmul.f32 %v1306, %v1075
        %v1328 = vmul.f32 %v1306, %v1076
        %v1329 = vmul.f32 %v1306, %v1077
        %v1330 = vmul.f32 %v1306, %v1078
        %v1331 = vmul.f32 %v1306, %v1079
        %v1332 = vmul.f32 %v1306, %v1080
        %v1333 = vmul.f32 %v1306, %v1081
        %v1334 = vmul.f32 %v1306, %v1082
        %v1335 = vmul.f32 %v1306, %v1083
        %v1336 = vmul.f32 %v1306, %v1084
        %v1337 = vmul.f32 %v1306, %v1085
        %v1338 = vmul.f32 %v1306, %v1086
        %v1339 = vadd.f32 %v1271, %v1307
        %v1340 = vadd.f32 %v1272, %v1308
        %v1341 = vadd.f32 %v1273, %v1309
        %v1342 = vadd.f32 %v1274, %v1310
        %v1343 = vadd.f32 %v1275, %v1311
        %v1344 = vadd.f32 %v1276, %v1312
        %v1345 = vadd.f32 %v1277, %v1313
        %v1346 = vadd.f32 %v1278, %v1314
        %v1347 = vadd.f32 %v1279, %v1315
        %v1348 = vadd.f32 %v1280, %v1316
        %v1349 = vadd.f32 %v1281, %v1317
        %v1350 = vadd.f32 %v1282, %v1318
        %v1351 = vadd.f32 %v1283, %v1319
        %v1352 = vadd.f32 %v1284, %v1320
        %v1353 = vadd.f32 %v1285, %v1321
        %v1354 = vadd.f32 %v1286, %v1322
        %v1355 = vadd.f32 %v1287, %v1323
        %v1356 = vadd.f32 %v1288, %v1324
        %v1357 = vadd.f32 %v1289, %v1325
        %v1358 = vadd.f32 %v1290, %v1326
        %v1359 = vadd.f32 %v1291, %v1327
        %v1360 = vadd.f32 %v1292, %v1328
        %v1361 = vadd.f32 %v1293, %v1329
        %v1362 = vadd.f32 %v1294, %v1330
        %v1363 = vadd.f32 %v1295, %v1331
        %v1364 = vadd.f32 %v1296, %v1332
        %v1365 = vadd.f32 %v1297, %v1333
        %v1366 = vadd.f32 %v1298, %v1334
        %v1367 = vadd.f32 %v1299, %v1335
        %v1368 = vadd.f32 %v1300, %v1336
        %v1369 = vadd.f32 %v1301, %v1337
        %v1370 = vadd.f32 %v1302, %v1338
        %v1371 = vlaneseq
        %v1372 = vshrl.u32 %v1371, 7
        %v1373 = vsub.s32 5, %v1372
        %v1374 = vrot.slane %v1119, %v1373
        %v1375 = vadd.f32 %v1339, %v1374
        %v1376 = vadd.f32 %v1340, %v1374
        %v1377 = vadd.f32 %v1341, %v1374
        %v1378 = vadd.f32 %v1342, %v1374
        %v1379 = vadd.f32 %v1343, %v1374
        %v1380 = vadd.f32 %v1344, %v1374
        %v1381 = vadd.f32 %v1345, %v1374
        %v1382 = vadd.f32 %v1346, %v1374
        %v1383 = vadd.f32 %v1347, %v1374
        %v1384 = vadd.f32 %v1348, %v1374
        %v1385 = vadd.f32 %v1349, %v1374
        %v1386 = vadd.f32 %v1350, %v1374
        %v1387 = vadd.f32 %v1351, %v1374
        %v1388 = vadd.f32 %v1352, %v1374
        %v1389 = vadd.f32 %v1353, %v1374
        %v1390 = vadd.f32 %v1354, %v1374
        %v1391 = vadd.f32 %v1355, %v1374
        %v1392 = vadd.f32 %v1356, %v1374
        %v1393 = vadd.f32 %v1357, %v1374
        %v1394 = vadd.f32 %v1358, %v1374
        %v1395 = vadd.f32 %v1359, %v1374
        %v1396 = vadd.f32 %v1360, %v1374
        %v1397 = vadd.f32 %v1361, %v1374
        %v1398 = vadd.f32 %v1362, %v1374
        %v1399 = vadd.f32 %v1363, %v1374
        %v1400 = vadd.f32 %v1364, %v1374
        %v1401 = vadd.f32 %v1365, %v1374
        %v1402 = vadd.f32 %v1366, %v1374
        %v1403 = vadd.f32 %v1367, %v1374
        %v1404 = vadd.f32 %v1368, %v1374
        %v1405 = vadd.f32 %v1369, %v1374
        %v1406 = vadd.f32 %v1370, %v1374
        %v1407 = vlaneseq
        %v1408 = vshrl.u32 %v1407, 7
        %v1409 = vsub.s32 6, %v1408
        %v1410 = vrot.slane %v1119, %v1409
        %v1411 = vsub.f32 %v1410, %v1235
        %v1412 = vsub.f32 %v1410, %v1236
        %v1413 = vsub.f32 %v1410, %v1237
        %v1414 = vsub.f32 %v1410, %v1238
        %v1415 = vsub.f32 %v1410, %v1239
        %v1416 = vsub.f32 %v1410, %v1240
        %v1417 = vsub.f32 %v1410, %v1241
        %v1418 = vsub.f32 %v1410, %v1242
        %v1419 = vsub.f32 %v1410, %v1243
        %v1420 = vsub.f32 %v1410, %v1244
        %v1421 = vsub.f32 %v1410, %v1245
        %v1422 = vsub.f32 %v1410, %v1246
        %v1423 = vsub.f32 %v1410, %v1247
        %v1424 = vsub.f32 %v1410, %v1248
        %v1425 = vsub.f32 %v1410, %v1249
        %v1426 = vsub.f32 %v1410, %v1250
        %v1427 = vsub.f32 %v1410, %v1251
        %v1428 = vsub.f32 %v1410, %v1252
        %v1429 = vsub.f32 %v1410, %v1253
        %v1430 = vsub.f32 %v1410, %v1254
        %v1431 = vsub.f32 %v1410, %v1255
        %v1432 = vsub.f32 %v1410, %v1256
        %v1433 = vsub.f32 %v1410, %v1257
        %v1434 = vsub.f32 %v1410, %v1258
        %v1435 = vsub.f32 %v1410, %v1259
        %v1436 = vsub.f32 %v1410, %v1260
        %v1437 = vsub.f32 %v1410, %v1261
        %v1438 = vsub.f32 %v1410, %v1262
        %v1439 = vsub.f32 %v1410, %v1263
        %v1440 = vsub.f32 %v1410, %v1264
        %v1441 = vsub.f32 %v1410, %v1265
        %v1442 = vsub.f32 %v1410, %v1266
        %v1443 = vsub.f32 %v1411, %v1375
        %v1444 = vsub.f32 %v1412, %v1376
        %v1445 = vsub.f32 %v1413, %v1377
        %v1446 = vsub.f32 %v1414, %v1378
        %v1447 = vsub.f32 %v1415, %v1379
        %v1448 = vsub.f32 %v1416, %v1380
        %v1449 = vsub.f32 %v1417, %v1381
        %v1450 = vsub.f32 %v1418, %v1382
        %v1451 = vsub.f32 %v1419, %v1383
        %v1452 = vsub.f32 %v1420, %v1384
        %v1453 = vsub.f32 %v1421, %v1385
        %v1454 = vsub.f32 %v1422, %v1386
        %v1455 = vsub.f32 %v1423, %v1387
        %v1456 = vsub.f32 %v1424, %v1388
        %v1457 = vsub.f32 %v1425, %v1389
        %v1458 = vsub.f32 %v1426, %v1390
        %v1459 = vsub.f32 %v1427, %v1391
        %v1460 = vsub.f32 %v1428, %v1392
        %v1461 = vsub.f32 %v1429, %v1393
        %v1462 = vsub.f32 %v1430, %v1394
        %v1463 = vsub.f32 %v1431, %v1395
        %v1464 = vsub.f32 %v1432, %v1396
        %v1465 = vsub.f32 %v1433, %v1397
        %v1466 = vsub.f32 %v1434, %v1398
        %v1467 = vsub.f32 %v1435, %v1399
        %v1468 = vsub.f32 %v1436, %v1400
        %v1469 = vsub.f32 %v1437, %v1401
        %v1470 = vsub.f32 %v1438, %v1402
        %v1471 = vsub.f32 %v1439, %v1403
        %v1472 = vsub.f32 %v1440, %v1404
        %v1473 = vsub.f32 %v1441, %v1405
        %v1474 = vsub.f32 %v1442, %v1406
        %v1475 = vlaneseq
        %v1476 = vshrl.u32 %v1475, 7
        %v1477 = vsub.s32 7, %v1476
        %v1478 = vrot.slane %v1119, %v1477
        %v1479 = vmul.f32 %v1478, %v1023
        %v1480 = vmul.f32 %v1478, %v1024
        %v1481 = vmul.f32 %v1478, %v1025
        %v1482 = vmul.f32 %v1478, %v1026
        %v1483 = vmul.f32 %v1478, %v1027
        %v1484 = vmul.f32 %v1478, %v1028
        %v1485 = vmul.f32 %v1478, %v1029
        %v1486 = vmul.f32 %v1478, %v1030
        %v1487 = vmul.f32 %v1478, %v1031
        %v1488 = vmul.f32 %v1478, %v1032
        %v1489 = vmul.f32 %v1478, %v1033
        %v1490 = vmul.f32 %v1478, %v1034
        %v1491 = vmul.f32 %v1478, %v1035
        %v1492 = vmul.f32 %v1478, %v1036
        %v1493 = vmul.f32 %v1478, %v1037
        %v1494 = vmul.f32 %v1478, %v1038
        %v1495 = vmul.f32 %v1478, %v1039
        %v1496 = vmul.f32 %v1478, %v1040
        %v1497 = vmul.f32 %v1478, %v1041
        %v1498 = vmul.f32 %v1478, %v1042
        %v1499 = vmul.f32 %v1478, %v1043
        %v1500 = vmul.f32 %v1478, %v1044
        %v1501 = vmul.f32 %v1478, %v1045
        %v1502 = vmul.f32 %v1478, %v1046
        %v1503 = vmul.f32 %v1478, %v1047
        %v1504 = vmul.f32 %v1478, %v1048
        %v1505 = vmul.f32 %v1478, %v1049
        %v1506 = vmul.f32 %v1478, %v1050
        %v1507 = vmul.f32 %v1478, %v1051
        %v1508 = vmul.f32 %v1478, %v1052
        %v1509 = vmul.f32 %v1478, %v1053
        %v1510 = vmul.f32 %v1478, %v1054
        %v1511 = vlaneseq
        %v1512 = vshrl.u32 %v1511, 7
        %v1513 = vsub.s32 0, %v1512
        %v1514 = vrot.slane %v1123, %v1513
        %v1515 = vmul.f32 %v1514, %v1055
        %v1516 = vmul.f32 %v1514, %v1056
        %v1517 = vmul.f32 %v1514, %v1057
        %v1518 = vmul.f32 %v1514, %v1058
        %v1519 = vmul.f32 %v1514, %v1059
        %v1520 = vmul.f32 %v1514, %v1060
        %v1521 = vmul.f32 %v1514, %v1061
        %v1522 = vmul.f32 %v1514, %v1062
        %v1523 = vmul.f32 %v1514, %v1063
        %v1524 = vmul.f32 %v1514, %v1064
        %v1525 = vmul.f32 %v1514, %v1065
        %v1526 = vmul.f32 %v1514, %v1066
        %v1527 = vmul.f32 %v1514, %v1067
        %v1528 = vmul.f32 %v1514, %v1068
        %v1529 = vmul.f32 %v1514, %v1069
        %v1530 = vmul.f32 %v1514, %v1070
        %v1531 = vmul.f32 %v1514, %v1071
        %v1532 = vmul.f32 %v1514, %v1072
        %v1533 = vmul.f32 %v1514, %v1073
        %v1534 = vmul.f32 %v1514, %v1074
        %v1535 = vmul.f32 %v1514, %v1075
        %v1536 = vmul.f32 %v1514, %v1076
        %v1537 = vmul.f32 %v1514, %v1077
        %v1538 = vmul.f32 %v1514, %v1078
        %v1539 = vmul.f32 %v1514, %v1079
        %v1540 = vmul.f32 %v1514, %v1080
        %v1541 = vmul.f32 %v1514, %v1081
        %v1542 = vmul.f32 %v1514, %v1082
        %v1543 = vmul.f32 %v1514, %v1083
        %v1544 = vmul.f32 %v1514, %v1084
        %v1545 = vmul.f32 %v1514, %v1085
        %v1546 = vmul.f32 %v1514, %v1086
        %v1547 = vadd.f32 %v1479, %v1515
        %v1548 = vadd.f32 %v1480, %v1516
        %v1549 = vadd.f32 %v1481, %v1517
        %v1550 = vadd.f32 %v1482, %v1518
        %v1551 = vadd.f32 %v1483, %v1519
        %v1552 = vadd.f32 %v1484, %v1520
        %v1553 = vadd.f32 %v1485, %v1521
        %v1554 = vadd.f32 %v1486, %v1522
        %v1555 = vadd.f32 %v1487, %v1523
        %v1556 = vadd.f32 %v1488, %v1524
        %v1557 = vadd.f32 %v1489, %v1525
        %v1558 = vadd.f32 %v1490, %v1526
        %v1559 = vadd.f32 %v1491, %v1527
        %v1560 = vadd.f32 %v1492, %v1528
        %v1561 = vadd.f32 %v1493, %v1529
        %v1562 = vadd.f32 %v1494, %v1530
        %v1563 = vadd.f32 %v1495, %v1531
        %v1564 = vadd.f32 %v1496, %v1532
        %v1565 = vadd.f32 %v1497, %v1533
        %v1566 = vadd.f32 %v1498, %v1534
        %v1567 = vadd.f32 %v1499, %v1535
        %v1568 = vadd.f32 %v1500, %v1536
        %v1569 = vadd.f32 %v1501, %v1537
        %v1570 = vadd.f32 %v1502, %v1538
        %v1571 = vadd.f32 %v1503, %v1539
        %v1572 = vadd.f32 %v1504, %v1540
        %v1573 = vadd.f32 %v1505, %v1541
        %v1574 = vadd.f32 %v1506, %v1542
        %v1575 = vadd.f32 %v1507, %v1543
        %v1576 = vadd.f32 %v1508, %v1544
        %v1577 = vadd.f32 %v1509, %v1545
        %v1578 = vadd.f32 %v1510, %v1546
        %v1579 = vlaneseq
        %v1580 = vshrl.u32 %v1579, 7
        %v1581 = vsub.s32 1, %v1580
        %v1582 = vrot.slane %v1123, %v1581
        %v1583 = vadd.f32 %v1547, %v1582
        %v1584 = vadd.f32 %v1548, %v1582
        %v1585 = vadd.f32 %v1549, %v1582
        %v1586 = vadd.f32 %v1550, %v1582
        %v1587 = vadd.f32 %v1551, %v1582
        %v1588 = vadd.f32 %v1552, %v1582
        %v1589 = vadd.f32 %v1553, %v1582
        %v1590 = vadd.f32 %v1554, %v1582
        %v1591 = vadd.f32 %v1555, %v1582
        %v1592 = vadd.f32 %v1556, %v1582
        %v1593 = vadd.f32 %v1557, %v1582
        %v1594 = vadd.f32 %v1558, %v1582
        %v1595 = vadd.f32 %v1559, %v1582
        %v1596 = vadd.f32 %v1560, %v1582
        %v1597 = vadd.f32 %v1561, %v1582
        %v1598 = vadd.f32 %v1562, %v1582
        %v1599 = vadd.f32 %v1563, %v1582
        %v1600 = vadd.f32 %v1564, %v1582
        %v1601 = vadd.f32 %v1565, %v1582
        %v1602 = vadd.f32 %v1566, %v1582
        %v1603 = vadd.f32 %v1567, %v1582
        %v1604 = vadd.f32 %v1568, %v1582
        %v1605 = vadd.f32 %v1569, %v1582
        %v1606 = vadd.f32 %v1570, %v1582
        %v1607 = vadd.f32 %v1571, %v1582
        %v1608 = vadd.f32 %v1572, %v1582
        %v1609 = vadd.f32 %v1573, %v1582
        %v1610 = vadd.f32 %v1574, %v1582
        %v1611 = vadd.f32 %v1575, %v1582
        %v1612 = vadd.f32 %v1576, %v1582
        %v1613 = vadd.f32 %v1577, %v1582
        %v1614 = vadd.f32 %v1578, %v1582
        %v1615 = vmin.f32 %v1235, %v1375
        %v1616 = vmin.f32 %v1236, %v1376
        %v1617 = vmin.f32 %v1237, %v1377
        %v1618 = vmin.f32 %v1238, %v1378
        %v1619 = vmin.f32 %v1239, %v1379
        %v1620 = vmin.f32 %v1240, %v1380
        %v1621 = vmin.f32 %v1241, %v1381
        %v1622 = vmin.f32 %v1242, %v1382
        %v1623 = vmin.f32 %v1243, %v1383
        %v1624 = vmin.f32 %v1244, %v1384
        %v1625 = vmin.f32 %v1245, %v1385
        %v1626 = vmin.f32 %v1246, %v1386
        %v1627 = vmin.f32 %v1247, %v1387
        %v1628 = vmin.f32 %v1248, %v1388
        %v1629 = vmin.f32 %v1249, %v1389
        %v1630 = vmin.f32 %v1250, %v1390
        %v1631 = vmin.f32 %v1251, %v1391
        %v1632 = vmin.f32 %v1252, %v1392
        %v1633 = vmin.f32 %v1253, %v1393
        %v1634 = vmin.f32 %v1254, %v1394
        %v1635 = vmin.f32 %v1255, %v1395
        %v1636 = vmin.f32 %v1256, %v1396
        %v1637 = vmin.f32 %v1257, %v1397
        %v1638 = vmin.f32 %v1258, %v1398
        %v1639 = vmin.f32 %v1259, %v1399
        %v1640 = vmin.f32 %v1260, %v1400
        %v1641 = vmin.f32 %v1261, %v1401
        %v1642 = vmin.f32 %v1262, %v1402
        %v1643 = vmin.f32 %v1263, %v1403
        %v1644 = vmin.f32 %v1264, %v1404
        %v1645 = vmin.f32 %v1265, %v1405
        %v1646 = vmin.f32 %v1266, %v1406
        %v1647 = vmin.f32 %v1615, %v1443
        %v1648 = vmin.f32 %v1616, %v1444
        %v1649 = vmin.f32 %v1617, %v1445
        %v1650 = vmin.f32 %v1618, %v1446
        %v1651 = vmin.f32 %v1619, %v1447
        %v1652 = vmin.f32 %v1620, %v1448
        %v1653 = vmin.f32 %v1621, %v1449
        %v1654 = vmin.f32 %v1622, %v1450
        %v1655 = vmin.f32 %v1623, %v1451
        %v1656 = vmin.f32 %v1624, %v1452
        %v1657 = vmin.f32 %v1625, %v1453
        %v1658 = vmin.f32 %v1626, %v1454
        %v1659 = vmin.f32 %v1627, %v1455
        %v1660 = vmin.f32 %v1628, %v1456
        %v1661 = vmin.f32 %v1629, %v1457
        %v1662 = vmin.f32 %v1630, %v1458
        %v1663 = vmin.f32 %v1631, %v1459
        %v1664 = vmin.f32 %v1632, %v1460
        %v1665 = vmin.f32 %v1633, %v1461
        %v1666 = vmin.f32 %v1634, %v1462
        %v1667 = vmin.f32 %v1635, %v1463
        %v1668 = vmin.f32 %v1636, %v1464
        %v1669 = vmin.f32 %v1637, %v1465
        %v1670 = vmin.f32 %v1638, %v1466
        %v1671 = vmin.f32 %v1639, %v1467
        %v1672 = vmin.f32 %v1640, %v1468
        %v1673 = vmin.f32 %v1641, %v1469
        %v1674 = vmin.f32 %v1642, %v1470
        %v1675 = vmin.f32 %v1643, %v1471
        %v1676 = vmin.f32 %v1644, %v1472
        %v1677 = vmin.f32 %v1645, %v1473
        %v1678 = vmin.f32 %v1646, %v1474
        %vm1679 = vcmp.ge.f32.partialorder %v1647, 0.0
        %vm1680 = vcmp.ge.f32.partialorder %v1648, 0.0
        %vm1681 = vcmp.ge.f32.partialorder %v1649, 0.0
        %vm1682 = vcmp.ge.f32.partialorder %v1650, 0.0
        %vm1683 = vcmp.ge.f32.partialorder %v1651, 0.0
        %vm1684 = vcmp.ge.f32.partialorder %v1652, 0.0
        %vm1685 = vcmp.ge.f32.partialorder %v1653, 0.0
        %vm1686 = vcmp.ge.f32.partialorder %v1654, 0.0
        %vm1687 = vcmp.ge.f32.partialorder %v1655, 0.0
        %vm1688 = vcmp.ge.f32.partialorder %v1656, 0.0
        %vm1689 = vcmp.ge.f32.partialorder %v1657, 0.0
        %vm1690 = vcmp.ge.f32.partialorder %v1658, 0.0
        %vm1691 = vcmp.ge.f32.partialorder %v1659, 0.0
        %vm1692 = vcmp.ge.f32.partialorder %v1660, 0.0
        %vm1693 = vcmp.ge.f32.partialorder %v1661, 0.0
        %vm1694 = vcmp.ge.f32.partialorder %v1662, 0.0
        %vm1695 = vcmp.ge.f32.partialorder %v1663, 0.0
        %vm1696 = vcmp.ge.f32.partialorder %v1664, 0.0
        %vm1697 = vcmp.ge.f32.partialorder %v1665, 0.0
        %vm1698 = vcmp.ge.f32.partialorder %v1666, 0.0
        %vm1699 = vcmp.ge.f32.partialorder %v1667, 0.0
        %vm1700 = vcmp.ge.f32.partialorder %v1668, 0.0
        %vm1701 = vcmp.ge.f32.partialorder %v1669, 0.0
        %vm1702 = vcmp.ge.f32.partialorder %v1670, 0.0
        %vm1703 = vcmp.ge.f32.partialorder %v1671, 0.0
        %vm1704 = vcmp.ge.f32.partialorder %v1672, 0.0
        %vm1705 = vcmp.ge.f32.partialorder %v1673, 0.0
        %vm1706 = vcmp.ge.f32.partialorder %v1674, 0.0
        %vm1707 = vcmp.ge.f32.partialorder %v1675, 0.0
        %vm1708 = vcmp.ge.f32.partialorder %v1676, 0.0
        %vm1709 = vcmp.ge.f32.partialorder %v1677, 0.0
        %vm1710 = vcmp.ge.f32.partialorder %v1678, 0.0
        %v1711 = vsel %vm1679, %v1583, 1e+10
        %v1712 = vsel %vm1680, %v1584, 1e+10
        %v1713 = vsel %vm1681, %v1585, 1e+10
        %v1714 = vsel %vm1682, %v1586, 1e+10
        %v1715 = vsel %vm1683, %v1587, 1e+10
        %v1716 = vsel %vm1684, %v1588, 1e+10
        %v1717 = vsel %vm1685, %v1589, 1e+10
        %v1718 = vsel %vm1686, %v1590, 1e+10
        %v1719 = vsel %vm1687, %v1591, 1e+10
        %v1720 = vsel %vm1688, %v1592, 1e+10
        %v1721 = vsel %vm1689, %v1593, 1e+10
        %v1722 = vsel %vm1690, %v1594, 1e+10
        %v1723 = vsel %vm1691, %v1595, 1e+10
        %v1724 = vsel %vm1692, %v1596, 1e+10
        %v1725 = vsel %vm1693, %v1597, 1e+10
        %v1726 = vsel %vm1694, %v1598, 1e+10
        %v1727 = vsel %vm1695, %v1599, 1e+10
        %v1728 = vsel %vm1696, %v1600, 1e+10
        %v1729 = vsel %vm1697, %v1601, 1e+10
        %v1730 = vsel %vm1698, %v1602, 1e+10
        %v1731 = vsel %vm1699, %v1603, 1e+10
        %v1732 = vsel %vm1700, %v1604, 1e+10
        %v1733 = vsel %vm1701, %v1605, 1e+10
        %v1734 = vsel %vm1702, %v1606, 1e+10
        %v1735 = vsel %vm1703, %v1607, 1e+10
        %v1736 = vsel %vm1704, %v1608, 1e+10
        %v1737 = vsel %vm1705, %v1609, 1e+10
        %v1738 = vsel %vm1706, %v1610, 1e+10
        %v1739 = vsel %vm1707, %v1611, 1e+10
        %v1740 = vsel %vm1708, %v1612, 1e+10
        %v1741 = vsel %vm1709, %v1613, 1e+10
        %v1742 = vsel %vm1710, %v1614, 1e+10
        %v1743 = vmin.f32 %v1087, %v1711
        %v1744 = vmin.f32 %v1088, %v1712
        %v1745 = vmin.f32 %v1089, %v1713
        %v1746 = vmin.f32 %v1090, %v1714
        %v1747 = vmin.f32 %v1091, %v1715
        %v1748 = vmin.f32 %v1092, %v1716
        %v1749 = vmin.f32 %v1093, %v1717
        %v1750 = vmin.f32 %v1094, %v1718
        %v1751 = vmin.f32 %v1095, %v1719
        %v1752 = vmin.f32 %v1096, %v1720
        %v1753 = vmin.f32 %v1097, %v1721
        %v1754 = vmin.f32 %v1098, %v1722
        %v1755 = vmin.f32 %v1099, %v1723
        %v1756 = vmin.f32 %v1100, %v1724
        %v1757 = vmin.f32 %v1101, %v1725
        %v1758 = vmin.f32 %v1102, %v1726
        %v1759 = vmin.f32 %v1103, %v1727
        %v1760 = vmin.f32 %v1104, %v1728
        %v1761 = vmin.f32 %v1105, %v1729
        %v1762 = vmin.f32 %v1106, %v1730
        %v1763 = vmin.f32 %v1107, %v1731
        %v1764 = vmin.f32 %v1108, %v1732
        %v1765 = vmin.f32 %v1109, %v1733
        %v1766 = vmin.f32 %v1110, %v1734
        %v1767 = vmin.f32 %v1111, %v1735
        %v1768 = vmin.f32 %v1112, %v1736
        %v1769 = vmin.f32 %v1113, %v1737
        %v1770 = vmin.f32 %v1114, %v1738
        %v1771 = vmin.f32 %v1115, %v1739
        %v1772 = vmin.f32 %v1116, %v1740
        %v1773 = vmin.f32 %v1117, %v1741
        %v1774 = vmin.f32 %v1118, %v1742
        %v1775 = vlaneseq
        %v1776 = vshrl.u32 %v1775, 7
        %v1777 = vsub.s32 0, %v1776
        %v1778 = vrot.slane %v1120, %v1777
        %v1779 = vmul.f32 %v1778, %v1023
        %v1780 = vmul.f32 %v1778, %v1024
        %v1781 = vmul.f32 %v1778, %v1025
        %v1782 = vmul.f32 %v1778, %v1026
        %v1783 = vmul.f32 %v1778, %v1027
        %v1784 = vmul.f32 %v1778, %v1028
        %v1785 = vmul.f32 %v1778, %v1029
        %v1786 = vmul.f32 %v1778, %v1030
        %v1787 = vmul.f32 %v1778, %v1031
        %v1788 = vmul.f32 %v1778, %v1032
        %v1789 = vmul.f32 %v1778, %v1033
        %v1790 = vmul.f32 %v1778, %v1034
        %v1791 = vmul.f32 %v1778, %v1035
        %v1792 = vmul.f32 %v1778, %v1036
        %v1793 = vmul.f32 %v1778, %v1037
        %v1794 = vmul.f32 %v1778, %v1038
        %v1795 = vmul.f32 %v1778, %v1039
        %v1796 = vmul.f32 %v1778, %v1040
        %v1797 = vmul.f32 %v1778, %v1041
        %v1798 = vmul.f32 %v1778, %v1042
        %v1799 = vmul.f32 %v1778, %v1043
        %v1800 = vmul.f32 %v1778, %v1044
        %v1801 = vmul.f32 %v1778, %v1045
        %v1802 = vmul.f32 %v1778, %v1046
        %v1803 = vmul.f32 %v1778, %v1047
        %v1804 = vmul.f32 %v1778, %v1048
        %v1805 = vmul.f32 %v1778, %v1049
        %v1806 = vmul.f32 %v1778, %v1050
        %v1807 = vmul.f32 %v1778, %v1051
        %v1808 = vmul.f32 %v1778, %v1052
        %v1809 = vmul.f32 %v1778, %v1053
        %v1810 = vmul.f32 %v1778, %v1054
        %v1811 = vlaneseq
        %v1812 = vshrl.u32 %v1811, 7
        %v1813 = vsub.s32 1, %v1812
        %v1814 = vrot.slane %v1120, %v1813
        %v1815 = vmul.f32 %v1814, %v1055
        %v1816 = vmul.f32 %v1814, %v1056
        %v1817 = vmul.f32 %v1814, %v1057
        %v1818 = vmul.f32 %v1814, %v1058
        %v1819 = vmul.f32 %v1814, %v1059
        %v1820 = vmul.f32 %v1814, %v1060
        %v1821 = vmul.f32 %v1814, %v1061
        %v1822 = vmul.f32 %v1814, %v1062
        %v1823 = vmul.f32 %v1814, %v1063
        %v1824 = vmul.f32 %v1814, %v1064
        %v1825 = vmul.f32 %v1814, %v1065
        %v1826 = vmul.f32 %v1814, %v1066
        %v1827 = vmul.f32 %v1814, %v1067
        %v1828 = vmul.f32 %v1814, %v1068
        %v1829 = vmul.f32 %v1814, %v1069
        %v1830 = vmul.f32 %v1814, %v1070
        %v1831 = vmul.f32 %v1814, %v1071
        %v1832 = vmul.f32 %v1814, %v1072
        %v1833 = vmul.f32 %v1814, %v1073
        %v1834 = vmul.f32 %v1814, %v1074
        %v1835 = vmul.f32 %v1814, %v1075
        %v1836 = vmul.f32 %v1814, %v1076
        %v1837 = vmul.f32 %v1814, %v1077
        %v1838 = vmul.f32 %v1814, %v1078
        %v1839 = vmul.f32 %v1814, %v1079
        %v1840 = vmul.f32 %v1814, %v1080
        %v1841 = vmul.f32 %v1814, %v1081
        %v1842 = vmul.f32 %v1814, %v1082
        %v1843 = vmul.f32 %v1814, %v1083
        %v1844 = vmul.f32 %v1814, %v1084
        %v1845 = vmul.f32 %v1814, %v1085
        %v1846 = vmul.f32 %v1814, %v1086
        %v1847 = vadd.f32 %v1779, %v1815
        %v1848 = vadd.f32 %v1780, %v1816
        %v1849 = vadd.f32 %v1781, %v1817
        %v1850 = vadd.f32 %v1782, %v1818
        %v1851 = vadd.f32 %v1783, %v1819
        %v1852 = vadd.f32 %v1784, %v1820
        %v1853 = vadd.f32 %v1785, %v1821
        %v1854 = vadd.f32 %v1786, %v1822
        %v1855 = vadd.f32 %v1787, %v1823
        %v1856 = vadd.f32 %v1788, %v1824
        %v1857 = vadd.f32 %v1789, %v1825
        %v1858 = vadd.f32 %v1790, %v1826
        %v1859 = vadd.f32 %v1791, %v1827
        %v1860 = vadd.f32 %v1792, %v1828
        %v1861 = vadd.f32 %v1793, %v1829
        %v1862 = vadd.f32 %v1794, %v1830
        %v1863 = vadd.f32 %v1795, %v1831
        %v1864 = vadd.f32 %v1796, %v1832
        %v1865 = vadd.f32 %v1797, %v1833
        %v1866 = vadd.f32 %v1798, %v1834
        %v1867 = vadd.f32 %v1799, %v1835
        %v1868 = vadd.f32 %v1800, %v1836
        %v1869 = vadd.f32 %v1801, %v1837
        %v1870 = vadd.f32 %v1802, %v1838
        %v1871 = vadd.f32 %v1803, %v1839
        %v1872 = vadd.f32 %v1804, %v1840
        %v1873 = vadd.f32 %v1805, %v1841
        %v1874 = vadd.f32 %v1806, %v1842
        %v1875 = vadd.f32 %v1807, %v1843
        %v1876 = vadd.f32 %v1808, %v1844
        %v1877 = vadd.f32 %v1809, %v1845
        %v1878 = vadd.f32 %v1810, %v1846
        %v1879 = vlaneseq
        %v1880 = vshrl.u32 %v1879, 7
        %v1881 = vsub.s32 2, %v1880
        %v1882 = vrot.slane %v1120, %v1881
        %v1883 = vadd.f32 %v1847, %v1882
        %v1884 = vadd.f32 %v1848, %v1882
        %v1885 = vadd.f32 %v1849, %v1882
        %v1886 = vadd.f32 %v1850, %v1882
        %v1887 = vadd.f32 %v1851, %v1882
        %v1888 = vadd.f32 %v1852, %v1882
        %v1889 = vadd.f32 %v1853, %v1882
        %v1890 = vadd.f32 %v1854, %v1882
        %v1891 = vadd.f32 %v1855, %v1882
        %v1892 = vadd.f32 %v1856, %v1882
        %v1893 = vadd.f32 %v1857, %v1882
        %v1894 = vadd.f32 %v1858, %v1882
        %v1895 = vadd.f32 %v1859, %v1882
        %v1896 = vadd.f32 %v1860, %v1882
        %v1897 = vadd.f32 %v1861, %v1882
        %v1898 = vadd.f32 %v1862, %v1882
        %v1899 = vadd.f32 %v1863, %v1882
        %v1900 = vadd.f32 %v1864, %v1882
        %v1901 = vadd.f32 %v1865, %v1882
        %v1902 = vadd.f32 %v1866, %v1882
        %v1903 = vadd.f32 %v1867, %v1882
        %v1904 = vadd.f32 %v1868, %v1882
        %v1905 = vadd.f32 %v1869, %v1882
        %v1906 = vadd.f32 %v1870, %v1882
        %v1907 = vadd.f32 %v1871, %v1882
        %v1908 = vadd.f32 %v1872, %v1882
        %v1909 = vadd.f32 %v1873, %v1882
        %v1910 = vadd.f32 %v1874, %v1882
        %v1911 = vadd.f32 %v1875, %v1882
        %v1912 = vadd.f32 %v1876, %v1882
        %v1913 = vadd.f32 %v1877, %v1882
        %v1914 = vadd.f32 %v1878, %v1882
        %v1915 = vlaneseq
        %v1916 = vshrl.u32 %v1915, 7
        %v1917 = vsub.s32 3, %v1916
        %v1918 = vrot.slane %v1120, %v1917
        %v1919 = vmul.f32 %v1918, %v1023
        %v1920 = vmul.f32 %v1918, %v1024
        %v1921 = vmul.f32 %v1918, %v1025
        %v1922 = vmul.f32 %v1918, %v1026
        %v1923 = vmul.f32 %v1918, %v1027
        %v1924 = vmul.f32 %v1918, %v1028
        %v1925 = vmul.f32 %v1918, %v1029
        %v1926 = vmul.f32 %v1918, %v1030
        %v1927 = vmul.f32 %v1918, %v1031
        %v1928 = vmul.f32 %v1918, %v1032
        %v1929 = vmul.f32 %v1918, %v1033
        %v1930 = vmul.f32 %v1918, %v1034
        %v1931 = vmul.f32 %v1918, %v1035
        %v1932 = vmul.f32 %v1918, %v1036
        %v1933 = vmul.f32 %v1918, %v1037
        %v1934 = vmul.f32 %v1918, %v1038
        %v1935 = vmul.f32 %v1918, %v1039
        %v1936 = vmul.f32 %v1918, %v1040
        %v1937 = vmul.f32 %v1918, %v1041
        %v1938 = vmul.f32 %v1918, %v1042
        %v1939 = vmul.f32 %v1918, %v1043
        %v1940 = vmul.f32 %v1918, %v1044
        %v1941 = vmul.f32 %v1918, %v1045
        %v1942 = vmul.f32 %v1918, %v1046
        %v1943 = vmul.f32 %v1918, %v1047
        %v1944 = vmul.f32 %v1918, %v1048
        %v1945 = vmul.f32 %v1918, %v1049
        %v1946 = vmul.f32 %v1918, %v1050
        %v1947 = vmul.f32 %v1918, %v1051
        %v1948 = vmul.f32 %v1918, %v1052
        %v1949 = vmul.f32 %v1918, %v1053
        %v1950 = vmul.f32 %v1918, %v1054
        %v1951 = vlaneseq
        %v1952 = vshrl.u32 %v1951, 7
        %v1953 = vsub.s32 4, %v1952
        %v1954 = vrot.slane %v1120, %v1953
        %v1955 = vmul.f32 %v1954, %v1055
        %v1956 = vmul.f32 %v1954, %v1056
        %v1957 = vmul.f32 %v1954, %v1057
        %v1958 = vmul.f32 %v1954, %v1058
        %v1959 = vmul.f32 %v1954, %v1059
        %v1960 = vmul.f32 %v1954, %v1060
        %v1961 = vmul.f32 %v1954, %v1061
        %v1962 = vmul.f32 %v1954, %v1062
        %v1963 = vmul.f32 %v1954, %v1063
        %v1964 = vmul.f32 %v1954, %v1064
        %v1965 = vmul.f32 %v1954, %v1065
        %v1966 = vmul.f32 %v1954, %v1066
        %v1967 = vmul.f32 %v1954, %v1067
        %v1968 = vmul.f32 %v1954, %v1068
        %v1969 = vmul.f32 %v1954, %v1069
        %v1970 = vmul.f32 %v1954, %v1070
        %v1971 = vmul.f32 %v1954, %v1071
        %v1972 = vmul.f32 %v1954, %v1072
        %v1973 = vmul.f32 %v1954, %v1073
        %v1974 = vmul.f32 %v1954, %v1074
        %v1975 = vmul.f32 %v1954, %v1075
        %v1976 = vmul.f32 %v1954, %v1076
        %v1977 = vmul.f32 %v1954, %v1077
        %v1978 = vmul.f32 %v1954, %v1078
        %v1979 = vmul.f32 %v1954, %v1079
        %v1980 = vmul.f32 %v1954, %v1080
        %v1981 = vmul.f32 %v1954, %v1081
        %v1982 = vmul.f32 %v1954, %v1082
        %v1983 = vmul.f32 %v1954, %v1083
        %v1984 = vmul.f32 %v1954, %v1084
        %v1985 = vmul.f32 %v1954, %v1085
        %v1986 = vmul.f32 %v1954, %v1086
        %v1987 = vadd.f32 %v1919, %v1955
        %v1988 = vadd.f32 %v1920, %v1956
        %v1989 = vadd.f32 %v1921, %v1957
        %v1990 = vadd.f32 %v1922, %v1958
        %v1991 = vadd.f32 %v1923, %v1959
        %v1992 = vadd.f32 %v1924, %v1960
        %v1993 = vadd.f32 %v1925, %v1961
        %v1994 = vadd.f32 %v1926, %v1962
        %v1995 = vadd.f32 %v1927, %v1963
        %v1996 = vadd.f32 %v1928, %v1964
        %v1997 = vadd.f32 %v1929, %v1965
        %v1998 = vadd.f32 %v1930, %v1966
        %v1999 = vadd.f32 %v1931, %v1967
        %v2000 = vadd.f32 %v1932, %v1968
        %v2001 = vadd.f32 %v1933, %v1969
        %v2002 = vadd.f32 %v1934, %v1970
        %v2003 = vadd.f32 %v1935, %v1971
        %v2004 = vadd.f32 %v1936, %v1972
        %v2005 = vadd.f32 %v1937, %v1973
        %v2006 = vadd.f32 %v1938, %v1974
        %v2007 = vadd.f32 %v1939, %v1975
        %v2008 = vadd.f32 %v1940, %v1976
        %v2009 = vadd.f32 %v1941, %v1977
        %v2010 = vadd.f32 %v1942, %v1978
        %v2011 = vadd.f32 %v1943, %v1979
        %v2012 = vadd.f32 %v1944, %v1980
        %v2013 = vadd.f32 %v1945, %v1981
        %v2014 = vadd.f32 %v1946, %v1982
        %v2015 = vadd.f32 %v1947, %v1983
        %v2016 = vadd.f32 %v1948, %v1984
        %v2017 = vadd.f32 %v1949, %v1985
        %v2018 = vadd.f32 %v1950, %v1986
        %v2019 = vlaneseq
        %v2020 = vshrl.u32 %v2019, 7
        %v2021 = vsub.s32 5, %v2020
        %v2022 = vrot.slane %v1120, %v2021
        %v2023 = vadd.f32 %v1987, %v2022
        %v2024 = vadd.f32 %v1988, %v2022
        %v2025 = vadd.f32 %v1989, %v2022
        %v2026 = vadd.f32 %v1990, %v2022
        %v2027 = vadd.f32 %v1991, %v2022
        %v2028 = vadd.f32 %v1992, %v2022
        %v2029 = vadd.f32 %v1993, %v2022
        %v2030 = vadd.f32 %v1994, %v2022
        %v2031 = vadd.f32 %v1995, %v2022
        %v2032 = vadd.f32 %v1996, %v2022
        %v2033 = vadd.f32 %v1997, %v2022
        %v2034 = vadd.f32 %v1998, %v2022
        %v2035 = vadd.f32 %v1999, %v2022
        %v2036 = vadd.f32 %v2000, %v2022
        %v2037 = vadd.f32 %v2001, %v2022
        %v2038 = vadd.f32 %v2002, %v2022
        %v2039 = vadd.f32 %v2003, %v2022
        %v2040 = vadd.f32 %v2004, %v2022
        %v2041 = vadd.f32 %v2005, %v2022
        %v2042 = vadd.f32 %v2006, %v2022
        %v2043 = vadd.f32 %v2007, %v2022
        %v2044 = vadd.f32 %v2008, %v2022
        %v2045 = vadd.f32 %v2009, %v2022
        %v2046 = vadd.f32 %v2010, %v2022
        %v2047 = vadd.f32 %v2011, %v2022
        %v2048 = vadd.f32 %v2012, %v2022
        %v2049 = vadd.f32 %v2013, %v2022
        %v2050 = vadd.f32 %v2014, %v2022
        %v2051 = vadd.f32 %v2015, %v2022
        %v2052 = vadd.f32 %v2016, %v2022
        %v2053 = vadd.f32 %v2017, %v2022
        %v2054 = vadd.f32 %v2018, %v2022
        %v2055 = vlaneseq
        %v2056 = vshrl.u32 %v2055, 7
        %v2057 = vsub.s32 6, %v2056
        %v2058 = vrot.slane %v1120, %v2057
        %v2059 = vsub.f32 %v2058, %v1883
        %v2060 = vsub.f32 %v2058, %v1884
        %v2061 = vsub.f32 %v2058, %v1885
        %v2062 = vsub.f32 %v2058, %v1886
        %v2063 = vsub.f32 %v2058, %v1887
        %v2064 = vsub.f32 %v2058, %v1888
        %v2065 = vsub.f32 %v2058, %v1889
        %v2066 = vsub.f32 %v2058, %v1890
        %v2067 = vsub.f32 %v2058, %v1891
        %v2068 = vsub.f32 %v2058, %v1892
        %v2069 = vsub.f32 %v2058, %v1893
        %v2070 = vsub.f32 %v2058, %v1894
        %v2071 = vsub.f32 %v2058, %v1895
        %v2072 = vsub.f32 %v2058, %v1896
        %v2073 = vsub.f32 %v2058, %v1897
        %v2074 = vsub.f32 %v2058, %v1898
        %v2075 = vsub.f32 %v2058, %v1899
        %v2076 = vsub.f32 %v2058, %v1900
        %v2077 = vsub.f32 %v2058, %v1901
        %v2078 = vsub.f32 %v2058, %v1902
        %v2079 = vsub.f32 %v2058, %v1903
        %v2080 = vsub.f32 %v2058, %v1904
        %v2081 = vsub.f32 %v2058, %v1905
        %v2082 = vsub.f32 %v2058, %v1906
        %v2083 = vsub.f32 %v2058, %v1907
        %v2084 = vsub.f32 %v2058, %v1908
        %v2085 = vsub.f32 %v2058, %v1909
        %v2086 = vsub.f32 %v2058, %v1910
        %v2087 = vsub.f32 %v2058, %v1911
        %v2088 = vsub.f32 %v2058, %v1912
        %v2089 = vsub.f32 %v2058, %v1913
        %v2090 = vsub.f32 %v2058, %v1914
        %v2091 = vsub.f32 %v2059, %v2023
        %v2092 = vsub.f32 %v2060, %v2024
        %v2093 = vsub.f32 %v2061, %v2025
        %v2094 = vsub.f32 %v2062, %v2026
        %v2095 = vsub.f32 %v2063, %v2027
        %v2096 = vsub.f32 %v2064, %v2028
        %v2097 = vsub.f32 %v2065, %v2029
        %v2098 = vsub.f32 %v2066, %v2030
        %v2099 = vsub.f32 %v2067, %v2031
        %v2100 = vsub.f32 %v2068, %v2032
        %v2101 = vsub.f32 %v2069, %v2033
        %v2102 = vsub.f32 %v2070, %v2034
        %v2103 = vsub.f32 %v2071, %v2035
        %v2104 = vsub.f32 %v2072, %v2036
        %v2105 = vsub.f32 %v2073, %v2037
        %v2106 = vsub.f32 %v2074, %v2038
        %v2107 = vsub.f32 %v2075, %v2039
        %v2108 = vsub.f32 %v2076, %v2040
        %v2109 = vsub.f32 %v2077, %v2041
        %v2110 = vsub.f32 %v2078, %v2042
        %v2111 = vsub.f32 %v2079, %v2043
        %v2112 = vsub.f32 %v2080, %v2044
        %v2113 = vsub.f32 %v2081, %v2045
        %v2114 = vsub.f32 %v2082, %v2046
        %v2115 = vsub.f32 %v2083, %v2047
        %v2116 = vsub.f32 %v2084, %v2048
        %v2117 = vsub.f32 %v2085, %v2049
        %v2118 = vsub.f32 %v2086, %v2050
        %v2119 = vsub.f32 %v2087, %v2051
        %v2120 = vsub.f32 %v2088, %v2052
        %v2121 = vsub.f32 %v2089, %v2053
        %v2122 = vsub.f32 %v2090, %v2054
        %v2123 = vlaneseq
        %v2124 = vshrl.u32 %v2123, 7
        %v2125 = vsub.s32 7, %v2124
        %v2126 = vrot.slane %v1120, %v2125
        %v2127 = vmul.f32 %v2126, %v1023
        %v2128 = vmul.f32 %v2126, %v1024
        %v2129 = vmul.f32 %v2126, %v1025
        %v2130 = vmul.f32 %v2126, %v1026
        %v2131 = vmul.f32 %v2126, %v1027
        %v2132 = vmul.f32 %v2126, %v1028
        %v2133 = vmul.f32 %v2126, %v1029
        %v2134 = vmul.f32 %v2126, %v1030
        %v2135 = vmul.f32 %v2126, %v1031
        %v2136 = vmul.f32 %v2126, %v1032
        %v2137 = vmul.f32 %v2126, %v1033
        %v2138 = vmul.f32 %v2126, %v1034
        %v2139 = vmul.f32 %v2126, %v1035
        %v2140 = vmul.f32 %v2126, %v1036
        %v2141 = vmul.f32 %v2126, %v1037
        %v2142 = vmul.f32 %v2126, %v1038
        %v2143 = vmul.f32 %v2126, %v1039
        %v2144 = vmul.f32 %v2126, %v1040
        %v2145 = vmul.f32 %v2126, %v1041
        %v2146 = vmul.f32 %v2126, %v1042
        %v2147 = vmul.f32 %v2126, %v1043
        %v2148 = vmul.f32 %v2126, %v1044
        %v2149 = vmul.f32 %v2126, %v1045
        %v2150 = vmul.f32 %v2126, %v1046
        %v2151 = vmul.f32 %v2126, %v1047
        %v2152 = vmul.f32 %v2126, %v1048
        %v2153 = vmul.f32 %v2126, %v1049
        %v2154 = vmul.f32 %v2126, %v1050
        %v2155 = vmul.f32 %v2126, %v1051
        %v2156 = vmul.f32 %v2126, %v1052
        %v2157 = vmul.f32 %v2126, %v1053
        %v2158 = vmul.f32 %v2126, %v1054
        %v2159 = vlaneseq
        %v2160 = vshrl.u32 %v2159, 7
        %v2161 = vsub.s32 0, %v2160
        %v2162 = vrot.slane %v1124, %v2161
        %v2163 = vmul.f32 %v2162, %v1055
        %v2164 = vmul.f32 %v2162, %v1056
        %v2165 = vmul.f32 %v2162, %v1057
        %v2166 = vmul.f32 %v2162, %v1058
        %v2167 = vmul.f32 %v2162, %v1059
        %v2168 = vmul.f32 %v2162, %v1060
        %v2169 = vmul.f32 %v2162, %v1061
        %v2170 = vmul.f32 %v2162, %v1062
        %v2171 = vmul.f32 %v2162, %v1063
        %v2172 = vmul.f32 %v2162, %v1064
        %v2173 = vmul.f32 %v2162, %v1065
        %v2174 = vmul.f32 %v2162, %v1066
        %v2175 = vmul.f32 %v2162, %v1067
        %v2176 = vmul.f32 %v2162, %v1068
        %v2177 = vmul.f32 %v2162, %v1069
        %v2178 = vmul.f32 %v2162, %v1070
        %v2179 = vmul.f32 %v2162, %v1071
        %v2180 = vmul.f32 %v2162, %v1072
        %v2181 = vmul.f32 %v2162, %v1073
        %v2182 = vmul.f32 %v2162, %v1074
        %v2183 = vmul.f32 %v2162, %v1075
        %v2184 = vmul.f32 %v2162, %v1076
        %v2185 = vmul.f32 %v2162, %v1077
        %v2186 = vmul.f32 %v2162, %v1078
        %v2187 = vmul.f32 %v2162, %v1079
        %v2188 = vmul.f32 %v2162, %v1080
        %v2189 = vmul.f32 %v2162, %v1081
        %v2190 = vmul.f32 %v2162, %v1082
        %v2191 = vmul.f32 %v2162, %v1083
        %v2192 = vmul.f32 %v2162, %v1084
        %v2193 = vmul.f32 %v2162, %v1085
        %v2194 = vmul.f32 %v2162, %v1086
        %v2195 = vadd.f32 %v2127, %v2163
        %v2196 = vadd.f32 %v2128, %v2164
        %v2197 = vadd.f32 %v2129, %v2165
        %v2198 = vadd.f32 %v2130, %v2166
        %v2199 = vadd.f32 %v2131, %v2167
        %v2200 = vadd.f32 %v2132, %v2168
        %v2201 = vadd.f32 %v2133, %v2169
        %v2202 = vadd.f32 %v2134, %v2170
        %v2203 = vadd.f32 %v2135, %v2171
        %v2204 = vadd.f32 %v2136, %v2172
        %v2205 = vadd.f32 %v2137, %v2173
        %v2206 = vadd.f32 %v2138, %v2174
        %v2207 = vadd.f32 %v2139, %v2175
        %v2208 = vadd.f32 %v2140, %v2176
        %v2209 = vadd.f32 %v2141, %v2177
        %v2210 = vadd.f32 %v2142, %v2178
        %v2211 = vadd.f32 %v2143, %v2179
        %v2212 = vadd.f32 %v2144, %v2180
        %v2213 = vadd.f32 %v2145, %v2181
        %v2214 = vadd.f32 %v2146, %v2182
        %v2215 = vadd.f32 %v2147, %v2183
        %v2216 = vadd.f32 %v2148, %v2184
        %v2217 = vadd.f32 %v2149, %v2185
        %v2218 = vadd.f32 %v2150, %v2186
        %v2219 = vadd.f32 %v2151, %v2187
        %v2220 = vadd.f32 %v2152, %v2188
        %v2221 = vadd.f32 %v2153, %v2189
        %v2222 = vadd.f32 %v2154, %v2190
        %v2223 = vadd.f32 %v2155, %v2191
        %v2224 = vadd.f32 %v2156, %v2192
        %v2225 = vadd.f32 %v2157, %v2193
        %v2226 = vadd.f32 %v2158, %v2194
        %v2227 = vlaneseq
        %v2228 = vshrl.u32 %v2227, 7
        %v2229 = vsub.s32 1, %v2228
        %v2230 = vrot.slane %v1124, %v2229
        %v2231 = vadd.f32 %v2195, %v2230
        %v2232 = vadd.f32 %v2196, %v2230
        %v2233 = vadd.f32 %v2197, %v2230
        %v2234 = vadd.f32 %v2198, %v2230
        %v2235 = vadd.f32 %v2199, %v2230
        %v2236 = vadd.f32 %v2200, %v2230
        %v2237 = vadd.f32 %v2201, %v2230
        %v2238 = vadd.f32 %v2202, %v2230
        %v2239 = vadd.f32 %v2203, %v2230
        %v2240 = vadd.f32 %v2204, %v2230
        %v2241 = vadd.f32 %v2205, %v2230
        %v2242 = vadd.f32 %v2206, %v2230
        %v2243 = vadd.f32 %v2207, %v2230
        %v2244 = vadd.f32 %v2208, %v2230
        %v2245 = vadd.f32 %v2209, %v2230
        %v2246 = vadd.f32 %v2210, %v2230
        %v2247 = vadd.f32 %v2211, %v2230
        %v2248 = vadd.f32 %v2212, %v2230
        %v2249 = vadd.f32 %v2213, %v2230
        %v2250 = vadd.f32 %v2214, %v2230
        %v2251 = vadd.f32 %v2215, %v2230
        %v2252 = vadd.f32 %v2216, %v2230
        %v2253 = vadd.f32 %v2217, %v2230
        %v2254 = vadd.f32 %v2218, %v2230
        %v2255 = vadd.f32 %v2219, %v2230
        %v2256 = vadd.f32 %v2220, %v2230
        %v2257 = vadd.f32 %v2221, %v2230
        %v2258 = vadd.f32 %v2222, %v2230
        %v2259 = vadd.f32 %v2223, %v2230
        %v2260 = vadd.f32 %v2224, %v2230
        %v2261 = vadd.f32 %v2225, %v2230
        %v2262 = vadd.f32 %v2226, %v2230
        %v2263 = vmin.f32 %v1883, %v2023
        %v2264 = vmin.f32 %v1884, %v2024
        %v2265 = vmin.f32 %v1885, %v2025
        %v2266 = vmin.f32 %v1886, %v2026
        %v2267 = vmin.f32 %v1887, %v2027
        %v2268 = vmin.f32 %v1888, %v2028
        %v2269 = vmin.f32 %v1889, %v2029
        %v2270 = vmin.f32 %v1890, %v2030
        %v2271 = vmin.f32 %v1891, %v2031
        %v2272 = vmin.f32 %v1892, %v2032
        %v2273 = vmin.f32 %v1893, %v2033
        %v2274 = vmin.f32 %v1894, %v2034
        %v2275 = vmin.f32 %v1895, %v2035
        %v2276 = vmin.f32 %v1896, %v2036
        %v2277 = vmin.f32 %v1897, %v2037
        %v2278 = vmin.f32 %v1898, %v2038
        %v2279 = vmin.f32 %v1899, %v2039
        %v2280 = vmin.f32 %v1900, %v2040
        %v2281 = vmin.f32 %v1901, %v2041
        %v2282 = vmin.f32 %v1902, %v2042
        %v2283 = vmin.f32 %v1903, %v2043
        %v2284 = vmin.f32 %v1904, %v2044
        %v2285 = vmin.f32 %v1905, %v2045
        %v2286 = vmin.f32 %v1906, %v2046
        %v2287 = vmin.f32 %v1907, %v2047
        %v2288 = vmin.f32 %v1908, %v2048
        %v2289 = vmin.f32 %v1909, %v2049
        %v2290 = vmin.f32 %v1910, %v2050
        %v2291 = vmin.f32 %v1911, %v2051
        %v2292 = vmin.f32 %v1912, %v2052
        %v2293 = vmin.f32 %v1913, %v2053
        %v2294 = vmin.f32 %v1914, %v2054
        %v2295 = vmin.f32 %v2263, %v2091
        %v2296 = vmin.f32 %v2264, %v2092
        %v2297 = vmin.f32 %v2265, %v2093
        %v2298 = vmin.f32 %v2266, %v2094
        %v2299 = vmin.f32 %v2267, %v2095
        %v2300 = vmin.f32 %v2268, %v2096
        %v2301 = vmin.f32 %v2269, %v2097
        %v2302 = vmin.f32 %v2270, %v2098
        %v2303 = vmin.f32 %v2271, %v2099
        %v2304 = vmin.f32 %v2272, %v2100
        %v2305 = vmin.f32 %v2273, %v2101
        %v2306 = vmin.f32 %v2274, %v2102
        %v2307 = vmin.f32 %v2275, %v2103
        %v2308 = vmin.f32 %v2276, %v2104
        %v2309 = vmin.f32 %v2277, %v2105
        %v2310 = vmin.f32 %v2278, %v2106
        %v2311 = vmin.f32 %v2279, %v2107
        %v2312 = vmin.f32 %v2280, %v2108
        %v2313 = vmin.f32 %v2281, %v2109
        %v2314 = vmin.f32 %v2282, %v2110
        %v2315 = vmin.f32 %v2283, %v2111
        %v2316 = vmin.f32 %v2284, %v2112
        %v2317 = vmin.f32 %v2285, %v2113
        %v2318 = vmin.f32 %v2286, %v2114
        %v2319 = vmin.f32 %v2287, %v2115
        %v2320 = vmin.f32 %v2288, %v2116
        %v2321 = vmin.f32 %v2289, %v2117
        %v2322 = vmin.f32 %v2290, %v2118
        %v2323 = vmin.f32 %v2291, %v2119
        %v2324 = vmin.f32 %v2292, %v2120
        %v2325 = vmin.f32 %v2293, %v2121
        %v2326 = vmin.f32 %v2294, %v2122
        %vm2327 = vcmp.ge.f32.partialorder %v2295, 0.0
        %vm2328 = vcmp.ge.f32.partialorder %v2296, 0.0
        %vm2329 = vcmp.ge.f32.partialorder %v2297, 0.0
        %vm2330 = vcmp.ge.f32.partialorder %v2298, 0.0
        %vm2331 = vcmp.ge.f32.partialorder %v2299, 0.0
        %vm2332 = vcmp.ge.f32.partialorder %v2300, 0.0
        %vm2333 = vcmp.ge.f32.partialorder %v2301, 0.0
        %vm2334 = vcmp.ge.f32.partialorder %v2302, 0.0
        %vm2335 = vcmp.ge.f32.partialorder %v2303, 0.0
        %vm2336 = vcmp.ge.f32.partialorder %v2304, 0.0
        %vm2337 = vcmp.ge.f32.partialorder %v2305, 0.0
        %vm2338 = vcmp.ge.f32.partialorder %v2306, 0.0
        %vm2339 = vcmp.ge.f32.partialorder %v2307, 0.0
        %vm2340 = vcmp.ge.f32.partialorder %v2308, 0.0
        %vm2341 = vcmp.ge.f32.partialorder %v2309, 0.0
        %vm2342 = vcmp.ge.f32.partialorder %v2310, 0.0
        %vm2343 = vcmp.ge.f32.partialorder %v2311, 0.0
        %vm2344 = vcmp.ge.f32.partialorder %v2312, 0.0
        %vm2345 = vcmp.ge.f32.partialorder %v2313, 0.0
        %vm2346 = vcmp.ge.f32.partialorder %v2314, 0.0
        %vm2347 = vcmp.ge.f32.partialorder %v2315, 0.0
        %vm2348 = vcmp.ge.f32.partialorder %v2316, 0.0
        %vm2349 = vcmp.ge.f32.partialorder %v2317, 0.0
        %vm2350 = vcmp.ge.f32.partialorder %v2318, 0.0
        %vm2351 = vcmp.ge.f32.partialorder %v2319, 0.0
        %vm2352 = vcmp.ge.f32.partialorder %v2320, 0.0
        %vm2353 = vcmp.ge.f32.partialorder %v2321, 0.0
        %vm2354 = vcmp.ge.f32.partialorder %v2322, 0.0
        %vm2355 = vcmp.ge.f32.partialorder %v2323, 0.0
        %vm2356 = vcmp.ge.f32.partialorder %v2324, 0.0
        %vm2357 = vcmp.ge.f32.partialorder %v2325, 0.0
        %vm2358 = vcmp.ge.f32.partialorder %v2326, 0.0
        %v2359 = vsel %vm2327, %v2231, 1e+10
        %v2360 = vsel %vm2328, %v2232, 1e+10
        %v2361 = vsel %vm2329, %v2233, 1e+10
        %v2362 = vsel %vm2330, %v2234, 1e+10
        %v2363 = vsel %vm2331, %v2235, 1e+10
        %v2364 = vsel %vm2332, %v2236, 1e+10
        %v2365 = vsel %vm2333, %v2237, 1e+10
        %v2366 = vsel %vm2334, %v2238, 1e+10
        %v2367 = vsel %vm2335, %v2239, 1e+10
        %v2368 = vsel %vm2336, %v2240, 1e+10
        %v2369 = vsel %vm2337, %v2241, 1e+10
        %v2370 = vsel %vm2338, %v2242, 1e+10
        %v2371 = vsel %vm2339, %v2243, 1e+10
        %v2372 = vsel %vm2340, %v2244, 1e+10
        %v2373 = vsel %vm2341, %v2245, 1e+10
        %v2374 = vsel %vm2342, %v2246, 1e+10
        %v2375 = vsel %vm2343, %v2247, 1e+10
        %v2376 = vsel %vm2344, %v2248, 1e+10
        %v2377 = vsel %vm2345, %v2249, 1e+10
        %v2378 = vsel %vm2346, %v2250, 1e+10
        %v2379 = vsel %vm2347, %v2251, 1e+10
        %v2380 = vsel %vm2348, %v2252, 1e+10
        %v2381 = vsel %vm2349, %v2253, 1e+10
        %v2382 = vsel %vm2350, %v2254, 1e+10
        %v2383 = vsel %vm2351, %v2255, 1e+10
        %v2384 = vsel %vm2352, %v2256, 1e+10
        %v2385 = vsel %vm2353, %v2257, 1e+10
        %v2386 = vsel %vm2354, %v2258, 1e+10
        %v2387 = vsel %vm2355, %v2259, 1e+10
        %v2388 = vsel %vm2356, %v2260, 1e+10
        %v2389 = vsel %vm2357, %v2261, 1e+10
        %v2390 = vsel %vm2358, %v2262, 1e+10
        %v2391 = vmin.f32 %v1743, %v2359
        %v2392 = vmin.f32 %v1744, %v2360
        %v2393 = vmin.f32 %v1745, %v2361
        %v2394 = vmin.f32 %v1746, %v2362
        %v2395 = vmin.f32 %v1747, %v2363
        %v2396 = vmin.f32 %v1748, %v2364
        %v2397 = vmin.f32 %v1749, %v2365
        %v2398 = vmin.f32 %v1750, %v2366
        %v2399 = vmin.f32 %v1751, %v2367
        %v2400 = vmin.f32 %v1752, %v2368
        %v2401 = vmin.f32 %v1753, %v2369
        %v2402 = vmin.f32 %v1754, %v2370
        %v2403 = vmin.f32 %v1755, %v2371
        %v2404 = vmin.f32 %v1756, %v2372
        %v2405 = vmin.f32 %v1757, %v2373
        %v2406 = vmin.f32 %v1758, %v2374
        %v2407 = vmin.f32 %v1759, %v2375
        %v2408 = vmin.f32 %v1760, %v2376
        %v2409 = vmin.f32 %v1761, %v2377
        %v2410 = vmin.f32 %v1762, %v2378
        %v2411 = vmin.f32 %v1763, %v2379
        %v2412 = vmin.f32 %v1764, %v2380
        %v2413 = vmin.f32 %v1765, %v2381
        %v2414 = vmin.f32 %v1766, %v2382
        %v2415 = vmin.f32 %v1767, %v2383
        %v2416 = vmin.f32 %v1768, %v2384
        %v2417 = vmin.f32 %v1769, %v2385
        %v2418 = vmin.f32 %v1770, %v2386
        %v2419 = vmin.f32 %v1771, %v2387
        %v2420 = vmin.f32 %v1772, %v2388
        %v2421 = vmin.f32 %v1773, %v2389
        %v2422 = vmin.f32 %v1774, %v2390
        %v2423 = vlaneseq
        %v2424 = vshrl.u32 %v2423, 7
        %v2425 = vsub.s32 0, %v2424
        %v2426 = vrot.slane %v1121, %v2425
        %v2427 = vmul.f32 %v2426, %v1023
        %v2428 = vmul.f32 %v2426, %v1024
        %v2429 = vmul.f32 %v2426, %v1025
        %v2430 = vmul.f32 %v2426, %v1026
        %v2431 = vmul.f32 %v2426, %v1027
        %v2432 = vmul.f32 %v2426, %v1028
        %v2433 = vmul.f32 %v2426, %v1029
        %v2434 = vmul.f32 %v2426, %v1030
        %v2435 = vmul.f32 %v2426, %v1031
        %v2436 = vmul.f32 %v2426, %v1032
        %v2437 = vmul.f32 %v2426, %v1033
        %v2438 = vmul.f32 %v2426, %v1034
        %v2439 = vmul.f32 %v2426, %v1035
        %v2440 = vmul.f32 %v2426, %v1036
        %v2441 = vmul.f32 %v2426, %v1037
        %v2442 = vmul.f32 %v2426, %v1038
        %v2443 = vmul.f32 %v2426, %v1039
        %v2444 = vmul.f32 %v2426, %v1040
        %v2445 = vmul.f32 %v2426, %v1041
        %v2446 = vmul.f32 %v2426, %v1042
        %v2447 = vmul.f32 %v2426, %v1043
        %v2448 = vmul.f32 %v2426, %v1044
        %v2449 = vmul.f32 %v2426, %v1045
        %v2450 = vmul.f32 %v2426, %v1046
        %v2451 = vmul.f32 %v2426, %v1047
        %v2452 = vmul.f32 %v2426, %v1048
        %v2453 = vmul.f32 %v2426, %v1049
        %v2454 = vmul.f32 %v2426, %v1050
        %v2455 = vmul.f32 %v2426, %v1051
        %v2456 = vmul.f32 %v2426, %v1052
        %v2457 = vmul.f32 %v2426, %v1053
        %v2458 = vmul.f32 %v2426, %v1054
        %v2459 = vlaneseq
        %v2460 = vshrl.u32 %v2459, 7
        %v2461 = vsub.s32 1, %v2460
        %v2462 = vrot.slane %v1121, %v2461
        %v2463 = vmul.f32 %v2462, %v1055
        %v2464 = vmul.f32 %v2462, %v1056
        %v2465 = vmul.f32 %v2462, %v1057
        %v2466 = vmul.f32 %v2462, %v1058
        %v2467 = vmul.f32 %v2462, %v1059
        %v2468 = vmul.f32 %v2462, %v1060
        %v2469 = vmul.f32 %v2462, %v1061
        %v2470 = vmul.f32 %v2462, %v1062
        %v2471 = vmul.f32 %v2462, %v1063
        %v2472 = vmul.f32 %v2462, %v1064
        %v2473 = vmul.f32 %v2462, %v1065
        %v2474 = vmul.f32 %v2462, %v1066
        %v2475 = vmul.f32 %v2462, %v1067
        %v2476 = vmul.f32 %v2462, %v1068
        %v2477 = vmul.f32 %v2462, %v1069
        %v2478 = vmul.f32 %v2462, %v1070
        %v2479 = vmul.f32 %v2462, %v1071
        %v2480 = vmul.f32 %v2462, %v1072
        %v2481 = vmul.f32 %v2462, %v1073
        %v2482 = vmul.f32 %v2462, %v1074
        %v2483 = vmul.f32 %v2462, %v1075
        %v2484 = vmul.f32 %v2462, %v1076
        %v2485 = vmul.f32 %v2462, %v1077
        %v2486 = vmul.f32 %v2462, %v1078
        %v2487 = vmul.f32 %v2462, %v1079
        %v2488 = vmul.f32 %v2462, %v1080
        %v2489 = vmul.f32 %v2462, %v1081
        %v2490 = vmul.f32 %v2462, %v1082
        %v2491 = vmul.f32 %v2462, %v1083
        %v2492 = vmul.f32 %v2462, %v1084
        %v2493 = vmul.f32 %v2462, %v1085
        %v2494 = vmul.f32 %v2462, %v1086
        %v2495 = vadd.f32 %v2427, %v2463
        %v2496 = vadd.f32 %v2428, %v2464
        %v2497 = vadd.f32 %v2429, %v2465
        %v2498 = vadd.f32 %v2430, %v2466
        %v2499 = vadd.f32 %v2431, %v2467
        %v2500 = vadd.f32 %v2432, %v2468
        %v2501 = vadd.f32 %v2433, %v2469
        %v2502 = vadd.f32 %v2434, %v2470
        %v2503 = vadd.f32 %v2435, %v2471
        %v2504 = vadd.f32 %v2436, %v2472
        %v2505 = vadd.f32 %v2437, %v2473
        %v2506 = vadd.f32 %v2438, %v2474
        %v2507 = vadd.f32 %v2439, %v2475
        %v2508 = vadd.f32 %v2440, %v2476
        %v2509 = vadd.f32 %v2441, %v2477
        %v2510 = vadd.f32 %v2442, %v2478
        %v2511 = vadd.f32 %v2443, %v2479
        %v2512 = vadd.f32 %v2444, %v2480
        %v2513 = vadd.f32 %v2445, %v2481
        %v2514 = vadd.f32 %v2446, %v2482
        %v2515 = vadd.f32 %v2447, %v2483
        %v2516 = vadd.f32 %v2448, %v2484
        %v2517 = vadd.f32 %v2449, %v2485
        %v2518 = vadd.f32 %v2450, %v2486
        %v2519 = vadd.f32 %v2451, %v2487
        %v2520 = vadd.f32 %v2452, %v2488
        %v2521 = vadd.f32 %v2453, %v2489
        %v2522 = vadd.f32 %v2454, %v2490
        %v2523 = vadd.f32 %v2455, %v2491
        %v2524 = vadd.f32 %v2456, %v2492
        %v2525 = vadd.f32 %v2457, %v2493
        %v2526 = vadd.f32 %v2458, %v2494
        %v2527 = vlaneseq
        %v2528 = vshrl.u32 %v2527, 7
        %v2529 = vsub.s32 2, %v2528
        %v2530 = vrot.slane %v1121, %v2529
        %v2531 = vadd.f32 %v2495, %v2530
        %v2532 = vadd.f32 %v2496, %v2530
        %v2533 = vadd.f32 %v2497, %v2530
        %v2534 = vadd.f32 %v2498, %v2530
        %v2535 = vadd.f32 %v2499, %v2530
        %v2536 = vadd.f32 %v2500, %v2530
        %v2537 = vadd.f32 %v2501, %v2530
        %v2538 = vadd.f32 %v2502, %v2530
        %v2539 = vadd.f32 %v2503, %v2530
        %v2540 = vadd.f32 %v2504, %v2530
        %v2541 = vadd.f32 %v2505, %v2530
        %v2542 = vadd.f32 %v2506, %v2530
        %v2543 = vadd.f32 %v2507, %v2530
        %v2544 = vadd.f32 %v2508, %v2530
        %v2545 = vadd.f32 %v2509, %v2530
        %v2546 = vadd.f32 %v2510, %v2530
        %v2547 = vadd.f32 %v2511, %v2530
        %v2548 = vadd.f32 %v2512, %v2530
        %v2549 = vadd.f32 %v2513, %v2530
        %v2550 = vadd.f32 %v2514, %v2530
        %v2551 = vadd.f32 %v2515, %v2530
        %v2552 = vadd.f32 %v2516, %v2530
        %v2553 = vadd.f32 %v2517, %v2530
        %v2554 = vadd.f32 %v2518, %v2530
        %v2555 = vadd.f32 %v2519, %v2530
        %v2556 = vadd.f32 %v2520, %v2530
        %v2557 = vadd.f32 %v2521, %v2530
        %v2558 = vadd.f32 %v2522, %v2530
        %v2559 = vadd.f32 %v2523, %v2530
        %v2560 = vadd.f32 %v2524, %v2530
        %v2561 = vadd.f32 %v2525, %v2530
        %v2562 = vadd.f32 %v2526, %v2530
        %v2563 = vlaneseq
        %v2564 = vshrl.u32 %v2563, 7
        %v2565 = vsub.s32 3, %v2564
        %v2566 = vrot.slane %v1121, %v2565
        %v2567 = vmul.f32 %v2566, %v1023
        %v2568 = vmul.f32 %v2566, %v1024
        %v2569 = vmul.f32 %v2566, %v1025
        %v2570 = vmul.f32 %v2566, %v1026
        %v2571 = vmul.f32 %v2566, %v1027
        %v2572 = vmul.f32 %v2566, %v1028
        %v2573 = vmul.f32 %v2566, %v1029
        %v2574 = vmul.f32 %v2566, %v1030
        %v2575 = vmul.f32 %v2566, %v1031
        %v2576 = vmul.f32 %v2566, %v1032
        %v2577 = vmul.f32 %v2566, %v1033
        %v2578 = vmul.f32 %v2566, %v1034
        %v2579 = vmul.f32 %v2566, %v1035
        %v2580 = vmul.f32 %v2566, %v1036
        %v2581 = vmul.f32 %v2566, %v1037
        %v2582 = vmul.f32 %v2566, %v1038
        %v2583 = vmul.f32 %v2566, %v1039
        %v2584 = vmul.f32 %v2566, %v1040
        %v2585 = vmul.f32 %v2566, %v1041
        %v2586 = vmul.f32 %v2566, %v1042
        %v2587 = vmul.f32 %v2566, %v1043
        %v2588 = vmul.f32 %v2566, %v1044
        %v2589 = vmul.f32 %v2566, %v1045
        %v2590 = vmul.f32 %v2566, %v1046
        %v2591 = vmul.f32 %v2566, %v1047
        %v2592 = vmul.f32 %v2566, %v1048
        %v2593 = vmul.f32 %v2566, %v1049
        %v2594 = vmul.f32 %v2566, %v1050
        %v2595 = vmul.f32 %v2566, %v1051
        %v2596 = vmul.f32 %v2566, %v1052
        %v2597 = vmul.f32 %v2566, %v1053
        %v2598 = vmul.f32 %v2566, %v1054
        %v2599 = vlaneseq
        %v2600 = vshrl.u32 %v2599, 7
        %v2601 = vsub.s32 4, %v2600
        %v2602 = vrot.slane %v1121, %v2601
        %v2603 = vmul.f32 %v2602, %v1055
        %v2604 = vmul.f32 %v2602, %v1056
        %v2605 = vmul.f32 %v2602, %v1057
        %v2606 = vmul.f32 %v2602, %v1058
        %v2607 = vmul.f32 %v2602, %v1059
        %v2608 = vmul.f32 %v2602, %v1060
        %v2609 = vmul.f32 %v2602, %v1061
        %v2610 = vmul.f32 %v2602, %v1062
        %v2611 = vmul.f32 %v2602, %v1063
        %v2612 = vmul.f32 %v2602, %v1064
        %v2613 = vmul.f32 %v2602, %v1065
        %v2614 = vmul.f32 %v2602, %v1066
        %v2615 = vmul.f32 %v2602, %v1067
        %v2616 = vmul.f32 %v2602, %v1068
        %v2617 = vmul.f32 %v2602, %v1069
        %v2618 = vmul.f32 %v2602, %v1070
        %v2619 = vmul.f32 %v2602, %v1071
        %v2620 = vmul.f32 %v2602, %v1072
        %v2621 = vmul.f32 %v2602, %v1073
        %v2622 = vmul.f32 %v2602, %v1074
        %v2623 = vmul.f32 %v2602, %v1075
        %v2624 = vmul.f32 %v2602, %v1076
        %v2625 = vmul.f32 %v2602, %v1077
        %v2626 = vmul.f32 %v2602, %v1078
        %v2627 = vmul.f32 %v2602, %v1079
        %v2628 = vmul.f32 %v2602, %v1080
        %v2629 = vmul.f32 %v2602, %v1081
        %v2630 = vmul.f32 %v2602, %v1082
        %v2631 = vmul.f32 %v2602, %v1083
        %v2632 = vmul.f32 %v2602, %v1084
        %v2633 = vmul.f32 %v2602, %v1085
        %v2634 = vmul.f32 %v2602, %v1086
        %v2635 = vadd.f32 %v2567, %v2603
        %v2636 = vadd.f32 %v2568, %v2604
        %v2637 = vadd.f32 %v2569, %v2605
        %v2638 = vadd.f32 %v2570, %v2606
        %v2639 = vadd.f32 %v2571, %v2607
        %v2640 = vadd.f32 %v2572, %v2608
        %v2641 = vadd.f32 %v2573, %v2609
        %v2642 = vadd.f32 %v2574, %v2610
        %v2643 = vadd.f32 %v2575, %v2611
        %v2644 = vadd.f32 %v2576, %v2612
        %v2645 = vadd.f32 %v2577, %v2613
        %v2646 = vadd.f32 %v2578, %v2614
        %v2647 = vadd.f32 %v2579, %v2615
        %v2648 = vadd.f32 %v2580, %v2616
        %v2649 = vadd.f32 %v2581, %v2617
        %v2650 = vadd.f32 %v2582, %v2618
        %v2651 = vadd.f32 %v2583, %v2619
        %v2652 = vadd.f32 %v2584, %v2620
        %v2653 = vadd.f32 %v2585, %v2621
        %v2654 = vadd.f32 %v2586, %v2622
        %v2655 = vadd.f32 %v2587, %v2623
        %v2656 = vadd.f32 %v2588, %v2624
        %v2657 = vadd.f32 %v2589, %v2625
        %v2658 = vadd.f32 %v2590, %v2626
        %v2659 = vadd.f32 %v2591, %v2627
        %v2660 = vadd.f32 %v2592, %v2628
        %v2661 = vadd.f32 %v2593, %v2629
        %v2662 = vadd.f32 %v2594, %v2630
        %v2663 = vadd.f32 %v2595, %v2631
        %v2664 = vadd.f32 %v2596, %v2632
        %v2665 = vadd.f32 %v2597, %v2633
        %v2666 = vadd.f32 %v2598, %v2634
        %v2667 = vlaneseq
        %v2668 = vshrl.u32 %v2667, 7
        %v2669 = vsub.s32 5, %v2668
        %v2670 = vrot.slane %v1121, %v2669
        %v2671 = vadd.f32 %v2635, %v2670
        %v2672 = vadd.f32 %v2636, %v2670
        %v2673 = vadd.f32 %v2637, %v2670
        %v2674 = vadd.f32 %v2638, %v2670
        %v2675 = vadd.f32 %v2639, %v2670
        %v2676 = vadd.f32 %v2640, %v2670
        %v2677 = vadd.f32 %v2641, %v2670
        %v2678 = vadd.f32 %v2642, %v2670
        %v2679 = vadd.f32 %v2643, %v2670
        %v2680 = vadd.f32 %v2644, %v2670
        %v2681 = vadd.f32 %v2645, %v2670
        %v2682 = vadd.f32 %v2646, %v2670
        %v2683 = vadd.f32 %v2647, %v2670
        %v2684 = vadd.f32 %v2648, %v2670
        %v2685 = vadd.f32 %v2649, %v2670
        %v2686 = vadd.f32 %v2650, %v2670
        %v2687 = vadd.f32 %v2651, %v2670
        %v2688 = vadd.f32 %v2652, %v2670
        %v2689 = vadd.f32 %v2653, %v2670
        %v2690 = vadd.f32 %v2654, %v2670
        %v2691 = vadd.f32 %v2655, %v2670
        %v2692 = vadd.f32 %v2656, %v2670
        %v2693 = vadd.f32 %v2657, %v2670
        %v2694 = vadd.f32 %v2658, %v2670
        %v2695 = vadd.f32 %v2659, %v2670
        %v2696 = vadd.f32 %v2660, %v2670
        %v2697 = vadd.f32 %v2661, %v2670
        %v2698 = vadd.f32 %v2662, %v2670
        %v2699 = vadd.f32 %v2663, %v2670
        %v2700 = vadd.f32 %v2664, %v2670
        %v2701 = vadd.f32 %v2665, %v2670
        %v2702 = vadd.f32 %v2666, %v2670
        %v2703 = vlaneseq
        %v2704 = vshrl.u32 %v2703, 7
        %v2705 = vsub.s32 6, %v2704
        %v2706 = vrot.slane %v1121, %v2705
        %v2707 = vsub.f32 %v2706, %v2531
        %v2708 = vsub.f32 %v2706, %v2532
        %v2709 = vsub.f32 %v2706, %v2533
        %v2710 = vsub.f32 %v2706, %v2534
        %v2711 = vsub.f32 %v2706, %v2535
        %v2712 = vsub.f32 %v2706, %v2536
        %v2713 = vsub.f32 %v2706, %v2537
        %v2714 = vsub.f32 %v2706, %v2538
        %v2715 = vsub.f32 %v2706, %v2539
        %v2716 = vsub.f32 %v2706, %v2540
        %v2717 = vsub.f32 %v2706, %v2541
        %v2718 = vsub.f32 %v2706, %v2542
        %v2719 = vsub.f32 %v2706, %v2543
        %v2720 = vsub.f32 %v2706, %v2544
        %v2721 = vsub.f32 %v2706, %v2545
        %v2722 = vsub.f32 %v2706, %v2546
        %v2723 = vsub.f32 %v2706, %v2547
        %v2724 = vsub.f32 %v2706, %v2548
        %v2725 = vsub.f32 %v2706, %v2549
        %v2726 = vsub.f32 %v2706, %v2550
        %v2727 = vsub.f32 %v2706, %v2551
        %v2728 = vsub.f32 %v2706, %v2552
        %v2729 = vsub.f32 %v2706, %v2553
        %v2730 = vsub.f32 %v2706, %v2554
        %v2731 = vsub.f32 %v2706, %v2555
        %v2732 = vsub.f32 %v2706, %v2556
        %v2733 = vsub.f32 %v2706, %v2557
        %v2734 = vsub.f32 %v2706, %v2558
        %v2735 = vsub.f32 %v2706, %v2559
        %v2736 = vsub.f32 %v2706, %v2560
        %v2737 = vsub.f32 %v2706, %v2561
        %v2738 = vsub.f32 %v2706, %v2562
        %v2739 = vsub.f32 %v2707, %v2671
        %v2740 = vsub.f32 %v2708, %v2672
        %v2741 = vsub.f32 %v2709, %v2673
        %v2742 = vsub.f32 %v2710, %v2674
        %v2743 = vsub.f32 %v2711, %v2675
        %v2744 = vsub.f32 %v2712, %v2676
        %v2745 = vsub.f32 %v2713, %v2677
        %v2746 = vsub.f32 %v2714, %v2678
        %v2747 = vsub.f32 %v2715, %v2679
        %v2748 = vsub.f32 %v2716, %v2680
        %v2749 = vsub.f32 %v2717, %v2681
        %v2750 = vsub.f32 %v2718, %v2682
        %v2751 = vsub.f32 %v2719, %v2683
        %v2752 = vsub.f32 %v2720, %v2684
        %v2753 = vsub.f32 %v2721, %v2685
        %v2754 = vsub.f32 %v2722, %v2686
        %v2755 = vsub.f32 %v2723, %v2687
        %v2756 = vsub.f32 %v2724, %v2688
        %v2757 = vsub.f32 %v2725, %v2689
        %v2758 = vsub.f32 %v2726, %v2690
        %v2759 = vsub.f32 %v2727, %v2691
        %v2760 = vsub.f32 %v2728, %v2692
        %v2761 = vsub.f32 %v2729, %v2693
        %v2762 = vsub.f32 %v2730, %v2694
        %v2763 = vsub.f32 %v2731, %v2695
        %v2764 = vsub.f32 %v2732, %v2696
        %v2765 = vsub.f32 %v2733, %v2697
        %v2766 = vsub.f32 %v2734, %v2698
        %v2767 = vsub.f32 %v2735, %v2699
        %v2768 = vsub.f32 %v2736, %v2700
        %v2769 = vsub.f32 %v2737, %v2701
        %v2770 = vsub.f32 %v2738, %v2702
        %v2771 = vlaneseq
        %v2772 = vshrl.u32 %v2771, 7
        %v2773 = vsub.s32 7, %v2772
        %v2774 = vrot.slane %v1121, %v2773
        %v2775 = vmul.f32 %v2774, %v1023
        %v2776 = vmul.f32 %v2774, %v1024
        %v2777 = vmul.f32 %v2774, %v1025
        %v2778 = vmul.f32 %v2774, %v1026
        %v2779 = vmul.f32 %v2774, %v1027
        %v2780 = vmul.f32 %v2774, %v1028
        %v2781 = vmul.f32 %v2774, %v1029
        %v2782 = vmul.f32 %v2774, %v1030
        %v2783 = vmul.f32 %v2774, %v1031
        %v2784 = vmul.f32 %v2774, %v1032
        %v2785 = vmul.f32 %v2774, %v1033
        %v2786 = vmul.f32 %v2774, %v1034
        %v2787 = vmul.f32 %v2774, %v1035
        %v2788 = vmul.f32 %v2774, %v1036
        %v2789 = vmul.f32 %v2774, %v1037
        %v2790 = vmul.f32 %v2774, %v1038
        %v2791 = vmul.f32 %v2774, %v1039
        %v2792 = vmul.f32 %v2774, %v1040
        %v2793 = vmul.f32 %v2774, %v1041
        %v2794 = vmul.f32 %v2774, %v1042
        %v2795 = vmul.f32 %v2774, %v1043
        %v2796 = vmul.f32 %v2774, %v1044
        %v2797 = vmul.f32 %v2774, %v1045
        %v2798 = vmul.f32 %v2774, %v1046
        %v2799 = vmul.f32 %v2774, %v1047
        %v2800 = vmul.f32 %v2774, %v1048
        %v2801 = vmul.f32 %v2774, %v1049
        %v2802 = vmul.f32 %v2774, %v1050
        %v2803 = vmul.f32 %v2774, %v1051
        %v2804 = vmul.f32 %v2774, %v1052
        %v2805 = vmul.f32 %v2774, %v1053
        %v2806 = vmul.f32 %v2774, %v1054
        %v2807 = vlaneseq
        %v2808 = vshrl.u32 %v2807, 7
        %v2809 = vsub.s32 0, %v2808
        %v2810 = vrot.slane %v1125, %v2809
        %v2811 = vmul.f32 %v2810, %v1055
        %v2812 = vmul.f32 %v2810, %v1056
        %v2813 = vmul.f32 %v2810, %v1057
        %v2814 = vmul.f32 %v2810, %v1058
        %v2815 = vmul.f32 %v2810, %v1059
        %v2816 = vmul.f32 %v2810, %v1060
        %v2817 = vmul.f32 %v2810, %v1061
        %v2818 = vmul.f32 %v2810, %v1062
        %v2819 = vmul.f32 %v2810, %v1063
        %v2820 = vmul.f32 %v2810, %v1064
        %v2821 = vmul.f32 %v2810, %v1065
        %v2822 = vmul.f32 %v2810, %v1066
        %v2823 = vmul.f32 %v2810, %v1067
        %v2824 = vmul.f32 %v2810, %v1068
        %v2825 = vmul.f32 %v2810, %v1069
        %v2826 = vmul.f32 %v2810, %v1070
        %v2827 = vmul.f32 %v2810, %v1071
        %v2828 = vmul.f32 %v2810, %v1072
        %v2829 = vmul.f32 %v2810, %v1073
        %v2830 = vmul.f32 %v2810, %v1074
        %v2831 = vmul.f32 %v2810, %v1075
        %v2832 = vmul.f32 %v2810, %v1076
        %v2833 = vmul.f32 %v2810, %v1077
        %v2834 = vmul.f32 %v2810, %v1078
        %v2835 = vmul.f32 %v2810, %v1079
        %v2836 = vmul.f32 %v2810, %v1080
        %v2837 = vmul.f32 %v2810, %v1081
        %v2838 = vmul.f32 %v2810, %v1082
        %v2839 = vmul.f32 %v2810, %v1083
        %v2840 = vmul.f32 %v2810, %v1084
        %v2841 = vmul.f32 %v2810, %v1085
        %v2842 = vmul.f32 %v2810, %v1086
        %v2843 = vadd.f32 %v2775, %v2811
        %v2844 = vadd.f32 %v2776, %v2812
        %v2845 = vadd.f32 %v2777, %v2813
        %v2846 = vadd.f32 %v2778, %v2814
        %v2847 = vadd.f32 %v2779, %v2815
        %v2848 = vadd.f32 %v2780, %v2816
        %v2849 = vadd.f32 %v2781, %v2817
        %v2850 = vadd.f32 %v2782, %v2818
        %v2851 = vadd.f32 %v2783, %v2819
        %v2852 = vadd.f32 %v2784, %v2820
        %v2853 = vadd.f32 %v2785, %v2821
        %v2854 = vadd.f32 %v2786, %v2822
        %v2855 = vadd.f32 %v2787, %v2823
        %v2856 = vadd.f32 %v2788, %v2824
        %v2857 = vadd.f32 %v2789, %v2825
        %v2858 = vadd.f32 %v2790, %v2826
        %v2859 = vadd.f32 %v2791, %v2827
        %v2860 = vadd.f32 %v2792, %v2828
        %v2861 = vadd.f32 %v2793, %v2829
        %v2862 = vadd.f32 %v2794, %v2830
        %v2863 = vadd.f32 %v2795, %v2831
        %v2864 = vadd.f32 %v2796, %v2832
        %v2865 = vadd.f32 %v2797, %v2833
        %v2866 = vadd.f32 %v2798, %v2834
        %v2867 = vadd.f32 %v2799, %v2835
        %v2868 = vadd.f32 %v2800, %v2836
        %v2869 = vadd.f32 %v2801, %v2837
        %v2870 = vadd.f32 %v2802, %v2838
        %v2871 = vadd.f32 %v2803, %v2839
        %v2872 = vadd.f32 %v2804, %v2840
        %v2873 = vadd.f32 %v2805, %v2841
        %v2874 = vadd.f32 %v2806, %v2842
        %v2875 = vlaneseq
        %v2876 = vshrl.u32 %v2875, 7
        %v2877 = vsub.s32 1, %v2876
        %v2878 = vrot.slane %v1125, %v2877
        %v2879 = vadd.f32 %v2843, %v2878
        %v2880 = vadd.f32 %v2844, %v2878
        %v2881 = vadd.f32 %v2845, %v2878
        %v2882 = vadd.f32 %v2846, %v2878
        %v2883 = vadd.f32 %v2847, %v2878
        %v2884 = vadd.f32 %v2848, %v2878
        %v2885 = vadd.f32 %v2849, %v2878
        %v2886 = vadd.f32 %v2850, %v2878
        %v2887 = vadd.f32 %v2851, %v2878
        %v2888 = vadd.f32 %v2852, %v2878
        %v2889 = vadd.f32 %v2853, %v2878
        %v2890 = vadd.f32 %v2854, %v2878
        %v2891 = vadd.f32 %v2855, %v2878
        %v2892 = vadd.f32 %v2856, %v2878
        %v2893 = vadd.f32 %v2857, %v2878
        %v2894 = vadd.f32 %v2858, %v2878
        %v2895 = vadd.f32 %v2859, %v2878
        %v2896 = vadd.f32 %v2860, %v2878
        %v2897 = vadd.f32 %v2861, %v2878
        %v2898 = vadd.f32 %v2862, %v2878
        %v2899 = vadd.f32 %v2863, %v2878
        %v2900 = vadd.f32 %v2864, %v2878
        %v2901 = vadd.f32 %v2865, %v2878
        %v2902 = vadd.f32 %v2866, %v2878
        %v2903 = vadd.f32 %v2867, %v2878
        %v2904 = vadd.f32 %v2868, %v2878
        %v2905 = vadd.f32 %v2869, %v2878
        %v2906 = vadd.f32 %v2870, %v2878
        %v2907 = vadd.f32 %v2871, %v2878
        %v2908 = vadd.f32 %v2872, %v2878
        %v2909 = vadd.f32 %v2873, %v2878
        %v2910 = vadd.f32 %v2874, %v2878
        %v2911 = vmin.f32 %v2531, %v2671
        %v2912 = vmin.f32 %v2532, %v2672
        %v2913 = vmin.f32 %v2533, %v2673
        %v2914 = vmin.f32 %v2534, %v2674
        %v2915 = vmin.f32 %v2535, %v2675
        %v2916 = vmin.f32 %v2536, %v2676
        %v2917 = vmin.f32 %v2537, %v2677
        %v2918 = vmin.f32 %v2538, %v2678
        %v2919 = vmin.f32 %v2539, %v2679
        %v2920 = vmin.f32 %v2540, %v2680
        %v2921 = vmin.f32 %v2541, %v2681
        %v2922 = vmin.f32 %v2542, %v2682
        %v2923 = vmin.f32 %v2543, %v2683
        %v2924 = vmin.f32 %v2544, %v2684
        %v2925 = vmin.f32 %v2545, %v2685
        %v2926 = vmin.f32 %v2546, %v2686
        %v2927 = vmin.f32 %v2547, %v2687
        %v2928 = vmin.f32 %v2548, %v2688
        %v2929 = vmin.f32 %v2549, %v2689
        %v2930 = vmin.f32 %v2550, %v2690
        %v2931 = vmin.f32 %v2551, %v2691
        %v2932 = vmin.f32 %v2552, %v2692
        %v2933 = vmin.f32 %v2553, %v2693
        %v2934 = vmin.f32 %v2554, %v2694
        %v2935 = vmin.f32 %v2555, %v2695
        %v2936 = vmin.f32 %v2556, %v2696
        %v2937 = vmin.f32 %v2557, %v2697
        %v2938 = vmin.f32 %v2558, %v2698
        %v2939 = vmin.f32 %v2559, %v2699
        %v2940 = vmin.f32 %v2560, %v2700
        %v2941 = vmin.f32 %v2561, %v2701
        %v2942 = vmin.f32 %v2562, %v2702
        %v2943 = vmin.f32 %v2911, %v2739
        %v2944 = vmin.f32 %v2912, %v2740
        %v2945 = vmin.f32 %v2913, %v2741
        %v2946 = vmin.f32 %v2914, %v2742
        %v2947 = vmin.f32 %v2915, %v2743
        %v2948 = vmin.f32 %v2916, %v2744
        %v2949 = vmin.f32 %v2917, %v2745
        %v2950 = vmin.f32 %v2918, %v2746
        %v2951 = vmin.f32 %v2919, %v2747
        %v2952 = vmin.f32 %v2920, %v2748
        %v2953 = vmin.f32 %v2921, %v2749
        %v2954 = vmin.f32 %v2922, %v2750
        %v2955 = vmin.f32 %v2923, %v2751
        %v2956 = vmin.f32 %v2924, %v2752
        %v2957 = vmin.f32 %v2925, %v2753
        %v2958 = vmin.f32 %v2926, %v2754
        %v2959 = vmin.f32 %v2927, %v2755
        %v2960 = vmin.f32 %v2928, %v2756
        %v2961 = vmin.f32 %v2929, %v2757
        %v2962 = vmin.f32 %v2930, %v2758
        %v2963 = vmin.f32 %v2931, %v2759
        %v2964 = vmin.f32 %v2932, %v2760
        %v2965 = vmin.f32 %v2933, %v2761
        %v2966 = vmin.f32 %v2934, %v2762
        %v2967 = vmin.f32 %v2935, %v2763
        %v2968 = vmin.f32 %v2936, %v2764
        %v2969 = vmin.f32 %v2937, %v2765
        %v2970 = vmin.f32 %v2938, %v2766
        %v2971 = vmin.f32 %v2939, %v2767
        %v2972 = vmin.f32 %v2940, %v2768
        %v2973 = vmin.f32 %v2941, %v2769
        %v2974 = vmin.f32 %v2942, %v2770
        %vm2975 = vcmp.ge.f32.partialorder %v2943, 0.0
        %vm2976 = vcmp.ge.f32.partialorder %v2944, 0.0
        %vm2977 = vcmp.ge.f32.partialorder %v2945, 0.0
        %vm2978 = vcmp.ge.f32.partialorder %v2946, 0.0
        %vm2979 = vcmp.ge.f32.partialorder %v2947, 0.0
        %vm2980 = vcmp.ge.f32.partialorder %v2948, 0.0
        %vm2981 = vcmp.ge.f32.partialorder %v2949, 0.0
        %vm2982 = vcmp.ge.f32.partialorder %v2950, 0.0
        %vm2983 = vcmp.ge.f32.partialorder %v2951, 0.0
        %vm2984 = vcmp.ge.f32.partialorder %v2952, 0.0
        %vm2985 = vcmp.ge.f32.partialorder %v2953, 0.0
        %vm2986 = vcmp.ge.f32.partialorder %v2954, 0.0
        %vm2987 = vcmp.ge.f32.partialorder %v2955, 0.0
        %vm2988 = vcmp.ge.f32.partialorder %v2956, 0.0
        %vm2989 = vcmp.ge.f32.partialorder %v2957, 0.0
        %vm2990 = vcmp.ge.f32.partialorder %v2958, 0.0
        %vm2991 = vcmp.ge.f32.partialorder %v2959, 0.0
        %vm2992 = vcmp.ge.f32.partialorder %v2960, 0.0
        %vm2993 = vcmp.ge.f32.partialorder %v2961, 0.0
        %vm2994 = vcmp.ge.f32.partialorder %v2962, 0.0
        %vm2995 = vcmp.ge.f32.partialorder %v2963, 0.0
        %vm2996 = vcmp.ge.f32.partialorder %v2964, 0.0
        %vm2997 = vcmp.ge.f32.partialorder %v2965, 0.0
        %vm2998 = vcmp.ge.f32.partialorder %v2966, 0.0
        %vm2999 = vcmp.ge.f32.partialorder %v2967, 0.0
        %vm3000 = vcmp.ge.f32.partialorder %v2968, 0.0
        %vm3001 = vcmp.ge.f32.partialorder %v2969, 0.0
        %vm3002 = vcmp.ge.f32.partialorder %v2970, 0.0
        %vm3003 = vcmp.ge.f32.partialorder %v2971, 0.0
        %vm3004 = vcmp.ge.f32.partialorder %v2972, 0.0
        %vm3005 = vcmp.ge.f32.partialorder %v2973, 0.0
        %vm3006 = vcmp.ge.f32.partialorder %v2974, 0.0
        %v3007 = vsel %vm2975, %v2879, 1e+10
        %v3008 = vsel %vm2976, %v2880, 1e+10
        %v3009 = vsel %vm2977, %v2881, 1e+10
        %v3010 = vsel %vm2978, %v2882, 1e+10
        %v3011 = vsel %vm2979, %v2883, 1e+10
        %v3012 = vsel %vm2980, %v2884, 1e+10
        %v3013 = vsel %vm2981, %v2885, 1e+10
        %v3014 = vsel %vm2982, %v2886, 1e+10
        %v3015 = vsel %vm2983, %v2887, 1e+10
        %v3016 = vsel %vm2984, %v2888, 1e+10
        %v3017 = vsel %vm2985, %v2889, 1e+10
        %v3018 = vsel %vm2986, %v2890, 1e+10
        %v3019 = vsel %vm2987, %v2891, 1e+10
        %v3020 = vsel %vm2988, %v2892, 1e+10
        %v3021 = vsel %vm2989, %v2893, 1e+10
        %v3022 = vsel %vm2990, %v2894, 1e+10
        %v3023 = vsel %vm2991, %v2895, 1e+10
        %v3024 = vsel %vm2992, %v2896, 1e+10
        %v3025 = vsel %vm2993, %v2897, 1e+10
        %v3026 = vsel %vm2994, %v2898, 1e+10
        %v3027 = vsel %vm2995, %v2899, 1e+10
        %v3028 = vsel %vm2996, %v2900, 1e+10
        %v3029 = vsel %vm2997, %v2901, 1e+10
        %v3030 = vsel %vm2998, %v2902, 1e+10
        %v3031 = vsel %vm2999, %v2903, 1e+10
        %v3032 = vsel %vm3000, %v2904, 1e+10
        %v3033 = vsel %vm3001, %v2905, 1e+10
        %v3034 = vsel %vm3002, %v2906, 1e+10
        %v3035 = vsel %vm3003, %v2907, 1e+10
        %v3036 = vsel %vm3004, %v2908, 1e+10
        %v3037 = vsel %vm3005, %v2909, 1e+10
        %v3038 = vsel %vm3006, %v2910, 1e+10
        %v3039 = vmin.f32 %v2391, %v3007
        %v3040 = vmin.f32 %v2392, %v3008
        %v3041 = vmin.f32 %v2393, %v3009
        %v3042 = vmin.f32 %v2394, %v3010
        %v3043 = vmin.f32 %v2395, %v3011
        %v3044 = vmin.f32 %v2396, %v3012
        %v3045 = vmin.f32 %v2397, %v3013
        %v3046 = vmin.f32 %v2398, %v3014
        %v3047 = vmin.f32 %v2399, %v3015
        %v3048 = vmin.f32 %v2400, %v3016
        %v3049 = vmin.f32 %v2401, %v3017
        %v3050 = vmin.f32 %v2402, %v3018
        %v3051 = vmin.f32 %v2403, %v3019
        %v3052 = vmin.f32 %v2404, %v3020
        %v3053 = vmin.f32 %v2405, %v3021
        %v3054 = vmin.f32 %v2406, %v3022
        %v3055 = vmin.f32 %v2407, %v3023
        %v3056 = vmin.f32 %v2408, %v3024
        %v3057 = vmin.f32 %v2409, %v3025
        %v3058 = vmin.f32 %v2410, %v3026
        %v3059 = vmin.f32 %v2411, %v3027
        %v3060 = vmin.f32 %v2412, %v3028
        %v3061 = vmin.f32 %v2413, %v3029
        %v3062 = vmin.f32 %v2414, %v3030
        %v3063 = vmin.f32 %v2415, %v3031
        %v3064 = vmin.f32 %v2416, %v3032
        %v3065 = vmin.f32 %v2417, %v3033
        %v3066 = vmin.f32 %v2418, %v3034
        %v3067 = vmin.f32 %v2419, %v3035
        %v3068 = vmin.f32 %v2420, %v3036
        %v3069 = vmin.f32 %v2421, %v3037
        %v3070 = vmin.f32 %v2422, %v3038
        %v3071 = vlaneseq
        %v3072 = vshrl.u32 %v3071, 7
        %v3073 = vsub.s32 0, %v3072
        %v3074 = vrot.slane %v1122, %v3073
        %v3075 = vmul.f32 %v3074, %v1023
        %v3076 = vmul.f32 %v3074, %v1024
        %v3077 = vmul.f32 %v3074, %v1025
        %v3078 = vmul.f32 %v3074, %v1026
        %v3079 = vmul.f32 %v3074, %v1027
        %v3080 = vmul.f32 %v3074, %v1028
        %v3081 = vmul.f32 %v3074, %v1029
        %v3082 = vmul.f32 %v3074, %v1030
        %v3083 = vmul.f32 %v3074, %v1031
        %v3084 = vmul.f32 %v3074, %v1032
        %v3085 = vmul.f32 %v3074, %v1033
        %v3086 = vmul.f32 %v3074, %v1034
        %v3087 = vmul.f32 %v3074, %v1035
        %v3088 = vmul.f32 %v3074, %v1036
        %v3089 = vmul.f32 %v3074, %v1037
        %v3090 = vmul.f32 %v3074, %v1038
        %v3091 = vmul.f32 %v3074, %v1039
        %v3092 = vmul.f32 %v3074, %v1040
        %v3093 = vmul.f32 %v3074, %v1041
        %v3094 = vmul.f32 %v3074, %v1042
        %v3095 = vmul.f32 %v3074, %v1043
        %v3096 = vmul.f32 %v3074, %v1044
        %v3097 = vmul.f32 %v3074, %v1045
        %v3098 = vmul.f32 %v3074, %v1046
        %v3099 = vmul.f32 %v3074, %v1047
        %v3100 = vmul.f32 %v3074, %v1048
        %v3101 = vmul.f32 %v3074, %v1049
        %v3102 = vmul.f32 %v3074, %v1050
        %v3103 = vmul.f32 %v3074, %v1051
        %v3104 = vmul.f32 %v3074, %v1052
        %v3105 = vmul.f32 %v3074, %v1053
        %v3106 = vmul.f32 %v3074, %v1054
        %v3107 = vlaneseq
        %v3108 = vshrl.u32 %v3107, 7
        %v3109 = vsub.s32 1, %v3108
        %v3110 = vrot.slane %v1122, %v3109
        %v3111 = vmul.f32 %v3110, %v1055
        %v3112 = vmul.f32 %v3110, %v1056
        %v3113 = vmul.f32 %v3110, %v1057
        %v3114 = vmul.f32 %v3110, %v1058
        %v3115 = vmul.f32 %v3110, %v1059
        %v3116 = vmul.f32 %v3110, %v1060
        %v3117 = vmul.f32 %v3110, %v1061
        %v3118 = vmul.f32 %v3110, %v1062
        %v3119 = vmul.f32 %v3110, %v1063
        %v3120 = vmul.f32 %v3110, %v1064
        %v3121 = vmul.f32 %v3110, %v1065
        %v3122 = vmul.f32 %v3110, %v1066
        %v3123 = vmul.f32 %v3110, %v1067
        %v3124 = vmul.f32 %v3110, %v1068
        %v3125 = vmul.f32 %v3110, %v1069
        %v3126 = vmul.f32 %v3110, %v1070
        %v3127 = vmul.f32 %v3110, %v1071
        %v3128 = vmul.f32 %v3110, %v1072
        %v3129 = vmul.f32 %v3110, %v1073
        %v3130 = vmul.f32 %v3110, %v1074
        %v3131 = vmul.f32 %v3110, %v1075
        %v3132 = vmul.f32 %v3110, %v1076
        %v3133 = vmul.f32 %v3110, %v1077
        %v3134 = vmul.f32 %v3110, %v1078
        %v3135 = vmul.f32 %v3110, %v1079
        %v3136 = vmul.f32 %v3110, %v1080
        %v3137 = vmul.f32 %v3110, %v1081
        %v3138 = vmul.f32 %v3110, %v1082
        %v3139 = vmul.f32 %v3110, %v1083
        %v3140 = vmul.f32 %v3110, %v1084
        %v3141 = vmul.f32 %v3110, %v1085
        %v3142 = vmul.f32 %v3110, %v1086
        %v3143 = vadd.f32 %v3075, %v3111
        %v3144 = vadd.f32 %v3076, %v3112
        %v3145 = vadd.f32 %v3077, %v3113
        %v3146 = vadd.f32 %v3078, %v3114
        %v3147 = vadd.f32 %v3079, %v3115
        %v3148 = vadd.f32 %v3080, %v3116
        %v3149 = vadd.f32 %v3081, %v3117
        %v3150 = vadd.f32 %v3082, %v3118
        %v3151 = vadd.f32 %v3083, %v3119
        %v3152 = vadd.f32 %v3084, %v3120
        %v3153 = vadd.f32 %v3085, %v3121
        %v3154 = vadd.f32 %v3086, %v3122
        %v3155 = vadd.f32 %v3087, %v3123
        %v3156 = vadd.f32 %v3088, %v3124
        %v3157 = vadd.f32 %v3089, %v3125
        %v3158 = vadd.f32 %v3090, %v3126
        %v3159 = vadd.f32 %v3091, %v3127
        %v3160 = vadd.f32 %v3092, %v3128
        %v3161 = vadd.f32 %v3093, %v3129
        %v3162 = vadd.f32 %v3094, %v3130
        %v3163 = vadd.f32 %v3095, %v3131
        %v3164 = vadd.f32 %v3096, %v3132
        %v3165 = vadd.f32 %v3097, %v3133
        %v3166 = vadd.f32 %v3098, %v3134
        %v3167 = vadd.f32 %v3099, %v3135
        %v3168 = vadd.f32 %v3100, %v3136
        %v3169 = vadd.f32 %v3101, %v3137
        %v3170 = vadd.f32 %v3102, %v3138
        %v3171 = vadd.f32 %v3103, %v3139
        %v3172 = vadd.f32 %v3104, %v3140
        %v3173 = vadd.f32 %v3105, %v3141
        %v3174 = vadd.f32 %v3106, %v3142
        %v3175 = vlaneseq
        %v3176 = vshrl.u32 %v3175, 7
        %v3177 = vsub.s32 2, %v3176
        %v3178 = vrot.slane %v1122, %v3177
        %v3179 = vadd.f32 %v3143, %v3178
        %v3180 = vadd.f32 %v3144, %v3178
        %v3181 = vadd.f32 %v3145, %v3178
        %v3182 = vadd.f32 %v3146, %v3178
        %v3183 = vadd.f32 %v3147, %v3178
        %v3184 = vadd.f32 %v3148, %v3178
        %v3185 = vadd.f32 %v3149, %v3178
        %v3186 = vadd.f32 %v3150, %v3178
        %v3187 = vadd.f32 %v3151, %v3178
        %v3188 = vadd.f32 %v3152, %v3178
        %v3189 = vadd.f32 %v3153, %v3178
        %v3190 = vadd.f32 %v3154, %v3178
        %v3191 = vadd.f32 %v3155, %v3178
        %v3192 = vadd.f32 %v3156, %v3178
        %v3193 = vadd.f32 %v3157, %v3178
        %v3194 = vadd.f32 %v3158, %v3178
        %v3195 = vadd.f32 %v3159, %v3178
        %v3196 = vadd.f32 %v3160, %v3178
        %v3197 = vadd.f32 %v3161, %v3178
        %v3198 = vadd.f32 %v3162, %v3178
        %v3199 = vadd.f32 %v3163, %v3178
        %v3200 = vadd.f32 %v3164, %v3178
        %v3201 = vadd.f32 %v3165, %v3178
        %v3202 = vadd.f32 %v3166, %v3178
        %v3203 = vadd.f32 %v3167, %v3178
        %v3204 = vadd.f32 %v3168, %v3178
        %v3205 = vadd.f32 %v3169, %v3178
        %v3206 = vadd.f32 %v3170, %v3178
        %v3207 = vadd.f32 %v3171, %v3178
        %v3208 = vadd.f32 %v3172, %v3178
        %v3209 = vadd.f32 %v3173, %v3178
        %v3210 = vadd.f32 %v3174, %v3178
        %v3211 = vlaneseq
        %v3212 = vshrl.u32 %v3211, 7
        %v3213 = vsub.s32 3, %v3212
        %v3214 = vrot.slane %v1122, %v3213
        %v3215 = vmul.f32 %v3214, %v1023
        %v3216 = vmul.f32 %v3214, %v1024
        %v3217 = vmul.f32 %v3214, %v1025
        %v3218 = vmul.f32 %v3214, %v1026
        %v3219 = vmul.f32 %v3214, %v1027
        %v3220 = vmul.f32 %v3214, %v1028
        %v3221 = vmul.f32 %v3214, %v1029
        %v3222 = vmul.f32 %v3214, %v1030
        %v3223 = vmul.f32 %v3214, %v1031
        %v3224 = vmul.f32 %v3214, %v1032
        %v3225 = vmul.f32 %v3214, %v1033
        %v3226 = vmul.f32 %v3214, %v1034
        %v3227 = vmul.f32 %v3214, %v1035
        %v3228 = vmul.f32 %v3214, %v1036
        %v3229 = vmul.f32 %v3214, %v1037
        %v3230 = vmul.f32 %v3214, %v1038
        %v3231 = vmul.f32 %v3214, %v1039
        %v3232 = vmul.f32 %v3214, %v1040
        %v3233 = vmul.f32 %v3214, %v1041
        %v3234 = vmul.f32 %v3214, %v1042
        %v3235 = vmul.f32 %v3214, %v1043
        %v3236 = vmul.f32 %v3214, %v1044
        %v3237 = vmul.f32 %v3214, %v1045
        %v3238 = vmul.f32 %v3214, %v1046
        %v3239 = vmul.f32 %v3214, %v1047
        %v3240 = vmul.f32 %v3214, %v1048
        %v3241 = vmul.f32 %v3214, %v1049
        %v3242 = vmul.f32 %v3214, %v1050
        %v3243 = vmul.f32 %v3214, %v1051
        %v3244 = vmul.f32 %v3214, %v1052
        %v3245 = vmul.f32 %v3214, %v1053
        %v3246 = vmul.f32 %v3214, %v1054
        %v3247 = vlaneseq
        %v3248 = vshrl.u32 %v3247, 7
        %v3249 = vsub.s32 4, %v3248
        %v3250 = vrot.slane %v1122, %v3249
        %v3251 = vmul.f32 %v3250, %v1055
        %v3252 = vmul.f32 %v3250, %v1056
        %v3253 = vmul.f32 %v3250, %v1057
        %v3254 = vmul.f32 %v3250, %v1058
        %v3255 = vmul.f32 %v3250, %v1059
        %v3256 = vmul.f32 %v3250, %v1060
        %v3257 = vmul.f32 %v3250, %v1061
        %v3258 = vmul.f32 %v3250, %v1062
        %v3259 = vmul.f32 %v3250, %v1063
        %v3260 = vmul.f32 %v3250, %v1064
        %v3261 = vmul.f32 %v3250, %v1065
        %v3262 = vmul.f32 %v3250, %v1066
        %v3263 = vmul.f32 %v3250, %v1067
        %v3264 = vmul.f32 %v3250, %v1068
        %v3265 = vmul.f32 %v3250, %v1069
        %v3266 = vmul.f32 %v3250, %v1070
        %v3267 = vmul.f32 %v3250, %v1071
        %v3268 = vmul.f32 %v3250, %v1072
        %v3269 = vmul.f32 %v3250, %v1073
        %v3270 = vmul.f32 %v3250, %v1074
        %v3271 = vmul.f32 %v3250, %v1075
        %v3272 = vmul.f32 %v3250, %v1076
        %v3273 = vmul.f32 %v3250, %v1077
        %v3274 = vmul.f32 %v3250, %v1078
        %v3275 = vmul.f32 %v3250, %v1079
        %v3276 = vmul.f32 %v3250, %v1080
        %v3277 = vmul.f32 %v3250, %v1081
        %v3278 = vmul.f32 %v3250, %v1082
        %v3279 = vmul.f32 %v3250, %v1083
        %v3280 = vmul.f32 %v3250, %v1084
        %v3281 = vmul.f32 %v3250, %v1085
        %v3282 = vmul.f32 %v3250, %v1086
        %v3283 = vadd.f32 %v3215, %v3251
        %v3284 = vadd.f32 %v3216, %v3252
        %v3285 = vadd.f32 %v3217, %v3253
        %v3286 = vadd.f32 %v3218, %v3254
        %v3287 = vadd.f32 %v3219, %v3255
        %v3288 = vadd.f32 %v3220, %v3256
        %v3289 = vadd.f32 %v3221, %v3257
        %v3290 = vadd.f32 %v3222, %v3258
        %v3291 = vadd.f32 %v3223, %v3259
        %v3292 = vadd.f32 %v3224, %v3260
        %v3293 = vadd.f32 %v3225, %v3261
        %v3294 = vadd.f32 %v3226, %v3262
        %v3295 = vadd.f32 %v3227, %v3263
        %v3296 = vadd.f32 %v3228, %v3264
        %v3297 = vadd.f32 %v3229, %v3265
        %v3298 = vadd.f32 %v3230, %v3266
        %v3299 = vadd.f32 %v3231, %v3267
        %v3300 = vadd.f32 %v3232, %v3268
        %v3301 = vadd.f32 %v3233, %v3269
        %v3302 = vadd.f32 %v3234, %v3270
        %v3303 = vadd.f32 %v3235, %v3271
        %v3304 = vadd.f32 %v3236, %v3272
        %v3305 = vadd.f32 %v3237, %v3273
        %v3306 = vadd.f32 %v3238, %v3274
        %v3307 = vadd.f32 %v3239, %v3275
        %v3308 = vadd.f32 %v3240, %v3276
        %v3309 = vadd.f32 %v3241, %v3277
        %v3310 = vadd.f32 %v3242, %v3278
        %v3311 = vadd.f32 %v3243, %v3279
        %v3312 = vadd.f32 %v3244, %v3280
        %v3313 = vadd.f32 %v3245, %v3281
        %v3314 = vadd.f32 %v3246, %v3282
        %v3315 = vlaneseq
        %v3316 = vshrl.u32 %v3315, 7
        %v3317 = vsub.s32 5, %v3316
        %v3318 = vrot.slane %v1122, %v3317
        %v3319 = vadd.f32 %v3283, %v3318
        %v3320 = vadd.f32 %v3284, %v3318
        %v3321 = vadd.f32 %v3285, %v3318
        %v3322 = vadd.f32 %v3286, %v3318
        %v3323 = vadd.f32 %v3287, %v3318
        %v3324 = vadd.f32 %v3288, %v3318
        %v3325 = vadd.f32 %v3289, %v3318
        %v3326 = vadd.f32 %v3290, %v3318
        %v3327 = vadd.f32 %v3291, %v3318
        %v3328 = vadd.f32 %v3292, %v3318
        %v3329 = vadd.f32 %v3293, %v3318
        %v3330 = vadd.f32 %v3294, %v3318
        %v3331 = vadd.f32 %v3295, %v3318
        %v3332 = vadd.f32 %v3296, %v3318
        %v3333 = vadd.f32 %v3297, %v3318
        %v3334 = vadd.f32 %v3298, %v3318
        %v3335 = vadd.f32 %v3299, %v3318
        %v3336 = vadd.f32 %v3300, %v3318
        %v3337 = vadd.f32 %v3301, %v3318
        %v3338 = vadd.f32 %v3302, %v3318
        %v3339 = vadd.f32 %v3303, %v3318
        %v3340 = vadd.f32 %v3304, %v3318
        %v3341 = vadd.f32 %v3305, %v3318
        %v3342 = vadd.f32 %v3306, %v3318
        %v3343 = vadd.f32 %v3307, %v3318
        %v3344 = vadd.f32 %v3308, %v3318
        %v3345 = vadd.f32 %v3309, %v3318
        %v3346 = vadd.f32 %v3310, %v3318
        %v3347 = vadd.f32 %v3311, %v3318
        %v3348 = vadd.f32 %v3312, %v3318
        %v3349 = vadd.f32 %v3313, %v3318
        %v3350 = vadd.f32 %v3314, %v3318
        %v3351 = vlaneseq
        %v3352 = vshrl.u32 %v3351, 7
        %v3353 = vsub.s32 6, %v3352
        %v3354 = vrot.slane %v1122, %v3353
        %v3355 = vsub.f32 %v3354, %v3179
        %v3356 = vsub.f32 %v3354, %v3180
        %v3357 = vsub.f32 %v3354, %v3181
        %v3358 = vsub.f32 %v3354, %v3182
        %v3359 = vsub.f32 %v3354, %v3183
        %v3360 = vsub.f32 %v3354, %v3184
        %v3361 = vsub.f32 %v3354, %v3185
        %v3362 = vsub.f32 %v3354, %v3186
        %v3363 = vsub.f32 %v3354, %v3187
        %v3364 = vsub.f32 %v3354, %v3188
        %v3365 = vsub.f32 %v3354, %v3189
        %v3366 = vsub.f32 %v3354, %v3190
        %v3367 = vsub.f32 %v3354, %v3191
        %v3368 = vsub.f32 %v3354, %v3192
        %v3369 = vsub.f32 %v3354, %v3193
        %v3370 = vsub.f32 %v3354, %v3194
        %v3371 = vsub.f32 %v3354, %v3195
        %v3372 = vsub.f32 %v3354, %v3196
        %v3373 = vsub.f32 %v3354, %v3197
        %v3374 = vsub.f32 %v3354, %v3198
        %v3375 = vsub.f32 %v3354, %v3199
        %v3376 = vsub.f32 %v3354, %v3200
        %v3377 = vsub.f32 %v3354, %v3201
        %v3378 = vsub.f32 %v3354, %v3202
        %v3379 = vsub.f32 %v3354, %v3203
        %v3380 = vsub.f32 %v3354, %v3204
        %v3381 = vsub.f32 %v3354, %v3205
        %v3382 = vsub.f32 %v3354, %v3206
        %v3383 = vsub.f32 %v3354, %v3207
        %v3384 = vsub.f32 %v3354, %v3208
        %v3385 = vsub.f32 %v3354, %v3209
        %v3386 = vsub.f32 %v3354, %v3210
        %v3387 = vsub.f32 %v3355, %v3319
        %v3388 = vsub.f32 %v3356, %v3320
        %v3389 = vsub.f32 %v3357, %v3321
        %v3390 = vsub.f32 %v3358, %v3322
        %v3391 = vsub.f32 %v3359, %v3323
        %v3392 = vsub.f32 %v3360, %v3324
        %v3393 = vsub.f32 %v3361, %v3325
        %v3394 = vsub.f32 %v3362, %v3326
        %v3395 = vsub.f32 %v3363, %v3327
        %v3396 = vsub.f32 %v3364, %v3328
        %v3397 = vsub.f32 %v3365, %v3329
        %v3398 = vsub.f32 %v3366, %v3330
        %v3399 = vsub.f32 %v3367, %v3331
        %v3400 = vsub.f32 %v3368, %v3332
        %v3401 = vsub.f32 %v3369, %v3333
        %v3402 = vsub.f32 %v3370, %v3334
        %v3403 = vsub.f32 %v3371, %v3335
        %v3404 = vsub.f32 %v3372, %v3336
        %v3405 = vsub.f32 %v3373, %v3337
        %v3406 = vsub.f32 %v3374, %v3338
        %v3407 = vsub.f32 %v3375, %v3339
        %v3408 = vsub.f32 %v3376, %v3340
        %v3409 = vsub.f32 %v3377, %v3341
        %v3410 = vsub.f32 %v3378, %v3342
        %v3411 = vsub.f32 %v3379, %v3343
        %v3412 = vsub.f32 %v3380, %v3344
        %v3413 = vsub.f32 %v3381, %v3345
        %v3414 = vsub.f32 %v3382, %v3346
        %v3415 = vsub.f32 %v3383, %v3347
        %v3416 = vsub.f32 %v3384, %v3348
        %v3417 = vsub.f32 %v3385, %v3349
        %v3418 = vsub.f32 %v3386, %v3350
        %v3419 = vlaneseq
        %v3420 = vshrl.u32 %v3419, 7
        %v3421 = vsub.s32 7, %v3420
        %v3422 = vrot.slane %v1122, %v3421
        %v3423 = vmul.f32 %v3422, %v1023
        %v3424 = vmul.f32 %v3422, %v1024
        %v3425 = vmul.f32 %v3422, %v1025
        %v3426 = vmul.f32 %v3422, %v1026
        %v3427 = vmul.f32 %v3422, %v1027
        %v3428 = vmul.f32 %v3422, %v1028
        %v3429 = vmul.f32 %v3422, %v1029
        %v3430 = vmul.f32 %v3422, %v1030
        %v3431 = vmul.f32 %v3422, %v1031
        %v3432 = vmul.f32 %v3422, %v1032
        %v3433 = vmul.f32 %v3422, %v1033
        %v3434 = vmul.f32 %v3422, %v1034
        %v3435 = vmul.f32 %v3422, %v1035
        %v3436 = vmul.f32 %v3422, %v1036
        %v3437 = vmul.f32 %v3422, %v1037
        %v3438 = vmul.f32 %v3422, %v1038
        %v3439 = vmul.f32 %v3422, %v1039
        %v3440 = vmul.f32 %v3422, %v1040
        %v3441 = vmul.f32 %v3422, %v1041
        %v3442 = vmul.f32 %v3422, %v1042
        %v3443 = vmul.f32 %v3422, %v1043
        %v3444 = vmul.f32 %v3422, %v1044
        %v3445 = vmul.f32 %v3422, %v1045
        %v3446 = vmul.f32 %v3422, %v1046
        %v3447 = vmul.f32 %v3422, %v1047
        %v3448 = vmul.f32 %v3422, %v1048
        %v3449 = vmul.f32 %v3422, %v1049
        %v3450 = vmul.f32 %v3422, %v1050
        %v3451 = vmul.f32 %v3422, %v1051
        %v3452 = vmul.f32 %v3422, %v1052
        %v3453 = vmul.f32 %v3422, %v1053
        %v3454 = vmul.f32 %v3422, %v1054
        %v3455 = vlaneseq
        %v3456 = vshrl.u32 %v3455, 7
        %v3457 = vsub.s32 0, %v3456
        %v3458 = vrot.slane %v1126, %v3457
        %v3459 = vmul.f32 %v3458, %v1055
        %v3460 = vmul.f32 %v3458, %v1056
        %v3461 = vmul.f32 %v3458, %v1057
        %v3462 = vmul.f32 %v3458, %v1058
        %v3463 = vmul.f32 %v3458, %v1059
        %v3464 = vmul.f32 %v3458, %v1060
        %v3465 = vmul.f32 %v3458, %v1061
        %v3466 = vmul.f32 %v3458, %v1062
        %v3467 = vmul.f32 %v3458, %v1063
        %v3468 = vmul.f32 %v3458, %v1064
        %v3469 = vmul.f32 %v3458, %v1065
        %v3470 = vmul.f32 %v3458, %v1066
        %v3471 = vmul.f32 %v3458, %v1067
        %v3472 = vmul.f32 %v3458, %v1068
        %v3473 = vmul.f32 %v3458, %v1069
        %v3474 = vmul.f32 %v3458, %v1070
        %v3475 = vmul.f32 %v3458, %v1071
        %v3476 = vmul.f32 %v3458, %v1072
        %v3477 = vmul.f32 %v3458, %v1073
        %v3478 = vmul.f32 %v3458, %v1074
        %v3479 = vmul.f32 %v3458, %v1075
        %v3480 = vmul.f32 %v3458, %v1076
        %v3481 = vmul.f32 %v3458, %v1077
        %v3482 = vmul.f32 %v3458, %v1078
        %v3483 = vmul.f32 %v3458, %v1079
        %v3484 = vmul.f32 %v3458, %v1080
        %v3485 = vmul.f32 %v3458, %v1081
        %v3486 = vmul.f32 %v3458, %v1082
        %v3487 = vmul.f32 %v3458, %v1083
        %v3488 = vmul.f32 %v3458, %v1084
        %v3489 = vmul.f32 %v3458, %v1085
        %v3490 = vmul.f32 %v3458, %v1086
        %v3491 = vadd.f32 %v3423, %v3459
        %v3492 = vadd.f32 %v3424, %v3460
        %v3493 = vadd.f32 %v3425, %v3461
        %v3494 = vadd.f32 %v3426, %v3462
        %v3495 = vadd.f32 %v3427, %v3463
        %v3496 = vadd.f32 %v3428, %v3464
        %v3497 = vadd.f32 %v3429, %v3465
        %v3498 = vadd.f32 %v3430, %v3466
        %v3499 = vadd.f32 %v3431, %v3467
        %v3500 = vadd.f32 %v3432, %v3468
        %v3501 = vadd.f32 %v3433, %v3469
        %v3502 = vadd.f32 %v3434, %v3470
        %v3503 = vadd.f32 %v3435, %v3471
        %v3504 = vadd.f32 %v3436, %v3472
        %v3505 = vadd.f32 %v3437, %v3473
        %v3506 = vadd.f32 %v3438, %v3474
        %v3507 = vadd.f32 %v3439, %v3475
        %v3508 = vadd.f32 %v3440, %v3476
        %v3509 = vadd.f32 %v3441, %v3477
        %v3510 = vadd.f32 %v3442, %v3478
        %v3511 = vadd.f32 %v3443, %v3479
        %v3512 = vadd.f32 %v3444, %v3480
        %v3513 = vadd.f32 %v3445, %v3481
        %v3514 = vadd.f32 %v3446, %v3482
        %v3515 = vadd.f32 %v3447, %v3483
        %v3516 = vadd.f32 %v3448, %v3484
        %v3517 = vadd.f32 %v3449, %v3485
        %v3518 = vadd.f32 %v3450, %v3486
        %v3519 = vadd.f32 %v3451, %v3487
        %v3520 = vadd.f32 %v3452, %v3488
        %v3521 = vadd.f32 %v3453, %v3489
        %v3522 = vadd.f32 %v3454, %v3490
        %v3523 = vlaneseq
        %v3524 = vshrl.u32 %v3523, 7
        %v3525 = vsub.s32 1, %v3524
        %v3526 = vrot.slane %v1126, %v3525
        %v3527 = vadd.f32 %v3491, %v3526
        %v3528 = vadd.f32 %v3492, %v3526
        %v3529 = vadd.f32 %v3493, %v3526
        %v3530 = vadd.f32 %v3494, %v3526
        %v3531 = vadd.f32 %v3495, %v3526
        %v3532 = vadd.f32 %v3496, %v3526
        %v3533 = vadd.f32 %v3497, %v3526
        %v3534 = vadd.f32 %v3498, %v3526
        %v3535 = vadd.f32 %v3499, %v3526
        %v3536 = vadd.f32 %v3500, %v3526
        %v3537 = vadd.f32 %v3501, %v3526
        %v3538 = vadd.f32 %v3502, %v3526
        %v3539 = vadd.f32 %v3503, %v3526
        %v3540 = vadd.f32 %v3504, %v3526
        %v3541 = vadd.f32 %v3505, %v3526
        %v3542 = vadd.f32 %v3506, %v3526
        %v3543 = vadd.f32 %v3507, %v3526
        %v3544 = vadd.f32 %v3508, %v3526
        %v3545 = vadd.f32 %v3509, %v3526
        %v3546 = vadd.f32 %v3510, %v3526
        %v3547 = vadd.f32 %v3511, %v3526
        %v3548 = vadd.f32 %v3512, %v3526
        %v3549 = vadd.f32 %v3513, %v3526
        %v3550 = vadd.f32 %v3514, %v3526
        %v3551 = vadd.f32 %v3515, %v3526
        %v3552 = vadd.f32 %v3516, %v3526
        %v3553 = vadd.f32 %v3517, %v3526
        %v3554 = vadd.f32 %v3518, %v3526
        %v3555 = vadd.f32 %v3519, %v3526
        %v3556 = vadd.f32 %v3520, %v3526
        %v3557 = vadd.f32 %v3521, %v3526
        %v3558 = vadd.f32 %v3522, %v3526
        %v3559 = vmin.f32 %v3179, %v3319
        %v3560 = vmin.f32 %v3180, %v3320
        %v3561 = vmin.f32 %v3181, %v3321
        %v3562 = vmin.f32 %v3182, %v3322
        %v3563 = vmin.f32 %v3183, %v3323
        %v3564 = vmin.f32 %v3184, %v3324
        %v3565 = vmin.f32 %v3185, %v3325
        %v3566 = vmin.f32 %v3186, %v3326
        %v3567 = vmin.f32 %v3187, %v3327
        %v3568 = vmin.f32 %v3188, %v3328
        %v3569 = vmin.f32 %v3189, %v3329
        %v3570 = vmin.f32 %v3190, %v3330
        %v3571 = vmin.f32 %v3191, %v3331
        %v3572 = vmin.f32 %v3192, %v3332
        %v3573 = vmin.f32 %v3193, %v3333
        %v3574 = vmin.f32 %v3194, %v3334
        %v3575 = vmin.f32 %v3195, %v3335
        %v3576 = vmin.f32 %v3196, %v3336
        %v3577 = vmin.f32 %v3197, %v3337
        %v3578 = vmin.f32 %v3198, %v3338
        %v3579 = vmin.f32 %v3199, %v3339
        %v3580 = vmin.f32 %v3200, %v3340
        %v3581 = vmin.f32 %v3201, %v3341
        %v3582 = vmin.f32 %v3202, %v3342
        %v3583 = vmin.f32 %v3203, %v3343
        %v3584 = vmin.f32 %v3204, %v3344
        %v3585 = vmin.f32 %v3205, %v3345
        %v3586 = vmin.f32 %v3206, %v3346
        %v3587 = vmin.f32 %v3207, %v3347
        %v3588 = vmin.f32 %v3208, %v3348
        %v3589 = vmin.f32 %v3209, %v3349
        %v3590 = vmin.f32 %v3210, %v3350
        %v3591 = vmin.f32 %v3559, %v3387
        %v3592 = vmin.f32 %v3560, %v3388
        %v3593 = vmin.f32 %v3561, %v3389
        %v3594 = vmin.f32 %v3562, %v3390
        %v3595 = vmin.f32 %v3563, %v3391
        %v3596 = vmin.f32 %v3564, %v3392
        %v3597 = vmin.f32 %v3565, %v3393
        %v3598 = vmin.f32 %v3566, %v3394
        %v3599 = vmin.f32 %v3567, %v3395
        %v3600 = vmin.f32 %v3568, %v3396
        %v3601 = vmin.f32 %v3569, %v3397
        %v3602 = vmin.f32 %v3570, %v3398
        %v3603 = vmin.f32 %v3571, %v3399
        %v3604 = vmin.f32 %v3572, %v3400
        %v3605 = vmin.f32 %v3573, %v3401
        %v3606 = vmin.f32 %v3574, %v3402
        %v3607 = vmin.f32 %v3575, %v3403
        %v3608 = vmin.f32 %v3576, %v3404
        %v3609 = vmin.f32 %v3577, %v3405
        %v3610 = vmin.f32 %v3578, %v3406
        %v3611 = vmin.f32 %v3579, %v3407
        %v3612 = vmin.f32 %v3580, %v3408
        %v3613 = vmin.f32 %v3581, %v3409
        %v3614 = vmin.f32 %v3582, %v3410
        %v3615 = vmin.f32 %v3583, %v3411
        %v3616 = vmin.f32 %v3584, %v3412
        %v3617 = vmin.f32 %v3585, %v3413
        %v3618 = vmin.f32 %v3586, %v3414
        %v3619 = vmin.f32 %v3587, %v3415
        %v3620 = vmin.f32 %v3588, %v3416
        %v3621 = vmin.f32 %v3589, %v3417
        %v3622 = vmin.f32 %v3590, %v3418
        %vm3623 = vcmp.ge.f32.partialorder %v3591, 0.0
        %vm3624 = vcmp.ge.f32.partialorder %v3592, 0.0
        %vm3625 = vcmp.ge.f32.partialorder %v3593, 0.0
        %vm3626 = vcmp.ge.f32.partialorder %v3594, 0.0
        %vm3627 = vcmp.ge.f32.partialorder %v3595, 0.0
        %vm3628 = vcmp.ge.f32.partialorder %v3596, 0.0
        %vm3629 = vcmp.ge.f32.partialorder %v3597, 0.0
        %vm3630 = vcmp.ge.f32.partialorder %v3598, 0.0
        %vm3631 = vcmp.ge.f32.partialorder %v3599, 0.0
        %vm3632 = vcmp.ge.f32.partialorder %v3600, 0.0
        %vm3633 = vcmp.ge.f32.partialorder %v3601, 0.0
        %vm3634 = vcmp.ge.f32.partialorder %v3602, 0.0
        %vm3635 = vcmp.ge.f32.partialorder %v3603, 0.0
        %vm3636 = vcmp.ge.f32.partialorder %v3604, 0.0
        %vm3637 = vcmp.ge.f32.partialorder %v3605, 0.0
        %vm3638 = vcmp.ge.f32.partialorder %v3606, 0.0
        %vm3639 = vcmp.ge.f32.partialorder %v3607, 0.0
        %vm3640 = vcmp.ge.f32.partialorder %v3608, 0.0
        %vm3641 = vcmp.ge.f32.partialorder %v3609, 0.0
        %vm3642 = vcmp.ge.f32.partialorder %v3610, 0.0
        %vm3643 = vcmp.ge.f32.partialorder %v3611, 0.0
        %vm3644 = vcmp.ge.f32.partialorder %v3612, 0.0
        %vm3645 = vcmp.ge.f32.partialorder %v3613, 0.0
        %vm3646 = vcmp.ge.f32.partialorder %v3614, 0.0
        %vm3647 = vcmp.ge.f32.partialorder %v3615, 0.0
        %vm3648 = vcmp.ge.f32.partialorder %v3616, 0.0
        %vm3649 = vcmp.ge.f32.partialorder %v3617, 0.0
        %vm3650 = vcmp.ge.f32.partialorder %v3618, 0.0
        %vm3651 = vcmp.ge.f32.partialorder %v3619, 0.0
        %vm3652 = vcmp.ge.f32.partialorder %v3620, 0.0
        %vm3653 = vcmp.ge.f32.partialorder %v3621, 0.0
        %vm3654 = vcmp.ge.f32.partialorder %v3622, 0.0
        %v3655 = vsel %vm3623, %v3527, 1e+10
        %v3656 = vsel %vm3624, %v3528, 1e+10
        %v3657 = vsel %vm3625, %v3529, 1e+10
        %v3658 = vsel %vm3626, %v3530, 1e+10
        %v3659 = vsel %vm3627, %v3531, 1e+10
        %v3660 = vsel %vm3628, %v3532, 1e+10
        %v3661 = vsel %vm3629, %v3533, 1e+10
        %v3662 = vsel %vm3630, %v3534, 1e+10
        %v3663 = vsel %vm3631, %v3535, 1e+10
        %v3664 = vsel %vm3632, %v3536, 1e+10
        %v3665 = vsel %vm3633, %v3537, 1e+10
        %v3666 = vsel %vm3634, %v3538, 1e+10
        %v3667 = vsel %vm3635, %v3539, 1e+10
        %v3668 = vsel %vm3636, %v3540, 1e+10
        %v3669 = vsel %vm3637, %v3541, 1e+10
        %v3670 = vsel %vm3638, %v3542, 1e+10
        %v3671 = vsel %vm3639, %v3543, 1e+10
        %v3672 = vsel %vm3640, %v3544, 1e+10
        %v3673 = vsel %vm3641, %v3545, 1e+10
        %v3674 = vsel %vm3642, %v3546, 1e+10
        %v3675 = vsel %vm3643, %v3547, 1e+10
        %v3676 = vsel %vm3644, %v3548, 1e+10
        %v3677 = vsel %vm3645, %v3549, 1e+10
        %v3678 = vsel %vm3646, %v3550, 1e+10
        %v3679 = vsel %vm3647, %v3551, 1e+10
        %v3680 = vsel %vm3648, %v3552, 1e+10
        %v3681 = vsel %vm3649, %v3553, 1e+10
        %v3682 = vsel %vm3650, %v3554, 1e+10
        %v3683 = vsel %vm3651, %v3555, 1e+10
        %v3684 = vsel %vm3652, %v3556, 1e+10
        %v3685 = vsel %vm3653, %v3557, 1e+10
        %v3686 = vsel %vm3654, %v3558, 1e+10
        %v3687 = vmin.f32 %v3039, %v3655
        %v3688 = vmin.f32 %v3040, %v3656
        %v3689 = vmin.f32 %v3041, %v3657
        %v3690 = vmin.f32 %v3042, %v3658
        %v3691 = vmin.f32 %v3043, %v3659
        %v3692 = vmin.f32 %v3044, %v3660
        %v3693 = vmin.f32 %v3045, %v3661
        %v3694 = vmin.f32 %v3046, %v3662
        %v3695 = vmin.f32 %v3047, %v3663
        %v3696 = vmin.f32 %v3048, %v3664
        %v3697 = vmin.f32 %v3049, %v3665
        %v3698 = vmin.f32 %v3050, %v3666
        %v3699 = vmin.f32 %v3051, %v3667
        %v3700 = vmin.f32 %v3052, %v3668
        %v3701 = vmin.f32 %v3053, %v3669
        %v3702 = vmin.f32 %v3054, %v3670
        %v3703 = vmin.f32 %v3055, %v3671
        %v3704 = vmin.f32 %v3056, %v3672
        %v3705 = vmin.f32 %v3057, %v3673
        %v3706 = vmin.f32 %v3058, %v3674
        %v3707 = vmin.f32 %v3059, %v3675
        %v3708 = vmin.f32 %v3060, %v3676
        %v3709 = vmin.f32 %v3061, %v3677
        %v3710 = vmin.f32 %v3062, %v3678
        %v3711 = vmin.f32 %v3063, %v3679
        %v3712 = vmin.f32 %v3064, %v3680
        %v3713 = vmin.f32 %v3065, %v3681
        %v3714 = vmin.f32 %v3066, %v3682
        %v3715 = vmin.f32 %v3067, %v3683
        %v3716 = vmin.f32 %v3068, %v3684
        %v3717 = vmin.f32 %v3069, %v3685
        %v3718 = vmin.f32 %v3070, %v3686
        %3719 = vst [vmem:[#allocation2] sm:$0xff] %v3687
        %3720 = vst [vmem:[#allocation2 + $0x8] sm:$0xff] %v3688
        %3721 = vst [vmem:[#allocation2 + $0x10] sm:$0xff] %v3689
        %3722 = vst [vmem:[#allocation2 + $0x18] sm:$0xff] %v3690
        %3723 = vst [vmem:[#allocation2 + $0x20] sm:$0xff] %v3691
        %3724 = vst [vmem:[#allocation2 + $0x28] sm:$0xff] %v3692
        %3725 = vst [vmem:[#allocation2 + $0x30] sm:$0xff] %v3693
        %3726 = vst [vmem:[#allocation2 + $0x38] sm:$0xff] %v3694
        %3727 = vst [vmem:[#allocation2 + $0x40] sm:$0xff] %v3695
        %3728 = vst [vmem:[#allocation2 + $0x48] sm:$0xff] %v3696
        %3729 = vst [vmem:[#allocation2 + $0x50] sm:$0xff] %v3697
        %3730 = vst [vmem:[#allocation2 + $0x58] sm:$0xff] %v3698
        %3731 = vst [vmem:[#allocation2 + $0x60] sm:$0xff] %v3699
        %3732 = vst [vmem:[#allocation2 + $0x68] sm:$0xff] %v3700
        %3733 = vst [vmem:[#allocation2 + $0x70] sm:$0xff] %v3701
        %3734 = vst [vmem:[#allocation2 + $0x78] sm:$0xff] %v3702
        %3735 = vst [vmem:[#allocation2 + $0x80] sm:$0xff] %v3703
        %3736 = vst [vmem:[#allocation2 + $0x88] sm:$0xff] %v3704
        %3737 = vst [vmem:[#allocation2 + $0x90] sm:$0xff] %v3705
        %3738 = vst [vmem:[#allocation2 + $0x98] sm:$0xff] %v3706
        %3739 = vst [vmem:[#allocation2 + $0xa0] sm:$0xff] %v3707
        %3740 = vst [vmem:[#allocation2 + $0xa8] sm:$0xff] %v3708
        %3741 = vst [vmem:[#allocation2 + $0xb0] sm:$0xff] %v3709
        %3742 = vst [vmem:[#allocation2 + $0xb8] sm:$0xff] %v3710
        %3743 = vst [vmem:[#allocation2 + $0xc0] sm:$0xff] %v3711
        %3744 = vst [vmem:[#allocation2 + $0xc8] sm:$0xff] %v3712
        %3745 = vst [vmem:[#allocation2 + $0xd0] sm:$0xff] %v3713
        %3746 = vst [vmem:[#allocation2 + $0xd8] sm:$0xff] %v3714
        %3747 = vst [vmem:[#allocation2 + $0xe0] sm:$0xff] %v3715
        %3748 = vst [vmem:[#allocation2 + $0xe8] sm:$0xff] %v3716
        %3749 = vst [vmem:[#allocation2 + $0xf0] sm:$0xff] %v3717
        %3750 = vst [vmem:[#allocation2 + $0xf8] sm:$0xff] %v3718
        // Predicated region
        $region29: #{tpu_custom_call.1} parent=23 // pred_check
          %p3751 = pneg %p152
        $region30: #{tpu_custom_call.1} parent=23 // pred_check_branch
          %3753 = sbr.rel (%p3751) target = $region32
        $region31: #{tpu_custom_call.1} parent=23 // pred_region
          %v3754 = vld [vmem:[#allocation2] sm:$0xff]
          %v3755 = vld [vmem:[#allocation2 + $0x8] sm:$0xff]
          %v3756 = vld [vmem:[#allocation2 + $0x10] sm:$0xff]
          %v3757 = vld [vmem:[#allocation2 + $0x18] sm:$0xff]
          %v3758 = vld [vmem:[#allocation2 + $0x20] sm:$0xff]
          %v3759 = vld [vmem:[#allocation2 + $0x28] sm:$0xff]
          %v3760 = vld [vmem:[#allocation2 + $0x30] sm:$0xff]
          %v3761 = vld [vmem:[#allocation2 + $0x38] sm:$0xff]
          %v3762 = vld [vmem:[#allocation2 + $0x40] sm:$0xff]
          %v3763 = vld [vmem:[#allocation2 + $0x48] sm:$0xff]
          %v3764 = vld [vmem:[#allocation2 + $0x50] sm:$0xff]
          %v3765 = vld [vmem:[#allocation2 + $0x58] sm:$0xff]
          %v3766 = vld [vmem:[#allocation2 + $0x60] sm:$0xff]
          %v3767 = vld [vmem:[#allocation2 + $0x68] sm:$0xff]
          %v3768 = vld [vmem:[#allocation2 + $0x70] sm:$0xff]
          %v3769 = vld [vmem:[#allocation2 + $0x78] sm:$0xff]
          %v3770 = vld [vmem:[#allocation2 + $0x80] sm:$0xff]
          %v3771 = vld [vmem:[#allocation2 + $0x88] sm:$0xff]
          %v3772 = vld [vmem:[#allocation2 + $0x90] sm:$0xff]
          %v3773 = vld [vmem:[#allocation2 + $0x98] sm:$0xff]
          %v3774 = vld [vmem:[#allocation2 + $0xa0] sm:$0xff]
          %v3775 = vld [vmem:[#allocation2 + $0xa8] sm:$0xff]
          %v3776 = vld [vmem:[#allocation2 + $0xb0] sm:$0xff]
          %v3777 = vld [vmem:[#allocation2 + $0xb8] sm:$0xff]
          %v3778 = vld [vmem:[#allocation2 + $0xc0] sm:$0xff]
          %v3779 = vld [vmem:[#allocation2 + $0xc8] sm:$0xff]
          %v3780 = vld [vmem:[#allocation2 + $0xd0] sm:$0xff]
          %v3781 = vld [vmem:[#allocation2 + $0xd8] sm:$0xff]
          %v3782 = vld [vmem:[#allocation2 + $0xe0] sm:$0xff]
          %v3783 = vld [vmem:[#allocation2 + $0xe8] sm:$0xff]
          %v3784 = vld [vmem:[#allocation2 + $0xf0] sm:$0xff]
          %v3785 = vld [vmem:[#allocation2 + $0xf8] sm:$0xff]
          %3786 = vmin.xlane.f32.xlu0 %v3754
          %v3787 = vpop.xlane.xlu0 %3786
          %3788 = vmin.xlane.f32.xlu0 %v3755
          %v3789 = vpop.xlane.xlu0 %3788
          %3790 = vmin.xlane.f32.xlu0 %v3756
          %v3791 = vpop.xlane.xlu0 %3790
          %3792 = vmin.xlane.f32.xlu0 %v3757
          %v3793 = vpop.xlane.xlu0 %3792
          %3794 = vmin.xlane.f32.xlu0 %v3758
          %v3795 = vpop.xlane.xlu0 %3794
          %3796 = vmin.xlane.f32.xlu0 %v3759
          %v3797 = vpop.xlane.xlu0 %3796
          %3798 = vmin.xlane.f32.xlu0 %v3760
          %v3799 = vpop.xlane.xlu0 %3798
          %3800 = vmin.xlane.f32.xlu0 %v3761
          %v3801 = vpop.xlane.xlu0 %3800
          %3802 = vmin.xlane.f32.xlu0 %v3762
          %v3803 = vpop.xlane.xlu0 %3802
          %3804 = vmin.xlane.f32.xlu0 %v3763
          %v3805 = vpop.xlane.xlu0 %3804
          %3806 = vmin.xlane.f32.xlu0 %v3764
          %v3807 = vpop.xlane.xlu0 %3806
          %3808 = vmin.xlane.f32.xlu0 %v3765
          %v3809 = vpop.xlane.xlu0 %3808
          %3810 = vmin.xlane.f32.xlu0 %v3766
          %v3811 = vpop.xlane.xlu0 %3810
          %3812 = vmin.xlane.f32.xlu0 %v3767
          %v3813 = vpop.xlane.xlu0 %3812
          %3814 = vmin.xlane.f32.xlu0 %v3768
          %v3815 = vpop.xlane.xlu0 %3814
          %3816 = vmin.xlane.f32.xlu0 %v3769
          %v3817 = vpop.xlane.xlu0 %3816
          %3818 = vmin.xlane.f32.xlu0 %v3770
          %v3819 = vpop.xlane.xlu0 %3818
          %3820 = vmin.xlane.f32.xlu0 %v3771
          %v3821 = vpop.xlane.xlu0 %3820
          %3822 = vmin.xlane.f32.xlu0 %v3772
          %v3823 = vpop.xlane.xlu0 %3822
          %3824 = vmin.xlane.f32.xlu0 %v3773
          %v3825 = vpop.xlane.xlu0 %3824
          %3826 = vmin.xlane.f32.xlu0 %v3774
          %v3827 = vpop.xlane.xlu0 %3826
          %3828 = vmin.xlane.f32.xlu0 %v3775
          %v3829 = vpop.xlane.xlu0 %3828
          %3830 = vmin.xlane.f32.xlu0 %v3776
          %v3831 = vpop.xlane.xlu0 %3830
          %3832 = vmin.xlane.f32.xlu0 %v3777
          %v3833 = vpop.xlane.xlu0 %3832
          %3834 = vmin.xlane.f32.xlu0 %v3778
          %v3835 = vpop.xlane.xlu0 %3834
          %3836 = vmin.xlane.f32.xlu0 %v3779
          %v3837 = vpop.xlane.xlu0 %3836
          %3838 = vmin.xlane.f32.xlu0 %v3780
          %v3839 = vpop.xlane.xlu0 %3838
          %3840 = vmin.xlane.f32.xlu0 %v3781
          %v3841 = vpop.xlane.xlu0 %3840
          %3842 = vmin.xlane.f32.xlu0 %v3782
          %v3843 = vpop.xlane.xlu0 %3842
          %3844 = vmin.xlane.f32.xlu0 %v3783
          %v3845 = vpop.xlane.xlu0 %3844
          %3846 = vmin.xlane.f32.xlu0 %v3784
          %v3847 = vpop.xlane.xlu0 %3846
          %3848 = vmin.xlane.f32.xlu0 %v3785
          %v3849 = vpop.xlane.xlu0 %3848
          %vm3850 = vcmp.ge.f32.partialorder %v3787, 1e+10
          %vm3851 = vcmp.ge.f32.partialorder %v3789, 1e+10
          %vm3852 = vcmp.ge.f32.partialorder %v3791, 1e+10
          %vm3853 = vcmp.ge.f32.partialorder %v3793, 1e+10
          %vm3854 = vcmp.ge.f32.partialorder %v3795, 1e+10
          %vm3855 = vcmp.ge.f32.partialorder %v3797, 1e+10
          %vm3856 = vcmp.ge.f32.partialorder %v3799, 1e+10
          %vm3857 = vcmp.ge.f32.partialorder %v3801, 1e+10
          %vm3858 = vcmp.ge.f32.partialorder %v3803, 1e+10
          %vm3859 = vcmp.ge.f32.partialorder %v3805, 1e+10
          %vm3860 = vcmp.ge.f32.partialorder %v3807, 1e+10
          %vm3861 = vcmp.ge.f32.partialorder %v3809, 1e+10
          %vm3862 = vcmp.ge.f32.partialorder %v3811, 1e+10
          %vm3863 = vcmp.ge.f32.partialorder %v3813, 1e+10
          %vm3864 = vcmp.ge.f32.partialorder %v3815, 1e+10
          %vm3865 = vcmp.ge.f32.partialorder %v3817, 1e+10
          %vm3866 = vcmp.ge.f32.partialorder %v3819, 1e+10
          %vm3867 = vcmp.ge.f32.partialorder %v3821, 1e+10
          %vm3868 = vcmp.ge.f32.partialorder %v3823, 1e+10
          %vm3869 = vcmp.ge.f32.partialorder %v3825, 1e+10
          %vm3870 = vcmp.ge.f32.partialorder %v3827, 1e+10
          %vm3871 = vcmp.ge.f32.partialorder %v3829, 1e+10
          %vm3872 = vcmp.ge.f32.partialorder %v3831, 1e+10
          %vm3873 = vcmp.ge.f32.partialorder %v3833, 1e+10
          %vm3874 = vcmp.ge.f32.partialorder %v3835, 1e+10
          %vm3875 = vcmp.ge.f32.partialorder %v3837, 1e+10
          %vm3876 = vcmp.ge.f32.partialorder %v3839, 1e+10
          %vm3877 = vcmp.ge.f32.partialorder %v3841, 1e+10
          %vm3878 = vcmp.ge.f32.partialorder %v3843, 1e+10
          %vm3879 = vcmp.ge.f32.partialorder %v3845, 1e+10
          %vm3880 = vcmp.ge.f32.partialorder %v3847, 1e+10
          %vm3881 = vcmp.ge.f32.partialorder %v3849, 1e+10
          %v3882 = vsel %vm3850, -1.0, %v3787
          %v3883 = vsel %vm3851, -1.0, %v3789
          %v3884 = vsel %vm3852, -1.0, %v3791
          %v3885 = vsel %vm3853, -1.0, %v3793
          %v3886 = vsel %vm3854, -1.0, %v3795
          %v3887 = vsel %vm3855, -1.0, %v3797
          %v3888 = vsel %vm3856, -1.0, %v3799
          %v3889 = vsel %vm3857, -1.0, %v3801
          %v3890 = vsel %vm3858, -1.0, %v3803
          %v3891 = vsel %vm3859, -1.0, %v3805
          %v3892 = vsel %vm3860, -1.0, %v3807
          %v3893 = vsel %vm3861, -1.0, %v3809
          %v3894 = vsel %vm3862, -1.0, %v3811
          %v3895 = vsel %vm3863, -1.0, %v3813
          %v3896 = vsel %vm3864, -1.0, %v3815
          %v3897 = vsel %vm3865, -1.0, %v3817
          %v3898 = vsel %vm3866, -1.0, %v3819
          %v3899 = vsel %vm3867, -1.0, %v3821
          %v3900 = vsel %vm3868, -1.0, %v3823
          %v3901 = vsel %vm3869, -1.0, %v3825
          %v3902 = vsel %vm3870, -1.0, %v3827
          %v3903 = vsel %vm3871, -1.0, %v3829
          %v3904 = vsel %vm3872, -1.0, %v3831
          %v3905 = vsel %vm3873, -1.0, %v3833
          %v3906 = vsel %vm3874, -1.0, %v3835
          %v3907 = vsel %vm3875, -1.0, %v3837
          %v3908 = vsel %vm3876, -1.0, %v3839
          %v3909 = vsel %vm3877, -1.0, %v3841
          %v3910 = vsel %vm3878, -1.0, %v3843
          %v3911 = vsel %vm3879, -1.0, %v3845
          %v3912 = vsel %vm3880, -1.0, %v3847
          %v3913 = vsel %vm3881, -1.0, %v3849
          %v3946 = vlaneseq
          %v3947 = vand.u32 %v3946, 127
          %v3948 = vlaneseq
          %v3949 = vshrl.u32 %v3948, 7
          %v3950 = vsub.s32 %v3947, %v3949
          %v3951 = vrot.slane %v3882, %v3950
          %v3952 = vadd.s32 %v3947, 4294967288
          %v3953 = vlaneseq
          %v3954 = vshrl.u32 %v3953, 7
          %v3955 = vsub.s32 %v3952, %v3954
          %v3956 = vrot.slane %v3883, %v3955
          %vm3957 = vcmask 130112
          %v3958 = vsel %vm3957, %v3956, %v3951
          %v3959 = vadd.s32 %v3947, 4294967280
          %v3960 = vlaneseq
          %v3961 = vshrl.u32 %v3960, 7
          %v3962 = vsub.s32 %v3959, %v3961
          %v3963 = vrot.slane %v3884, %v3962
          %vm3964 = vcmask 195712
          %v3965 = vsel %vm3964, %v3963, %v3958
          %v3966 = vadd.s32 %v3947, 4294967272
          %v3967 = vlaneseq
          %v3968 = vshrl.u32 %v3967, 7
          %v3969 = vsub.s32 %v3966, %v3968
          %v3970 = vrot.slane %v3885, %v3969
          %vm3971 = vcmask 261312
          %v3972 = vsel %vm3971, %v3970, %v3965
          %v3973 = vadd.s32 %v3947, 4294967264
          %v3974 = vlaneseq
          %v3975 = vshrl.u32 %v3974, 7
          %v3976 = vsub.s32 %v3973, %v3975
          %v3977 = vrot.slane %v3886, %v3976
          %vm3978 = vcmask 326912
          %v3979 = vsel %vm3978, %v3977, %v3972
          %v3980 = vadd.s32 %v3947, 4294967256
          %v3981 = vlaneseq
          %v3982 = vshrl.u32 %v3981, 7
          %v3983 = vsub.s32 %v3980, %v3982
          %v3984 = vrot.slane %v3887, %v3983
          %vm3985 = vcmask 392512
          %v3986 = vsel %vm3985, %v3984, %v3979
          %v3987 = vadd.s32 %v3947, 4294967248
          %v3988 = vlaneseq
          %v3989 = vshrl.u32 %v3988, 7
          %v3990 = vsub.s32 %v3987, %v3989
          %v3991 = vrot.slane %v3888, %v3990
          %vm3992 = vcmask 458112
          %v3993 = vsel %vm3992, %v3991, %v3986
          %v3994 = vadd.s32 %v3947, 4294967240
          %v3995 = vlaneseq
          %v3996 = vshrl.u32 %v3995, 7
          %v3997 = vsub.s32 %v3994, %v3996
          %v3998 = vrot.slane %v3889, %v3997
          %vm3999 = vcmask 523712
          %v4000 = vsel %vm3999, %v3998, %v3993
          %v4001 = vadd.s32 %v3947, 4294967232
          %v4002 = vlaneseq
          %v4003 = vshrl.u32 %v4002, 7
          %v4004 = vsub.s32 %v4001, %v4003
          %v4005 = vrot.slane %v3890, %v4004
          %vm4006 = vcmask 589312
          %v4007 = vsel %vm4006, %v4005, %v4000
          %v4008 = vadd.s32 %v3947, 4294967224
          %v4009 = vlaneseq
          %v4010 = vshrl.u32 %v4009, 7
          %v4011 = vsub.s32 %v4008, %v4010
          %v4012 = vrot.slane %v3891, %v4011
          %vm4013 = vcmask 654912
          %v4014 = vsel %vm4013, %v4012, %v4007
          %v4015 = vadd.s32 %v3947, 4294967216
          %v4016 = vlaneseq
          %v4017 = vshrl.u32 %v4016, 7
          %v4018 = vsub.s32 %v4015, %v4017
          %v4019 = vrot.slane %v3892, %v4018
          %vm4020 = vcmask 720512
          %v4021 = vsel %vm4020, %v4019, %v4014
          %v4022 = vadd.s32 %v3947, 4294967208
          %v4023 = vlaneseq
          %v4024 = vshrl.u32 %v4023, 7
          %v4025 = vsub.s32 %v4022, %v4024
          %v4026 = vrot.slane %v3893, %v4025
          %vm4027 = vcmask 786112
          %v4028 = vsel %vm4027, %v4026, %v4021
          %v4029 = vadd.s32 %v3947, 4294967200
          %v4030 = vlaneseq
          %v4031 = vshrl.u32 %v4030, 7
          %v4032 = vsub.s32 %v4029, %v4031
          %v4033 = vrot.slane %v3894, %v4032
          %vm4034 = vcmask 851712
          %v4035 = vsel %vm4034, %v4033, %v4028
          %v4036 = vadd.s32 %v3947, 4294967192
          %v4037 = vlaneseq
          %v4038 = vshrl.u32 %v4037, 7
          %v4039 = vsub.s32 %v4036, %v4038
          %v4040 = vrot.slane %v3895, %v4039
          %vm4041 = vcmask 917312
          %v4042 = vsel %vm4041, %v4040, %v4035
          %v4043 = vadd.s32 %v3947, 4294967184
          %v4044 = vlaneseq
          %v4045 = vshrl.u32 %v4044, 7
          %v4046 = vsub.s32 %v4043, %v4045
          %v4047 = vrot.slane %v3896, %v4046
          %vm4048 = vcmask 982912
          %v4049 = vsel %vm4048, %v4047, %v4042
          %v4050 = vadd.s32 %v3947, 4294967176
          %v4051 = vlaneseq
          %v4052 = vshrl.u32 %v4051, 7
          %v4053 = vsub.s32 %v4050, %v4052
          %v4054 = vrot.slane %v3897, %v4053
          %vm4055 = vcmask 1048512
          %v4056 = vsel %vm4055, %v4054, %v4049
          %v4057 = vlaneseq
          %v4058 = vshrl.u32 %v4057, 7
          %v4059 = vsub.s32 %v3947, %v4058
          %v4060 = vrot.slane %v3898, %v4059
          %v4061 = vlaneseq
          %v4062 = vshrl.u32 %v4061, 7
          %v4063 = vsub.s32 %v3952, %v4062
          %v4064 = vrot.slane %v3899, %v4063
          %v4065 = vsel %vm3957, %v4064, %v4060
          %v4066 = vlaneseq
          %v4067 = vshrl.u32 %v4066, 7
          %v4068 = vsub.s32 %v3959, %v4067
          %v4069 = vrot.slane %v3900, %v4068
          %v4070 = vsel %vm3964, %v4069, %v4065
          %v4071 = vlaneseq
          %v4072 = vshrl.u32 %v4071, 7
          %v4073 = vsub.s32 %v3966, %v4072
          %v4074 = vrot.slane %v3901, %v4073
          %v4075 = vsel %vm3971, %v4074, %v4070
          %v4076 = vlaneseq
          %v4077 = vshrl.u32 %v4076, 7
          %v4078 = vsub.s32 %v3973, %v4077
          %v4079 = vrot.slane %v3902, %v4078
          %v4080 = vsel %vm3978, %v4079, %v4075
          %v4081 = vlaneseq
          %v4082 = vshrl.u32 %v4081, 7
          %v4083 = vsub.s32 %v3980, %v4082
          %v4084 = vrot.slane %v3903, %v4083
          %v4085 = vsel %vm3985, %v4084, %v4080
          %v4086 = vlaneseq
          %v4087 = vshrl.u32 %v4086, 7
          %v4088 = vsub.s32 %v3987, %v4087
          %v4089 = vrot.slane %v3904, %v4088
          %v4090 = vsel %vm3992, %v4089, %v4085
          %v4091 = vlaneseq
          %v4092 = vshrl.u32 %v4091, 7
          %v4093 = vsub.s32 %v3994, %v4092
          %v4094 = vrot.slane %v3905, %v4093
          %v4095 = vsel %vm3999, %v4094, %v4090
          %v4096 = vlaneseq
          %v4097 = vshrl.u32 %v4096, 7
          %v4098 = vsub.s32 %v4001, %v4097
          %v4099 = vrot.slane %v3906, %v4098
          %v4100 = vsel %vm4006, %v4099, %v4095
          %v4101 = vlaneseq
          %v4102 = vshrl.u32 %v4101, 7
          %v4103 = vsub.s32 %v4008, %v4102
          %v4104 = vrot.slane %v3907, %v4103
          %v4105 = vsel %vm4013, %v4104, %v4100
          %v4106 = vlaneseq
          %v4107 = vshrl.u32 %v4106, 7
          %v4108 = vsub.s32 %v4015, %v4107
          %v4109 = vrot.slane %v3908, %v4108
          %v4110 = vsel %vm4020, %v4109, %v4105
          %v4111 = vlaneseq
          %v4112 = vshrl.u32 %v4111, 7
          %v4113 = vsub.s32 %v4022, %v4112
          %v4114 = vrot.slane %v3909, %v4113
          %v4115 = vsel %vm4027, %v4114, %v4110
          %v4116 = vlaneseq
          %v4117 = vshrl.u32 %v4116, 7
          %v4118 = vsub.s32 %v4029, %v4117
          %v4119 = vrot.slane %v3910, %v4118
          %v4120 = vsel %vm4034, %v4119, %v4115
          %v4121 = vlaneseq
          %v4122 = vshrl.u32 %v4121, 7
          %v4123 = vsub.s32 %v4036, %v4122
          %v4124 = vrot.slane %v3911, %v4123
          %v4125 = vsel %vm4041, %v4124, %v4120
          %v4126 = vlaneseq
          %v4127 = vshrl.u32 %v4126, 7
          %v4128 = vsub.s32 %v4043, %v4127
          %v4129 = vrot.slane %v3912, %v4128
          %v4130 = vsel %vm4048, %v4129, %v4125
          %v4131 = vlaneseq
          %v4132 = vshrl.u32 %v4131, 7
          %v4133 = vsub.s32 %v4050, %v4132
          %v4134 = vrot.slane %v3913, %v4133
          %v4135 = vsel %vm4055, %v4134, %v4130
          %vm4136 = vcmask 1041409
          %v4137 = vsel %vm4136, %v4135, %v4056
          %4139 = vst [vmem:[%s141] sm:$0x3] %v4137
        $region32: #{tpu_custom_call.1} parent=23 // pred_fallthru
          _
        %s4140 = sand.u32 %s72, 1
        %s4141 = scalar_lea.sflag [#allocation6], %s4140
        %s4142 = sand.u32 %s72, 1
        %s4143 = smul.addr %s4142, 2
        %s4144 = scalar_lea.vmem [#allocation5], %s4143
        // Predicated region
        $region33: #{tpu_custom_call.1} parent=23 // pred_check
          %p4145 = pneg %p82
        $region34: #{tpu_custom_call.1} parent=23 // pred_check_branch
          %4147 = sbr.rel (%p4145) target = $region36
        $region35: #{tpu_custom_call.1} parent=23 // pred_region
          %s4149 = ssub.s32 32, 32
          %4150 = vsyncadd %s4141, %s4149
          %s4151 = sadd.s32 %s21, %s20
          %s4152 = smul.addr %s4151, 32
          %s4153 = scalar_lea.hbm %s1, %s4152
          %s4155 = sshll.u32 %s4144, 4
          %s4156 = int_to_ptr.vmem [resolvable:$true] %s4155
          %4158 = dma.vmem_to_hbm [thread:$0]  %s4156, 32, %s4153, %s4141
        $region36: #{tpu_custom_call.1} parent=23 // pred_fallthru
          _
      $region24: #{tpu_custom_call.1} parent=5 // pred_fallthru
        _
      %p4159 = scmp.le.s32.totalorder 2, %s10
      // Predicated region
      $region37: #{tpu_custom_call.1} parent=5 // pred_check
        %p4160 = pneg %p4159
      $region38: #{tpu_custom_call.1} parent=5 // pred_check_branch
        %4162 = sbr.rel (%p4160) target = $region40
      $region39: #{tpu_custom_call.1} parent=5 // pred_region
        %s4163 = ssub.s32 %s10, 2
        // Predicated region
        $region41: #{tpu_custom_call.1} parent=39 // pred_check
          %p4164 = pneg %p88
        $region42: #{tpu_custom_call.1} parent=39 // pred_check_branch
          %4166 = sbr.rel (%p4164) target = $region44
        $region43: #{tpu_custom_call.1} parent=39 // pred_region
          %s4167 = sand.u32 %s73, 1
          %s4168 = scalar_lea.sflag [#allocation6], %s4167
          %s4169 = sand.u32 %s73, 1
          %s4170 = smul.addr %s4169, 2
          %s4171 = scalar_lea.vmem [#allocation5], %s4170
          %4172 = dma.done %s4168, 32
        $region44: #{tpu_custom_call.1} parent=39 // pred_fallthru
          _
      $region40: #{tpu_custom_call.1} parent=5 // pred_fallthru
        _
    $region6: #{tpu_custom_call.1} parent=1 // loop_footer
      %s14 = sadd.s32 1, %s10
    $region7: #{tpu_custom_call.1} parent=1 // loop_footer_branch
      %9 = sbr.rel target = $region3
    $region8: #{tpu_custom_call.1} parent=1 // loop_exit
      _
    %4173 = vsyncpa [#allocation6], 1
    %s4174 = scalar_lea.sflag [#allocation6], 1
    %4175 = vsyncpa %s4174, 1

</llo_original>
